<compile_context>
chip_gen: v5e
topology: v5e:2x2
jax: 0.10.0
libtpu: 0.0.40
codegen_flags: <defaults>
</compile_context>

<pallas_src>
import functools

import jax
import jax.numpy as jnp
from jax.experimental import pallas as pl
from jax.experimental.pallas import tpu as pltpu

SOBEL_X = ((-1.0, 0.0, 1.0), (-2.0, 0.0, 2.0), (-1.0, 0.0, 1.0))
SOBEL_Y = ((-1.0, -2.0, -1.0), (0.0, 0.0, 0.0), (1.0, 2.0, 1.0))


def _edge_enhance_kernel(x_ref, w_ref, b_ref, out_ref, flag_ref, xp_ref,
                         *, C, H, W):
    """One batch element per grid step.

    x_ref:    (1, C, H, W)   input block (VMEM)
    w_ref:    (C*C*9,)       BN-scale-folded conv weights (SMEM scalars)
    b_ref:    (C,)           folded conv-bias + BN shift  (SMEM scalars)
    out_ref:  (1, C, H, W)   output block (VMEM)
    flag_ref: (1, 8, 128)    per-batch non-finite count, broadcast over a tile
    xp_ref:   (C, H+2, W+2)  VMEM scratch holding the zero-padded input
    """
    x = x_ref[0].astype(jnp.float32)                      # (C, H, W)

    # ---- fused non-finite detection (no extra HBM pass over x) ------------
    # abs(v) <= f32_max is False for +/-inf and for NaN.
    finite = jnp.abs(x) <= jnp.float32(3.4028235e38)
    bad = jnp.sum(jnp.where(finite, 0.0, 1.0))            # scalar count
    flag_ref[...] = jnp.broadcast_to(bad, (1, 8, 128))

    # ---- in-kernel zero padding (replaces wrapper-side jnp.pad) -----------
    xp_ref[...] = jnp.zeros((C, H + 2, W + 2), jnp.float32)
    xp_ref[:, 1:H + 1, 1:W + 1] = x
    xp = xp_ref[...]                                       # (C, H+2, W+2)

    # Mean of the zero-padded channels is 0 on the border and clamp(0) == 0,
    # so this equals zero-padding the clamped channel mean (F.conv2d pad=1).
    mp = jnp.clip(jnp.mean(xp, axis=0), -10.0, 10.0)       # (H+2, W+2)

    # ---- Sobel + 3x3 CxC conv, all on the VPU ------------------------------
    # The dj (lane-direction) slice is hoisted so only 3 lane-offset slices of
    # each array are materialized; di slices are cheap sublane offsets.
    ex = jnp.zeros((H, W), jnp.float32)
    ey = jnp.zeros((H, W), jnp.float32)
    acc = [jnp.zeros((H, W), jnp.float32) for _ in range(C)]

    for dj in range(3):
        xcol = xp[:, :, dj:dj + W]                         # (C, H+2, W)
        mcol = mp[:, dj:dj + W]                            # (H+2, W)
        for di in range(3):
            tap = di * 3 + dj
            wx = SOBEL_X[di][dj]
            wy = SOBEL_Y[di][dj]
            if wx != 0.0 or wy != 0.0:
                mwin = mcol[di:di + H, :]                  # (H, W)
                if wx != 0.0:
                    ex = ex + wx * mwin
                if wy != 0.0:
                    ey = ey + wy * mwin
            xwin = xcol[:, di:di + H, :]                   # (C, H, W)
            for co in range(C):
                a = acc[co]
                for ci in range(C):
                    a = a + w_ref[(co * C + ci) * 9 + tap] * xwin[ci]
                acc[co] = a

    mag = jnp.sqrt(jnp.clip(ex * ex + ey * ey, 1e-6, 50.0))
    edge_w = jnp.clip(jax.nn.sigmoid(mag), 0.2, 0.8)       # (H, W)

    # ---- folded bias + ReLU + residual add, per output channel ------------
    for co in range(C):
        enh = jnp.maximum(acc[co] + b_ref[co], 0.0)
        out_ref[0, co] = (x[co] + enh * edge_w).astype(out_ref.dtype)


def edge_enhance_forward(x, conv_w, conv_b, bn_gamma, bn_beta, bn_mean, bn_var,
                         bn_eps=1e-5):
    """x: (N, C, H, W) float32.  conv_w: (C_out, C_in, 3, 3) PyTorch layout."""
    N, C, H, W = x.shape

    # Fold eval-mode BN into the conv: scale into the weights, shift + conv
    # bias into one per-channel bias (saves two full VPU passes per step).
    scale = bn_gamma / jnp.sqrt(bn_var + bn_eps)                    # (C,)
    w_flat = (conv_w * scale[:, None, None, None]).reshape(-1).astype(jnp.float32)
    b_flat = ((conv_b - bn_mean) * scale + bn_beta).astype(jnp.float32)

    kernel = functools.partial(_edge_enhance_kernel, C=C, H=H, W=W)
    out, flags = pl.pallas_call(
        kernel,
        out_shape=(jax.ShapeDtypeStruct((N, C, H, W), x.dtype),
                   jax.ShapeDtypeStruct((N, 8, 128), jnp.float32)),
        grid=(N,),
        in_specs=[
            pl.BlockSpec((1, C, H, W), lambda n: (n, 0, 0, 0)),
            pl.BlockSpec(memory_space=pltpu.MemorySpace.SMEM),      # weights
            pl.BlockSpec(memory_space=pltpu.MemorySpace.SMEM),      # bias
        ],
        out_specs=(
            pl.BlockSpec((1, C, H, W), lambda n: (n, 0, 0, 0)),
            pl.BlockSpec((1, 8, 128), lambda n: (n, 0, 0)),
        ),
        scratch_shapes=[pltpu.VMEM((C, H + 2, W + 2), jnp.float32)],
        compiler_params=pltpu.CompilerParams(
            dimension_semantics=("parallel",),
            vmem_limit_bytes=48 * 1024 * 1024),
    )(x, w_flat, b_flat)

    # PyTorch: if torch.isnan(x).any() or torch.isinf(x).any(): return x
    all_finite = jnp.all(flags == 0.0)
    return jnp.where(all_finite, out, x)


def _reference_forward(x, conv_w, conv_b, bn_gamma, bn_beta, bn_mean, bn_var,
                       bn_eps=1e-5):
    """Pure-JAX reference mirroring the PyTorch module (eval-mode BN)."""
    N, C, H, W = x.shape
    xpad = jnp.pad(x, ((0, 0), (0, 0), (1, 1), (1, 1)))
    xm = jnp.clip(jnp.mean(x, axis=1), -10.0, 10.0)                 # (N, H, W)
    mpad = jnp.pad(xm, ((0, 0), (1, 1), (1, 1)))

    ex = jnp.zeros((N, H, W), jnp.float32)
    ey = jnp.zeros((N, H, W), jnp.float32)
    conv = jnp.zeros((N, C, H, W), jnp.float32)
    for di in range(3):
        for dj in range(3):
            mwin = mpad[:, di:di + H, dj:dj + W]
            ex = ex + SOBEL_X[di][dj] * mwin
            ey = ey + SOBEL_Y[di][dj] * mwin
            xwin = xpad[:, :, di:di + H, dj:dj + W]
            conv = conv + jnp.einsum('oi,nihw->nohw', conv_w[:, :, di, dj],
                                     xwin, precision=jax.lax.Precision.HIGHEST)
    conv = conv + conv_b.reshape(1, C, 1, 1)
    bn = ((conv - bn_mean.reshape(1, C, 1, 1))
          / jnp.sqrt(bn_var.reshape(1, C, 1, 1) + bn_eps)
          * bn_gamma.reshape(1, C, 1, 1) + bn_beta.reshape(1, C, 1, 1))
    enh = jnp.maximum(bn, 0.0)
    mag = jnp.sqrt(jnp.clip(ex * ex + ey * ey, 1e-6, 50.0))
    ew = jnp.clip(jax.nn.sigmoid(mag), 0.2, 0.8)
    out = x + enh * ew[:, None, :, :]
    return jnp.where(jnp.all(jnp.isfinite(x)), out, x)


if __name__ == "__main__":
    key = jax.random.PRNGKey(0)
    k_x, k_w, k_b, k_g, k_be, k_m, k_v = jax.random.split(key, 7)

    N, C, H, W = 2, 4, 16, 16
    x = jax.random.normal(k_x, (N, C, H, W), dtype=jnp.float32)

    # Conv2d(C, C, 3, padding=1)-style init plus non-trivial BN statistics.
    fan_in = C * 3 * 3
    bound = 1.0 / (fan_in ** 0.5)
    conv_w = jax.random.uniform(k_w, (C, C, 3, 3), jnp.float32, -bound, bound)
    conv_b = jax.random.uniform(k_b, (C,), jnp.float32, -bound, bound)
    bn_gamma = 1.0 + 0.1 * jax.random.normal(k_g, (C,), jnp.float32)
    bn_beta = 0.1 * jax.random.normal(k_be, (C,), jnp.float32)
    bn_mean = 0.1 * jax.random.normal(k_m, (C,), jnp.float32)
    bn_var = jax.random.uniform(k_v, (C,), jnp.float32, 0.5, 1.5)

    fwd = jax.jit(edge_enhance_forward)
    out = fwd(x, conv_w, conv_b, bn_gamma, bn_beta, bn_mean, bn_var)
    jax.block_until_ready(out)
    assert out.shape == (N, C, H, W) and out.dtype == jnp.float32

    # Numerical check against a pure-JAX reference of the PyTorch module.
    ref = _reference_forward(x, conv_w, conv_b, bn_gamma, bn_beta,
                             bn_mean, bn_var)
    err = float(jnp.max(jnp.abs(out - ref)))
    assert err < 1e-3, f"max abs error {err}"

    # NaN/Inf early-return path: output must equal the input exactly.
    x_bad = x.at[1, 2, 3, 4].set(jnp.nan)
    out_bad = fwd(x_bad, conv_w, conv_b, bn_gamma, bn_beta, bn_mean, bn_var)
    jax.block_until_ready(out_bad)
    assert bool(jnp.array_equal(out_bad, x_bad, equal_nan=True))

    print("KERNEL_OK")
</pallas_src>

<mosaic_0001>
module attributes {stable_mosaic.version = 11 : i64} {
  func.func @_edge_enhance_kernel(%arg0: i32, %arg1: memref<1x4x16x16xf32, #tpu.memory_space<vmem>>, %arg2: memref<144xf32, #tpu.memory_space<smem>>, %arg3: memref<4xf32, #tpu.memory_space<smem>>, %arg4: memref<1x4x16x16xf32, #tpu.memory_space<vmem>>, %arg5: memref<1x8x128xf32, #tpu.memory_space<vmem>>, %arg6: memref<4x18x18xf32, #tpu.memory_space<vmem>>) attributes {dimension_semantics = [#tpu.dimension_semantics<parallel>], iteration_bounds = array<i64: 2>, scalar_prefetch = 0 : i64, scratch_operands = 1 : i64, tpu.core_type = #tpu.core_type<tc>, window_params = [{transform_indices = @transform_0, window_bounds = array<i64: 1, 4, 16, 16>}, {transform_indices = @transform_1, window_bounds = array<i64: 144>}, {transform_indices = @transform_2, window_bounds = array<i64: 4>}, {transform_indices = @transform_3, window_bounds = array<i64: 1, 4, 16, 16>}, {transform_indices = @transform_4, window_bounds = array<i64: 1, 8, 128>}]} {
    %c0 = arith.constant 0 : index
    %c0_0 = arith.constant 0 : index
    %c0_1 = arith.constant 0 : index
    %c0_2 = arith.constant 0 : index
    %0 = vector.load %arg1[%c0, %c0_0, %c0_1, %c0_2] : memref<1x4x16x16xf32, #tpu.memory_space<vmem>>, vector<1x4x16x16xf32>
    %1 = vector.shape_cast %0 : vector<1x4x16x16xf32> to vector<4x16x16xf32>
    %2 = math.absf %1 : vector<4x16x16xf32>
    %cst = arith.constant 3.40282347E+38 : f32
    %3 = vector.broadcast %cst : f32 to vector<4x16x16xf32>
    %4 = arith.cmpf ole, %2, %3 : vector<4x16x16xf32>
    %cst_3 = arith.constant 0.000000e+00 : f32
    %cst_4 = arith.constant 1.000000e+00 : f32
    %5 = vector.broadcast %cst_3 : f32 to vector<4x16x16xf32>
    %6 = vector.broadcast %cst_4 : f32 to vector<4x16x16xf32>
    %7 = arith.select %4, %5, %6 : vector<4x16x16xi1>, vector<4x16x16xf32>
    %8 = vector.shape_cast %7 : vector<4x16x16xf32> to vector<1x4x16x16xf32>
    %cst_5 = arith.constant dense<0.000000e+00> : vector<1xf32>
    %9 = vector.multi_reduction <add>, %8, %cst_5 [1, 2, 3] : vector<1x4x16x16xf32> to vector<1xf32>
    %10 = vector.shape_cast %9 : vector<1xf32> to vector<1x1x1x1xf32>
    %11 = vector.extract %10[0, 0, 0, 0] : f32 from vector<1x1x1x1xf32>
    %12 = vector.broadcast %11 : f32 to vector<1x8x128xf32>
    %c0_6 = arith.constant 0 : index
    %c0_7 = arith.constant 0 : index
    %c0_8 = arith.constant 0 : index
    %13 = vector.load %arg5[%c0_6, %c0_7, %c0_8] : memref<1x8x128xf32, #tpu.memory_space<vmem>>, vector<1x8x128xf32>
    tpu.vector_store %arg5[%c0_6, %c0_7, %c0_8], %12 {strides = array<i32>} : memref<1x8x128xf32, #tpu.memory_space<vmem>>, vector<1x8x128xf32>,
    %cst_9 = arith.constant 0.000000e+00 : f32
    %14 = vector.broadcast %cst_9 : f32 to vector<4x18x18xf32>
    %c0_10 = arith.constant 0 : index
    %c0_11 = arith.constant 0 : index
    %c0_12 = arith.constant 0 : index
    %15 = vector.load %arg6[%c0_10, %c0_11, %c0_12] : memref<4x18x18xf32, #tpu.memory_space<vmem>>, vector<4x18x18xf32>
    tpu.vector_store %arg6[%c0_10, %c0_11, %c0_12], %14 {strides = array<i32>} : memref<4x18x18xf32, #tpu.memory_space<vmem>>, vector<4x18x18xf32>,
    %c0_13 = arith.constant 0 : index
    %c1 = arith.constant 1 : index
    %c1_14 = arith.constant 1 : index
    %16 = vector.load %arg6[%c0_13, %c1, %c1_14] : memref<4x18x18xf32, #tpu.memory_space<vmem>>, vector<4x16x16xf32>
    tpu.vector_store %arg6[%c0_13, %c1, %c1_14], %1 {strides = array<i32>} : memref<4x18x18xf32, #tpu.memory_space<vmem>>, vector<4x16x16xf32>,
    %c0_15 = arith.constant 0 : index
    %c0_16 = arith.constant 0 : index
    %c0_17 = arith.constant 0 : index
    %17 = vector.load %arg6[%c0_15, %c0_16, %c0_17] : memref<4x18x18xf32, #tpu.memory_space<vmem>>, vector<4x18x18xf32>
    %cst_18 = arith.constant dense<0.000000e+00> : vector<18x18xf32>
    %18 = vector.multi_reduction <add>, %17, %cst_18 [0] : vector<4x18x18xf32> to vector<18x18xf32>
    %cst_19 = arith.constant 4.000000e+00 : f32
    %19 = vector.broadcast %cst_19 : f32 to vector<18x18xf32>
    %20 = arith.divf %18, %19 : vector<18x18xf32>
    %cst_20 = arith.constant -1.000000e+01 : f32
    %cst_21 = arith.constant 1.000000e+01 : f32
    %21 = vector.broadcast %cst_20 : f32 to vector<18x18xf32>
    %22 = arith.maximumf %21, %20 : vector<18x18xf32>
    %23 = vector.broadcast %cst_21 : f32 to vector<18x18xf32>
    %24 = arith.minimumf %23, %22 : vector<18x18xf32>
    %cst_22 = arith.constant 0.000000e+00 : f32
    %25 = vector.broadcast %cst_22 : f32 to vector<16x16xf32>
    %cst_23 = arith.constant 0.000000e+00 : f32
    %26 = vector.broadcast %cst_23 : f32 to vector<16x16xf32>
    %cst_24 = arith.constant 0.000000e+00 : f32
    %27 = vector.broadcast %cst_24 : f32 to vector<16x16xf32>
    %cst_25 = arith.constant 0.000000e+00 : f32
    %28 = vector.broadcast %cst_25 : f32 to vector<16x16xf32>
    %cst_26 = arith.constant 0.000000e+00 : f32
    %29 = vector.broadcast %cst_26 : f32 to vector<16x16xf32>
    %cst_27 = arith.constant 0.000000e+00 : f32
    %30 = vector.broadcast %cst_27 : f32 to vector<16x16xf32>
    %31 = vector.extract_strided_slice %17 {offsets = [0, 0, 0], sizes = [4, 18, 16], strides = [1, 1, 1]} : vector<4x18x18xf32> to vector<4x18x16xf32>
    %32 = vector.extract_strided_slice %24 {offsets = [0, 0], sizes = [18, 16], strides = [1, 1]} : vector<18x18xf32> to vector<18x16xf32>
    %33 = vector.extract_strided_slice %32 {offsets = [0, 0], sizes = [16, 16], strides = [1, 1]} : vector<18x16xf32> to vector<16x16xf32>
    %cst_28 = arith.constant -1.000000e+00 : f32
    %34 = vector.broadcast %cst_28 : f32 to vector<16x16xf32>
    %35 = arith.mulf %34, %33 : vector<16x16xf32>
    %36 = arith.addf %25, %35 : vector<16x16xf32>
    %cst_29 = arith.constant -1.000000e+00 : f32
    %37 = vector.broadcast %cst_29 : f32 to vector<16x16xf32>
    %38 = arith.mulf %37, %33 : vector<16x16xf32>
    %39 = arith.addf %26, %38 : vector<16x16xf32>
    %40 = vector.extract_strided_slice %31 {offsets = [0, 0, 0], sizes = [4, 16, 16], strides = [1, 1, 1]} : vector<4x18x16xf32> to vector<4x16x16xf32>
    %c0_30 = arith.constant 0 : index
    %41 = memref.load %arg2[%c0_30] : memref<144xf32, #tpu.memory_space<smem>>
    %42 = vector.extract_strided_slice %40 {offsets = [0, 0, 0], sizes = [1, 16, 16], strides = [1, 1, 1]} : vector<4x16x16xf32> to vector<1x16x16xf32>
    %43 = vector.shape_cast %42 : vector<1x16x16xf32> to vector<16x16xf32>
    %44 = vector.broadcast %41 : f32 to vector<16x16xf32>
    %45 = arith.mulf %44, %43 : vector<16x16xf32>
    %46 = arith.addf %27, %45 : vector<16x16xf32>
    %c9 = arith.constant 9 : index
    %47 = memref.load %arg2[%c9] : memref<144xf32, #tpu.memory_space<smem>>
    %48 = vector.extract_strided_slice %40 {offsets = [1, 0, 0], sizes = [1, 16, 16], strides = [1, 1, 1]} : vector<4x16x16xf32> to vector<1x16x16xf32>
    %49 = vector.shape_cast %48 : vector<1x16x16xf32> to vector<16x16xf32>
    %50 = vector.broadcast %47 : f32 to vector<16x16xf32>
    %51 = arith.mulf %50, %49 : vector<16x16xf32>
    %52 = arith.addf %46, %51 : vector<16x16xf32>
    %c18 = arith.constant 18 : index
    %53 = memref.load %arg2[%c18] : memref<144xf32, #tpu.memory_space<smem>>
    %54 = vector.extract_strided_slice %40 {offsets = [2, 0, 0], sizes = [1, 16, 16], strides = [1, 1, 1]} : vector<4x16x16xf32> to vector<1x16x16xf32>
    %55 = vector.shape_cast %54 : vector<1x16x16xf32> to vector<16x16xf32>
    %56 = vector.broadcast %53 : f32 to vector<16x16xf32>
    %57 = arith.mulf %56, %55 : vector<16x16xf32>
    %58 = arith.addf %52, %57 : vector<16x16xf32>
    %c27 = arith.constant 27 : index
    %59 = memref.load %arg2[%c27] : memref<144xf32, #tpu.memory_space<smem>>
    %60 = vector.extract_strided_slice %40 {offsets = [3, 0, 0], sizes = [1, 16, 16], strides = [1, 1, 1]} : vector<4x16x16xf32> to vector<1x16x16xf32>
    %61 = vector.shape_cast %60 : vector<1x16x16xf32> to vector<16x16xf32>
    %62 = vector.broadcast %59 : f32 to vector<16x16xf32>
    %63 = arith.mulf %62, %61 : vector<16x16xf32>
    %64 = arith.addf %58, %63 : vector<16x16xf32>
    %c36 = arith.constant 36 : index
    %65 = memref.load %arg2[%c36] : memref<144xf32, #tpu.memory_space<smem>>
    %66 = vector.extract_strided_slice %40 {offsets = [0, 0, 0], sizes = [1, 16, 16], strides = [1, 1, 1]} : vector<4x16x16xf32> to vector<1x16x16xf32>
    %67 = vector.shape_cast %66 : vector<1x16x16xf32> to vector<16x16xf32>
    %68 = vector.broadcast %65 : f32 to vector<16x16xf32>
    %69 = arith.mulf %68, %67 : vector<16x16xf32>
    %70 = arith.addf %28, %69 : vector<16x16xf32>
    %c45 = arith.constant 45 : index
    %71 = memref.load %arg2[%c45] : memref<144xf32, #tpu.memory_space<smem>>
    %72 = vector.extract_strided_slice %40 {offsets = [1, 0, 0], sizes = [1, 16, 16], strides = [1, 1, 1]} : vector<4x16x16xf32> to vector<1x16x16xf32>
    %73 = vector.shape_cast %72 : vector<1x16x16xf32> to vector<16x16xf32>
    %74 = vector.broadcast %71 : f32 to vector<16x16xf32>
    %75 = arith.mulf %74, %73 : vector<16x16xf32>
    %76 = arith.addf %70, %75 : vector<16x16xf32>
    %c54 = arith.constant 54 : index
    %77 = memref.load %arg2[%c54] : memref<144xf32, #tpu.memory_space<smem>>
    %78 = vector.extract_strided_slice %40 {offsets = [2, 0, 0], sizes = [1, 16, 16], strides = [1, 1, 1]} : vector<4x16x16xf32> to vector<1x16x16xf32>
    %79 = vector.shape_cast %78 : vector<1x16x16xf32> to vector<16x16xf32>
    %80 = vector.broadcast %77 : f32 to vector<16x16xf32>
    %81 = arith.mulf %80, %79 : vector<16x16xf32>
    %82 = arith.addf %76, %81 : vector<16x16xf32>
    %c63 = arith.constant 63 : index
    %83 = memref.load %arg2[%c63] : memref<144xf32, #tpu.memory_space<smem>>
    %84 = vector.extract_strided_slice %40 {offsets = [3, 0, 0], sizes = [1, 16, 16], strides = [1, 1, 1]} : vector<4x16x16xf32> to vector<1x16x16xf32>
    %85 = vector.shape_cast %84 : vector<1x16x16xf32> to vector<16x16xf32>
    %86 = vector.broadcast %83 : f32 to vector<16x16xf32>
    %87 = arith.mulf %86, %85 : vector<16x16xf32>
    %88 = arith.addf %82, %87 : vector<16x16xf32>
    %c72 = arith.constant 72 : index
    %89 = memref.load %arg2[%c72] : memref<144xf32, #tpu.memory_space<smem>>
    %90 = vector.extract_strided_slice %40 {offsets = [0, 0, 0], sizes = [1, 16, 16], strides = [1, 1, 1]} : vector<4x16x16xf32> to vector<1x16x16xf32>
    %91 = vector.shape_cast %90 : vector<1x16x16xf32> to vector<16x16xf32>
    %92 = vector.broadcast %89 : f32 to vector<16x16xf32>
    %93 = arith.mulf %92, %91 : vector<16x16xf32>
    %94 = arith.addf %29, %93 : vector<16x16xf32>
    %c81 = arith.constant 81 : index
    %95 = memref.load %arg2[%c81] : memref<144xf32, #tpu.memory_space<smem>>
    %96 = vector.extract_strided_slice %40 {offsets = [1, 0, 0], sizes = [1, 16, 16], strides = [1, 1, 1]} : vector<4x16x16xf32> to vector<1x16x16xf32>
    %97 = vector.shape_cast %96 : vector<1x16x16xf32> to vector<16x16xf32>
    %98 = vector.broadcast %95 : f32 to vector<16x16xf32>
    %99 = arith.mulf %98, %97 : vector<16x16xf32>
    %100 = arith.addf %94, %99 : vector<16x16xf32>
    %c90 = arith.constant 90 : index
    %101 = memref.load %arg2[%c90] : memref<144xf32, #tpu.memory_space<smem>>
    %102 = vector.extract_strided_slice %40 {offsets = [2, 0, 0], sizes = [1, 16, 16], strides = [1, 1, 1]} : vector<4x16x16xf32> to vector<1x16x16xf32>
    %103 = vector.shape_cast %102 : vector<1x16x16xf32> to vector<16x16xf32>
    %104 = vector.broadcast %101 : f32 to vector<16x16xf32>
    %105 = arith.mulf %104, %103 : vector<16x16xf32>
    %106 = arith.addf %100, %105 : vector<16x16xf32>
    %c99 = arith.constant 99 : index
    %107 = memref.load %arg2[%c99] : memref<144xf32, #tpu.memory_space<smem>>
    %108 = vector.extract_strided_slice %40 {offsets = [3, 0, 0], sizes = [1, 16, 16], strides = [1, 1, 1]} : vector<4x16x16xf32> to vector<1x16x16xf32>
    %109 = vector.shape_cast %108 : vector<1x16x16xf32> to vector<16x16xf32>
    %110 = vector.broadcast %107 : f32 to vector<16x16xf32>
    %111 = arith.mulf %110, %109 : vector<16x16xf32>
    %112 = arith.addf %106, %111 : vector<16x16xf32>
    %c108 = arith.constant 108 : index
    %113 = memref.load %arg2[%c108] : memref<144xf32, #tpu.memory_space<smem>>
    %114 = vector.extract_strided_slice %40 {offsets = [0, 0, 0], sizes = [1, 16, 16], strides = [1, 1, 1]} : vector<4x16x16xf32> to vector<1x16x16xf32>
    %115 = vector.shape_cast %114 : vector<1x16x16xf32> to vector<16x16xf32>
    %116 = vector.broadcast %113 : f32 to vector<16x16xf32>
    %117 = arith.mulf %116, %115 : vector<16x16xf32>
    %118 = arith.addf %30, %117 : vector<16x16xf32>
    %c117 = arith.constant 117 : index
    %119 = memref.load %arg2[%c117] : memref<144xf32, #tpu.memory_space<smem>>
    %120 = vector.extract_strided_slice %40 {offsets = [1, 0, 0], sizes = [1, 16, 16], strides = [1, 1, 1]} : vector<4x16x16xf32> to vector<1x16x16xf32>
    %121 = vector.shape_cast %120 : vector<1x16x16xf32> to vector<16x16xf32>
    %122 = vector.broadcast %119 : f32 to vector<16x16xf32>
    %123 = arith.mulf %122, %121 : vector<16x16xf32>
    %124 = arith.addf %118, %123 : vector<16x16xf32>
    %c126 = arith.constant 126 : index
    %125 = memref.load %arg2[%c126] : memref<144xf32, #tpu.memory_space<smem>>
    %126 = vector.extract_strided_slice %40 {offsets = [2, 0, 0], sizes = [1, 16, 16], strides = [1, 1, 1]} : vector<4x16x16xf32> to vector<1x16x16xf32>
    %127 = vector.shape_cast %126 : vector<1x16x16xf32> to vector<16x16xf32>
    %128 = vector.broadcast %125 : f32 to vector<16x16xf32>
    %129 = arith.mulf %128, %127 : vector<16x16xf32>
    %130 = arith.addf %124, %129 : vector<16x16xf32>
    %c135 = arith.constant 135 : index
    %131 = memref.load %arg2[%c135] : memref<144xf32, #tpu.memory_space<smem>>
    %132 = vector.extract_strided_slice %40 {offsets = [3, 0, 0], sizes = [1, 16, 16], strides = [1, 1, 1]} : vector<4x16x16xf32> to vector<1x16x16xf32>
    %133 = vector.shape_cast %132 : vector<1x16x16xf32> to vector<16x16xf32>
    %134 = vector.broadcast %131 : f32 to vector<16x16xf32>
    %135 = arith.mulf %134, %133 : vector<16x16xf32>
    %136 = arith.addf %130, %135 : vector<16x16xf32>
    %137 = vector.extract_strided_slice %32 {offsets = [1, 0], sizes = [16, 16], strides = [1, 1]} : vector<18x16xf32> to vector<16x16xf32>
    %cst_31 = arith.constant -2.000000e+00 : f32
    %138 = vector.broadcast %cst_31 : f32 to vector<16x16xf32>
    %139 = arith.mulf %138, %137 : vector<16x16xf32>
    %140 = arith.addf %36, %139 : vector<16x16xf32>
    %141 = vector.extract_strided_slice %31 {offsets = [0, 1, 0], sizes = [4, 16, 16], strides = [1, 1, 1]} : vector<4x18x16xf32> to vector<4x16x16xf32>
    %c3 = arith.constant 3 : index
    %142 = memref.load %arg2[%c3] : memref<144xf32, #tpu.memory_space<smem>>
    %143 = vector.extract_strided_slice %141 {offsets = [0, 0, 0], sizes = [1, 16, 16], strides = [1, 1, 1]} : vector<4x16x16xf32> to vector<1x16x16xf32>
    %144 = vector.shape_cast %143 : vector<1x16x16xf32> to vector<16x16xf32>
    %145 = vector.broadcast %142 : f32 to vector<16x16xf32>
    %146 = arith.mulf %145, %144 : vector<16x16xf32>
    %147 = arith.addf %64, %146 : vector<16x16xf32>
    %c12 = arith.constant 12 : index
    %148 = memref.load %arg2[%c12] : memref<144xf32, #tpu.memory_space<smem>>
    %149 = vector.extract_strided_slice %141 {offsets = [1, 0, 0], sizes = [1, 16, 16], strides = [1, 1, 1]} : vector<4x16x16xf32> to vector<1x16x16xf32>
    %150 = vector.shape_cast %149 : vector<1x16x16xf32> to vector<16x16xf32>
    %151 = vector.broadcast %148 : f32 to vector<16x16xf32>
    %152 = arith.mulf %151, %150 : vector<16x16xf32>
    %153 = arith.addf %147, %152 : vector<16x16xf32>
    %c21 = arith.constant 21 : index
    %154 = memref.load %arg2[%c21] : memref<144xf32, #tpu.memory_space<smem>>
    %155 = vector.extract_strided_slice %141 {offsets = [2, 0, 0], sizes = [1, 16, 16], strides = [1, 1, 1]} : vector<4x16x16xf32> to vector<1x16x16xf32>
    %156 = vector.shape_cast %155 : vector<1x16x16xf32> to vector<16x16xf32>
    %157 = vector.broadcast %154 : f32 to vector<16x16xf32>
    %158 = arith.mulf %157, %156 : vector<16x16xf32>
    %159 = arith.addf %153, %158 : vector<16x16xf32>
    %c30 = arith.constant 30 : index
    %160 = memref.load %arg2[%c30] : memref<144xf32, #tpu.memory_space<smem>>
    %161 = vector.extract_strided_slice %141 {offsets = [3, 0, 0], sizes = [1, 16, 16], strides = [1, 1, 1]} : vector<4x16x16xf32> to vector<1x16x16xf32>
    %162 = vector.shape_cast %161 : vector<1x16x16xf32> to vector<16x16xf32>
    %163 = vector.broadcast %160 : f32 to vector<16x16xf32>
    %164 = arith.mulf %163, %162 : vector<16x16xf32>
    %165 = arith.addf %159, %164 : vector<16x16xf32>
    %c39 = arith.constant 39 : index
    %166 = memref.load %arg2[%c39] : memref<144xf32, #tpu.memory_space<smem>>
    %167 = vector.extract_strided_slice %141 {offsets = [0, 0, 0], sizes = [1, 16, 16], strides = [1, 1, 1]} : vector<4x16x16xf32> to vector<1x16x16xf32>
    %168 = vector.shape_cast %167 : vector<1x16x16xf32> to vector<16x16xf32>
    %169 = vector.broadcast %166 : f32 to vector<16x16xf32>
    %170 = arith.mulf %169, %168 : vector<16x16xf32>
    %171 = arith.addf %88, %170 : vector<16x16xf32>
    %c48 = arith.constant 48 : index
    %172 = memref.load %arg2[%c48] : memref<144xf32, #tpu.memory_space<smem>>
    %173 = vector.extract_strided_slice %141 {offsets = [1, 0, 0], sizes = [1, 16, 16], strides = [1, 1, 1]} : vector<4x16x16xf32> to vector<1x16x16xf32>
    %174 = vector.shape_cast %173 : vector<1x16x16xf32> to vector<16x16xf32>
    %175 = vector.broadcast %172 : f32 to vector<16x16xf32>
    %176 = arith.mulf %175, %174 : vector<16x16xf32>
    %177 = arith.addf %171, %176 : vector<16x16xf32>
    %c57 = arith.constant 57 : index
    %178 = memref.load %arg2[%c57] : memref<144xf32, #tpu.memory_space<smem>>
    %179 = vector.extract_strided_slice %141 {offsets = [2, 0, 0], sizes = [1, 16, 16], strides = [1, 1, 1]} : vector<4x16x16xf32> to vector<1x16x16xf32>
    %180 = vector.shape_cast %179 : vector<1x16x16xf32> to vector<16x16xf32>
    %181 = vector.broadcast %178 : f32 to vector<16x16xf32>
    %182 = arith.mulf %181, %180 : vector<16x16xf32>
    %183 = arith.addf %177, %182 : vector<16x16xf32>
    %c66 = arith.constant 66 : index
    %184 = memref.load %arg2[%c66] : memref<144xf32, #tpu.memory_space<smem>>
    %185 = vector.extract_strided_slice %141 {offsets = [3, 0, 0], sizes = [1, 16, 16], strides = [1, 1, 1]} : vector<4x16x16xf32> to vector<1x16x16xf32>
    %186 = vector.shape_cast %185 : vector<1x16x16xf32> to vector<16x16xf32>
    %187 = vector.broadcast %184 : f32 to vector<16x16xf32>
    %188 = arith.mulf %187, %186 : vector<16x16xf32>
    %189 = arith.addf %183, %188 : vector<16x16xf32>
    %c75 = arith.constant 75 : index
    %190 = memref.load %arg2[%c75] : memref<144xf32, #tpu.memory_space<smem>>
    %191 = vector.extract_strided_slice %141 {offsets = [0, 0, 0], sizes = [1, 16, 16], strides = [1, 1, 1]} : vector<4x16x16xf32> to vector<1x16x16xf32>
    %192 = vector.shape_cast %191 : vector<1x16x16xf32> to vector<16x16xf32>
    %193 = vector.broadcast %190 : f32 to vector<16x16xf32>
    %194 = arith.mulf %193, %192 : vector<16x16xf32>
    %195 = arith.addf %112, %194 : vector<16x16xf32>
    %c84 = arith.constant 84 : index
    %196 = memref.load %arg2[%c84] : memref<144xf32, #tpu.memory_space<smem>>
    %197 = vector.extract_strided_slice %141 {offsets = [1, 0, 0], sizes = [1, 16, 16], strides = [1, 1, 1]} : vector<4x16x16xf32> to vector<1x16x16xf32>
    %198 = vector.shape_cast %197 : vector<1x16x16xf32> to vector<16x16xf32>
    %199 = vector.broadcast %196 : f32 to vector<16x16xf32>
    %200 = arith.mulf %199, %198 : vector<16x16xf32>
    %201 = arith.addf %195, %200 : vector<16x16xf32>
    %c93 = arith.constant 93 : index
    %202 = memref.load %arg2[%c93] : memref<144xf32, #tpu.memory_space<smem>>
    %203 = vector.extract_strided_slice %141 {offsets = [2, 0, 0], sizes = [1, 16, 16], strides = [1, 1, 1]} : vector<4x16x16xf32> to vector<1x16x16xf32>
    %204 = vector.shape_cast %203 : vector<1x16x16xf32> to vector<16x16xf32>
    %205 = vector.broadcast %202 : f32 to vector<16x16xf32>
    %206 = arith.mulf %205, %204 : vector<16x16xf32>
    %207 = arith.addf %201, %206 : vector<16x16xf32>
    %c102 = arith.constant 102 : index
    %208 = memref.load %arg2[%c102] : memref<144xf32, #tpu.memory_space<smem>>
    %209 = vector.extract_strided_slice %141 {offsets = [3, 0, 0], sizes = [1, 16, 16], strides = [1, 1, 1]} : vector<4x16x16xf32> to vector<1x16x16xf32>
    %210 = vector.shape_cast %209 : vector<1x16x16xf32> to vector<16x16xf32>
    %211 = vector.broadcast %208 : f32 to vector<16x16xf32>
    %212 = arith.mulf %211, %210 : vector<16x16xf32>
    %213 = arith.addf %207, %212 : vector<16x16xf32>
    %c111 = arith.constant 111 : index
    %214 = memref.load %arg2[%c111] : memref<144xf32, #tpu.memory_space<smem>>
    %215 = vector.extract_strided_slice %141 {offsets = [0, 0, 0], sizes = [1, 16, 16], strides = [1, 1, 1]} : vector<4x16x16xf32> to vector<1x16x16xf32>
    %216 = vector.shape_cast %215 : vector<1x16x16xf32> to vector<16x16xf32>
    %217 = vector.broadcast %214 : f32 to vector<16x16xf32>
    %218 = arith.mulf %217, %216 : vector<16x16xf32>
    %219 = arith.addf %136, %218 : vector<16x16xf32>
    %c120 = arith.constant 120 : index
    %220 = memref.load %arg2[%c120] : memref<144xf32, #tpu.memory_space<smem>>
    %221 = vector.extract_strided_slice %141 {offsets = [1, 0, 0], sizes = [1, 16, 16], strides = [1, 1, 1]} : vector<4x16x16xf32> to vector<1x16x16xf32>
    %222 = vector.shape_cast %221 : vector<1x16x16xf32> to vector<16x16xf32>
    %223 = vector.broadcast %220 : f32 to vector<16x16xf32>
    %224 = arith.mulf %223, %222 : vector<16x16xf32>
    %225 = arith.addf %219, %224 : vector<16x16xf32>
    %c129 = arith.constant 129 : index
    %226 = memref.load %arg2[%c129] : memref<144xf32, #tpu.memory_space<smem>>
    %227 = vector.extract_strided_slice %141 {offsets = [2, 0, 0], sizes = [1, 16, 16], strides = [1, 1, 1]} : vector<4x16x16xf32> to vector<1x16x16xf32>
    %228 = vector.shape_cast %227 : vector<1x16x16xf32> to vector<16x16xf32>
    %229 = vector.broadcast %226 : f32 to vector<16x16xf32>
    %230 = arith.mulf %229, %228 : vector<16x16xf32>
    %231 = arith.addf %225, %230 : vector<16x16xf32>
    %c138 = arith.constant 138 : index
    %232 = memref.load %arg2[%c138] : memref<144xf32, #tpu.memory_space<smem>>
    %233 = vector.extract_strided_slice %141 {offsets = [3, 0, 0], sizes = [1, 16, 16], strides = [1, 1, 1]} : vector<4x16x16xf32> to vector<1x16x16xf32>
    %234 = vector.shape_cast %233 : vector<1x16x16xf32> to vector<16x16xf32>
    %235 = vector.broadcast %232 : f32 to vector<16x16xf32>
    %236 = arith.mulf %235, %234 : vector<16x16xf32>
    %237 = arith.addf %231, %236 : vector<16x16xf32>
    %238 = vector.extract_strided_slice %32 {offsets = [2, 0], sizes = [16, 16], strides = [1, 1]} : vector<18x16xf32> to vector<16x16xf32>
    %cst_32 = arith.constant -1.000000e+00 : f32
    %239 = vector.broadcast %cst_32 : f32 to vector<16x16xf32>
    %240 = arith.mulf %239, %238 : vector<16x16xf32>
    %241 = arith.addf %140, %240 : vector<16x16xf32>
    %cst_33 = arith.constant 1.000000e+00 : f32
    %242 = vector.broadcast %cst_33 : f32 to vector<16x16xf32>
    %243 = arith.mulf %242, %238 : vector<16x16xf32>
    %244 = arith.addf %39, %243 : vector<16x16xf32>
    %245 = vector.extract_strided_slice %31 {offsets = [0, 2, 0], sizes = [4, 16, 16], strides = [1, 1, 1]} : vector<4x18x16xf32> to vector<4x16x16xf32>
    %c6 = arith.constant 6 : index
    %246 = memref.load %arg2[%c6] : memref<144xf32, #tpu.memory_space<smem>>
    %247 = vector.extract_strided_slice %245 {offsets = [0, 0, 0], sizes = [1, 16, 16], strides = [1, 1, 1]} : vector<4x16x16xf32> to vector<1x16x16xf32>
    %248 = vector.shape_cast %247 : vector<1x16x16xf32> to vector<16x16xf32>
    %249 = vector.broadcast %246 : f32 to vector<16x16xf32>
    %250 = arith.mulf %249, %248 : vector<16x16xf32>
    %251 = arith.addf %165, %250 : vector<16x16xf32>
    %c15 = arith.constant 15 : index
    %252 = memref.load %arg2[%c15] : memref<144xf32, #tpu.memory_space<smem>>
    %253 = vector.extract_strided_slice %245 {offsets = [1, 0, 0], sizes = [1, 16, 16], strides = [1, 1, 1]} : vector<4x16x16xf32> to vector<1x16x16xf32>
    %254 = vector.shape_cast %253 : vector<1x16x16xf32> to vector<16x16xf32>
    %255 = vector.broadcast %252 : f32 to vector<16x16xf32>
    %256 = arith.mulf %255, %254 : vector<16x16xf32>
    %257 = arith.addf %251, %256 : vector<16x16xf32>
    %c24 = arith.constant 24 : index
    %258 = memref.load %arg2[%c24] : memref<144xf32, #tpu.memory_space<smem>>
    %259 = vector.extract_strided_slice %245 {offsets = [2, 0, 0], sizes = [1, 16, 16], strides = [1, 1, 1]} : vector<4x16x16xf32> to vector<1x16x16xf32>
    %260 = vector.shape_cast %259 : vector<1x16x16xf32> to vector<16x16xf32>
    %261 = vector.broadcast %258 : f32 to vector<16x16xf32>
    %262 = arith.mulf %261, %260 : vector<16x16xf32>
    %263 = arith.addf %257, %262 : vector<16x16xf32>
    %c33 = arith.constant 33 : index
    %264 = memref.load %arg2[%c33] : memref<144xf32, #tpu.memory_space<smem>>
    %265 = vector.extract_strided_slice %245 {offsets = [3, 0, 0], sizes = [1, 16, 16], strides = [1, 1, 1]} : vector<4x16x16xf32> to vector<1x16x16xf32>
    %266 = vector.shape_cast %265 : vector<1x16x16xf32> to vector<16x16xf32>
    %267 = vector.broadcast %264 : f32 to vector<16x16xf32>
    %268 = arith.mulf %267, %266 : vector<16x16xf32>
    %269 = arith.addf %263, %268 : vector<16x16xf32>
    %c42 = arith.constant 42 : index
    %270 = memref.load %arg2[%c42] : memref<144xf32, #tpu.memory_space<smem>>
    %271 = vector.extract_strided_slice %245 {offsets = [0, 0, 0], sizes = [1, 16, 16], strides = [1, 1, 1]} : vector<4x16x16xf32> to vector<1x16x16xf32>
    %272 = vector.shape_cast %271 : vector<1x16x16xf32> to vector<16x16xf32>
    %273 = vector.broadcast %270 : f32 to vector<16x16xf32>
    %274 = arith.mulf %273, %272 : vector<16x16xf32>
    %275 = arith.addf %189, %274 : vector<16x16xf32>
    %c51 = arith.constant 51 : index
    %276 = memref.load %arg2[%c51] : memref<144xf32, #tpu.memory_space<smem>>
    %277 = vector.extract_strided_slice %245 {offsets = [1, 0, 0], sizes = [1, 16, 16], strides = [1, 1, 1]} : vector<4x16x16xf32> to vector<1x16x16xf32>
    %278 = vector.shape_cast %277 : vector<1x16x16xf32> to vector<16x16xf32>
    %279 = vector.broadcast %276 : f32 to vector<16x16xf32>
    %280 = arith.mulf %279, %278 : vector<16x16xf32>
    %281 = arith.addf %275, %280 : vector<16x16xf32>
    %c60 = arith.constant 60 : index
    %282 = memref.load %arg2[%c60] : memref<144xf32, #tpu.memory_space<smem>>
    %283 = vector.extract_strided_slice %245 {offsets = [2, 0, 0], sizes = [1, 16, 16], strides = [1, 1, 1]} : vector<4x16x16xf32> to vector<1x16x16xf32>
    %284 = vector.shape_cast %283 : vector<1x16x16xf32> to vector<16x16xf32>
    %285 = vector.broadcast %282 : f32 to vector<16x16xf32>
    %286 = arith.mulf %285, %284 : vector<16x16xf32>
    %287 = arith.addf %281, %286 : vector<16x16xf32>
    %c69 = arith.constant 69 : index
    %288 = memref.load %arg2[%c69] : memref<144xf32, #tpu.memory_space<smem>>
    %289 = vector.extract_strided_slice %245 {offsets = [3, 0, 0], sizes = [1, 16, 16], strides = [1, 1, 1]} : vector<4x16x16xf32> to vector<1x16x16xf32>
    %290 = vector.shape_cast %289 : vector<1x16x16xf32> to vector<16x16xf32>
    %291 = vector.broadcast %288 : f32 to vector<16x16xf32>
    %292 = arith.mulf %291, %290 : vector<16x16xf32>
    %293 = arith.addf %287, %292 : vector<16x16xf32>
    %c78 = arith.constant 78 : index
    %294 = memref.load %arg2[%c78] : memref<144xf32, #tpu.memory_space<smem>>
    %295 = vector.extract_strided_slice %245 {offsets = [0, 0, 0], sizes = [1, 16, 16], strides = [1, 1, 1]} : vector<4x16x16xf32> to vector<1x16x16xf32>
    %296 = vector.shape_cast %295 : vector<1x16x16xf32> to vector<16x16xf32>
    %297 = vector.broadcast %294 : f32 to vector<16x16xf32>
    %298 = arith.mulf %297, %296 : vector<16x16xf32>
    %299 = arith.addf %213, %298 : vector<16x16xf32>
    %c87 = arith.constant 87 : index
    %300 = memref.load %arg2[%c87] : memref<144xf32, #tpu.memory_space<smem>>
    %301 = vector.extract_strided_slice %245 {offsets = [1, 0, 0], sizes = [1, 16, 16], strides = [1, 1, 1]} : vector<4x16x16xf32> to vector<1x16x16xf32>
    %302 = vector.shape_cast %301 : vector<1x16x16xf32> to vector<16x16xf32>
    %303 = vector.broadcast %300 : f32 to vector<16x16xf32>
    %304 = arith.mulf %303, %302 : vector<16x16xf32>
    %305 = arith.addf %299, %304 : vector<16x16xf32>
    %c96 = arith.constant 96 : index
    %306 = memref.load %arg2[%c96] : memref<144xf32, #tpu.memory_space<smem>>
    %307 = vector.extract_strided_slice %245 {offsets = [2, 0, 0], sizes = [1, 16, 16], strides = [1, 1, 1]} : vector<4x16x16xf32> to vector<1x16x16xf32>
    %308 = vector.shape_cast %307 : vector<1x16x16xf32> to vector<16x16xf32>
    %309 = vector.broadcast %306 : f32 to vector<16x16xf32>
    %310 = arith.mulf %309, %308 : vector<16x16xf32>
    %311 = arith.addf %305, %310 : vector<16x16xf32>
    %c105 = arith.constant 105 : index
    %312 = memref.load %arg2[%c105] : memref<144xf32, #tpu.memory_space<smem>>
    %313 = vector.extract_strided_slice %245 {offsets = [3, 0, 0], sizes = [1, 16, 16], strides = [1, 1, 1]} : vector<4x16x16xf32> to vector<1x16x16xf32>
    %314 = vector.shape_cast %313 : vector<1x16x16xf32> to vector<16x16xf32>
    %315 = vector.broadcast %312 : f32 to vector<16x16xf32>
    %316 = arith.mulf %315, %314 : vector<16x16xf32>
    %317 = arith.addf %311, %316 : vector<16x16xf32>
    %c114 = arith.constant 114 : index
    %318 = memref.load %arg2[%c114] : memref<144xf32, #tpu.memory_space<smem>>
    %319 = vector.extract_strided_slice %245 {offsets = [0, 0, 0], sizes = [1, 16, 16], strides = [1, 1, 1]} : vector<4x16x16xf32> to vector<1x16x16xf32>
    %320 = vector.shape_cast %319 : vector<1x16x16xf32> to vector<16x16xf32>
    %321 = vector.broadcast %318 : f32 to vector<16x16xf32>
    %322 = arith.mulf %321, %320 : vector<16x16xf32>
    %323 = arith.addf %237, %322 : vector<16x16xf32>
    %c123 = arith.constant 123 : index
    %324 = memref.load %arg2[%c123] : memref<144xf32, #tpu.memory_space<smem>>
    %325 = vector.extract_strided_slice %245 {offsets = [1, 0, 0], sizes = [1, 16, 16], strides = [1, 1, 1]} : vector<4x16x16xf32> to vector<1x16x16xf32>
    %326 = vector.shape_cast %325 : vector<1x16x16xf32> to vector<16x16xf32>
    %327 = vector.broadcast %324 : f32 to vector<16x16xf32>
    %328 = arith.mulf %327, %326 : vector<16x16xf32>
    %329 = arith.addf %323, %328 : vector<16x16xf32>
    %c132 = arith.constant 132 : index
    %330 = memref.load %arg2[%c132] : memref<144xf32, #tpu.memory_space<smem>>
    %331 = vector.extract_strided_slice %245 {offsets = [2, 0, 0], sizes = [1, 16, 16], strides = [1, 1, 1]} : vector<4x16x16xf32> to vector<1x16x16xf32>
    %332 = vector.shape_cast %331 : vector<1x16x16xf32> to vector<16x16xf32>
    %333 = vector.broadcast %330 : f32 to vector<16x16xf32>
    %334 = arith.mulf %333, %332 : vector<16x16xf32>
    %335 = arith.addf %329, %334 : vector<16x16xf32>
    %c141 = arith.constant 141 : index
    %336 = memref.load %arg2[%c141] : memref<144xf32, #tpu.memory_space<smem>>
    %337 = vector.extract_strided_slice %245 {offsets = [3, 0, 0], sizes = [1, 16, 16], strides = [1, 1, 1]} : vector<4x16x16xf32> to vector<1x16x16xf32>
    %338 = vector.shape_cast %337 : vector<1x16x16xf32> to vector<16x16xf32>
    %339 = vector.broadcast %336 : f32 to vector<16x16xf32>
    %340 = arith.mulf %339, %338 : vector<16x16xf32>
    %341 = arith.addf %335, %340 : vector<16x16xf32>
    %342 = vector.extract_strided_slice %17 {offsets = [0, 0, 1], sizes = [4, 18, 16], strides = [1, 1, 1]} : vector<4x18x18xf32> to vector<4x18x16xf32>
    %343 = vector.extract_strided_slice %24 {offsets = [0, 1], sizes = [18, 16], strides = [1, 1]} : vector<18x18xf32> to vector<18x16xf32>
    %344 = vector.extract_strided_slice %343 {offsets = [0, 0], sizes = [16, 16], strides = [1, 1]} : vector<18x16xf32> to vector<16x16xf32>
    %cst_34 = arith.constant -2.000000e+00 : f32
    %345 = vector.broadcast %cst_34 : f32 to vector<16x16xf32>
    %346 = arith.mulf %345, %344 : vector<16x16xf32>
    %347 = arith.addf %244, %346 : vector<16x16xf32>
    %348 = vector.extract_strided_slice %342 {offsets = [0, 0, 0], sizes = [4, 16, 16], strides = [1, 1, 1]} : vector<4x18x16xf32> to vector<4x16x16xf32>
    %c1_35 = arith.constant 1 : index
    %349 = memref.load %arg2[%c1_35] : memref<144xf32, #tpu.memory_space<smem>>
    %350 = vector.extract_strided_slice %348 {offsets = [0, 0, 0], sizes = [1, 16, 16], strides = [1, 1, 1]} : vector<4x16x16xf32> to vector<1x16x16xf32>
    %351 = vector.shape_cast %350 : vector<1x16x16xf32> to vector<16x16xf32>
    %352 = vector.broadcast %349 : f32 to vector<16x16xf32>
    %353 = arith.mulf %352, %351 : vector<16x16xf32>
    %354 = arith.addf %269, %353 : vector<16x16xf32>
    %c10 = arith.constant 10 : index
    %355 = memref.load %arg2[%c10] : memref<144xf32, #tpu.memory_space<smem>>
    %356 = vector.extract_strided_slice %348 {offsets = [1, 0, 0], sizes = [1, 16, 16], strides = [1, 1, 1]} : vector<4x16x16xf32> to vector<1x16x16xf32>
    %357 = vector.shape_cast %356 : vector<1x16x16xf32> to vector<16x16xf32>
    %358 = vector.broadcast %355 : f32 to vector<16x16xf32>
    %359 = arith.mulf %358, %357 : vector<16x16xf32>
    %360 = arith.addf %354, %359 : vector<16x16xf32>
    %c19 = arith.constant 19 : index
    %361 = memref.load %arg2[%c19] : memref<144xf32, #tpu.memory_space<smem>>
    %362 = vector.extract_strided_slice %348 {offsets = [2, 0, 0], sizes = [1, 16, 16], strides = [1, 1, 1]} : vector<4x16x16xf32> to vector<1x16x16xf32>
    %363 = vector.shape_cast %362 : vector<1x16x16xf32> to vector<16x16xf32>
    %364 = vector.broadcast %361 : f32 to vector<16x16xf32>
    %365 = arith.mulf %364, %363 : vector<16x16xf32>
    %366 = arith.addf %360, %365 : vector<16x16xf32>
    %c28 = arith.constant 28 : index
    %367 = memref.load %arg2[%c28] : memref<144xf32, #tpu.memory_space<smem>>
    %368 = vector.extract_strided_slice %348 {offsets = [3, 0, 0], sizes = [1, 16, 16], strides = [1, 1, 1]} : vector<4x16x16xf32> to vector<1x16x16xf32>
    %369 = vector.shape_cast %368 : vector<1x16x16xf32> to vector<16x16xf32>
    %370 = vector.broadcast %367 : f32 to vector<16x16xf32>
    %371 = arith.mulf %370, %369 : vector<16x16xf32>
    %372 = arith.addf %366, %371 : vector<16x16xf32>
    %c37 = arith.constant 37 : index
    %373 = memref.load %arg2[%c37] : memref<144xf32, #tpu.memory_space<smem>>
    %374 = vector.extract_strided_slice %348 {offsets = [0, 0, 0], sizes = [1, 16, 16], strides = [1, 1, 1]} : vector<4x16x16xf32> to vector<1x16x16xf32>
    %375 = vector.shape_cast %374 : vector<1x16x16xf32> to vector<16x16xf32>
    %376 = vector.broadcast %373 : f32 to vector<16x16xf32>
    %377 = arith.mulf %376, %375 : vector<16x16xf32>
    %378 = arith.addf %293, %377 : vector<16x16xf32>
    %c46 = arith.constant 46 : index
    %379 = memref.load %arg2[%c46] : memref<144xf32, #tpu.memory_space<smem>>
    %380 = vector.extract_strided_slice %348 {offsets = [1, 0, 0], sizes = [1, 16, 16], strides = [1, 1, 1]} : vector<4x16x16xf32> to vector<1x16x16xf32>
    %381 = vector.shape_cast %380 : vector<1x16x16xf32> to vector<16x16xf32>
    %382 = vector.broadcast %379 : f32 to vector<16x16xf32>
    %383 = arith.mulf %382, %381 : vector<16x16xf32>
    %384 = arith.addf %378, %383 : vector<16x16xf32>
    %c55 = arith.constant 55 : index
    %385 = memref.load %arg2[%c55] : memref<144xf32, #tpu.memory_space<smem>>
    %386 = vector.extract_strided_slice %348 {offsets = [2, 0, 0], sizes = [1, 16, 16], strides = [1, 1, 1]} : vector<4x16x16xf32> to vector<1x16x16xf32>
    %387 = vector.shape_cast %386 : vector<1x16x16xf32> to vector<16x16xf32>
    %388 = vector.broadcast %385 : f32 to vector<16x16xf32>
    %389 = arith.mulf %388, %387 : vector<16x16xf32>
    %390 = arith.addf %384, %389 : vector<16x16xf32>
    %c64 = arith.constant 64 : index
    %391 = memref.load %arg2[%c64] : memref<144xf32, #tpu.memory_space<smem>>
    %392 = vector.extract_strided_slice %348 {offsets = [3, 0, 0], sizes = [1, 16, 16], strides = [1, 1, 1]} : vector<4x16x16xf32> to vector<1x16x16xf32>
    %393 = vector.shape_cast %392 : vector<1x16x16xf32> to vector<16x16xf32>
    %394 = vector.broadcast %391 : f32 to vector<16x16xf32>
    %395 = arith.mulf %394, %393 : vector<16x16xf32>
    %396 = arith.addf %390, %395 : vector<16x16xf32>
    %c73 = arith.constant 73 : index
    %397 = memref.load %arg2[%c73] : memref<144xf32, #tpu.memory_space<smem>>
    %398 = vector.extract_strided_slice %348 {offsets = [0, 0, 0], sizes = [1, 16, 16], strides = [1, 1, 1]} : vector<4x16x16xf32> to vector<1x16x16xf32>
    %399 = vector.shape_cast %398 : vector<1x16x16xf32> to vector<16x16xf32>
    %400 = vector.broadcast %397 : f32 to vector<16x16xf32>
    %401 = arith.mulf %400, %399 : vector<16x16xf32>
    %402 = arith.addf %317, %401 : vector<16x16xf32>
    %c82 = arith.constant 82 : index
    %403 = memref.load %arg2[%c82] : memref<144xf32, #tpu.memory_space<smem>>
    %404 = vector.extract_strided_slice %348 {offsets = [1, 0, 0], sizes = [1, 16, 16], strides = [1, 1, 1]} : vector<4x16x16xf32> to vector<1x16x16xf32>
    %405 = vector.shape_cast %404 : vector<1x16x16xf32> to vector<16x16xf32>
    %406 = vector.broadcast %403 : f32 to vector<16x16xf32>
    %407 = arith.mulf %406, %405 : vector<16x16xf32>
    %408 = arith.addf %402, %407 : vector<16x16xf32>
    %c91 = arith.constant 91 : index
    %409 = memref.load %arg2[%c91] : memref<144xf32, #tpu.memory_space<smem>>
    %410 = vector.extract_strided_slice %348 {offsets = [2, 0, 0], sizes = [1, 16, 16], strides = [1, 1, 1]} : vector<4x16x16xf32> to vector<1x16x16xf32>
    %411 = vector.shape_cast %410 : vector<1x16x16xf32> to vector<16x16xf32>
    %412 = vector.broadcast %409 : f32 to vector<16x16xf32>
    %413 = arith.mulf %412, %411 : vector<16x16xf32>
    %414 = arith.addf %408, %413 : vector<16x16xf32>
    %c100 = arith.constant 100 : index
    %415 = memref.load %arg2[%c100] : memref<144xf32, #tpu.memory_space<smem>>
    %416 = vector.extract_strided_slice %348 {offsets = [3, 0, 0], sizes = [1, 16, 16], strides = [1, 1, 1]} : vector<4x16x16xf32> to vector<1x16x16xf32>
    %417 = vector.shape_cast %416 : vector<1x16x16xf32> to vector<16x16xf32>
    %418 = vector.broadcast %415 : f32 to vector<16x16xf32>
    %419 = arith.mulf %418, %417 : vector<16x16xf32>
    %420 = arith.addf %414, %419 : vector<16x16xf32>
    %c109 = arith.constant 109 : index
    %421 = memref.load %arg2[%c109] : memref<144xf32, #tpu.memory_space<smem>>
    %422 = vector.extract_strided_slice %348 {offsets = [0, 0, 0], sizes = [1, 16, 16], strides = [1, 1, 1]} : vector<4x16x16xf32> to vector<1x16x16xf32>
    %423 = vector.shape_cast %422 : vector<1x16x16xf32> to vector<16x16xf32>
    %424 = vector.broadcast %421 : f32 to vector<16x16xf32>
    %425 = arith.mulf %424, %423 : vector<16x16xf32>
    %426 = arith.addf %341, %425 : vector<16x16xf32>
    %c118 = arith.constant 118 : index
    %427 = memref.load %arg2[%c118] : memref<144xf32, #tpu.memory_space<smem>>
    %428 = vector.extract_strided_slice %348 {offsets = [1, 0, 0], sizes = [1, 16, 16], strides = [1, 1, 1]} : vector<4x16x16xf32> to vector<1x16x16xf32>
    %429 = vector.shape_cast %428 : vector<1x16x16xf32> to vector<16x16xf32>
    %430 = vector.broadcast %427 : f32 to vector<16x16xf32>
    %431 = arith.mulf %430, %429 : vector<16x16xf32>
    %432 = arith.addf %426, %431 : vector<16x16xf32>
    %c127 = arith.constant 127 : index
    %433 = memref.load %arg2[%c127] : memref<144xf32, #tpu.memory_space<smem>>
    %434 = vector.extract_strided_slice %348 {offsets = [2, 0, 0], sizes = [1, 16, 16], strides = [1, 1, 1]} : vector<4x16x16xf32> to vector<1x16x16xf32>
    %435 = vector.shape_cast %434 : vector<1x16x16xf32> to vector<16x16xf32>
    %436 = vector.broadcast %433 : f32 to vector<16x16xf32>
    %437 = arith.mulf %436, %435 : vector<16x16xf32>
    %438 = arith.addf %432, %437 : vector<16x16xf32>
    %c136 = arith.constant 136 : index
    %439 = memref.load %arg2[%c136] : memref<144xf32, #tpu.memory_space<smem>>
    %440 = vector.extract_strided_slice %348 {offsets = [3, 0, 0], sizes = [1, 16, 16], strides = [1, 1, 1]} : vector<4x16x16xf32> to vector<1x16x16xf32>
    %441 = vector.shape_cast %440 : vector<1x16x16xf32> to vector<16x16xf32>
    %442 = vector.broadcast %439 : f32 to vector<16x16xf32>
    %443 = arith.mulf %442, %441 : vector<16x16xf32>
    %444 = arith.addf %438, %443 : vector<16x16xf32>
    %445 = vector.extract_strided_slice %342 {offsets = [0, 1, 0], sizes = [4, 16, 16], strides = [1, 1, 1]} : vector<4x18x16xf32> to vector<4x16x16xf32>
    %c4 = arith.constant 4 : index
    %446 = memref.load %arg2[%c4] : memref<144xf32, #tpu.memory_space<smem>>
    %447 = vector.extract_strided_slice %445 {offsets = [0, 0, 0], sizes = [1, 16, 16], strides = [1, 1, 1]} : vector<4x16x16xf32> to vector<1x16x16xf32>
    %448 = vector.shape_cast %447 : vector<1x16x16xf32> to vector<16x16xf32>
    %449 = vector.broadcast %446 : f32 to vector<16x16xf32>
    %450 = arith.mulf %449, %448 : vector<16x16xf32>
    %451 = arith.addf %372, %450 : vector<16x16xf32>
    %c13 = arith.constant 13 : index
    %452 = memref.load %arg2[%c13] : memref<144xf32, #tpu.memory_space<smem>>
    %453 = vector.extract_strided_slice %445 {offsets = [1, 0, 0], sizes = [1, 16, 16], strides = [1, 1, 1]} : vector<4x16x16xf32> to vector<1x16x16xf32>
    %454 = vector.shape_cast %453 : vector<1x16x16xf32> to vector<16x16xf32>
    %455 = vector.broadcast %452 : f32 to vector<16x16xf32>
    %456 = arith.mulf %455, %454 : vector<16x16xf32>
    %457 = arith.addf %451, %456 : vector<16x16xf32>
    %c22 = arith.constant 22 : index
    %458 = memref.load %arg2[%c22] : memref<144xf32, #tpu.memory_space<smem>>
    %459 = vector.extract_strided_slice %445 {offsets = [2, 0, 0], sizes = [1, 16, 16], strides = [1, 1, 1]} : vector<4x16x16xf32> to vector<1x16x16xf32>
    %460 = vector.shape_cast %459 : vector<1x16x16xf32> to vector<16x16xf32>
    %461 = vector.broadcast %458 : f32 to vector<16x16xf32>
    %462 = arith.mulf %461, %460 : vector<16x16xf32>
    %463 = arith.addf %457, %462 : vector<16x16xf32>
    %c31 = arith.constant 31 : index
    %464 = memref.load %arg2[%c31] : memref<144xf32, #tpu.memory_space<smem>>
    %465 = vector.extract_strided_slice %445 {offsets = [3, 0, 0], sizes = [1, 16, 16], strides = [1, 1, 1]} : vector<4x16x16xf32> to vector<1x16x16xf32>
    %466 = vector.shape_cast %465 : vector<1x16x16xf32> to vector<16x16xf32>
    %467 = vector.broadcast %464 : f32 to vector<16x16xf32>
    %468 = arith.mulf %467, %466 : vector<16x16xf32>
    %469 = arith.addf %463, %468 : vector<16x16xf32>
    %c40 = arith.constant 40 : index
    %470 = memref.load %arg2[%c40] : memref<144xf32, #tpu.memory_space<smem>>
    %471 = vector.extract_strided_slice %445 {offsets = [0, 0, 0], sizes = [1, 16, 16], strides = [1, 1, 1]} : vector<4x16x16xf32> to vector<1x16x16xf32>
    %472 = vector.shape_cast %471 : vector<1x16x16xf32> to vector<16x16xf32>
    %473 = vector.broadcast %470 : f32 to vector<16x16xf32>
    %474 = arith.mulf %473, %472 : vector<16x16xf32>
    %475 = arith.addf %396, %474 : vector<16x16xf32>
    %c49 = arith.constant 49 : index
    %476 = memref.load %arg2[%c49] : memref<144xf32, #tpu.memory_space<smem>>
    %477 = vector.extract_strided_slice %445 {offsets = [1, 0, 0], sizes = [1, 16, 16], strides = [1, 1, 1]} : vector<4x16x16xf32> to vector<1x16x16xf32>
    %478 = vector.shape_cast %477 : vector<1x16x16xf32> to vector<16x16xf32>
    %479 = vector.broadcast %476 : f32 to vector<16x16xf32>
    %480 = arith.mulf %479, %478 : vector<16x16xf32>
    %481 = arith.addf %475, %480 : vector<16x16xf32>
    %c58 = arith.constant 58 : index
    %482 = memref.load %arg2[%c58] : memref<144xf32, #tpu.memory_space<smem>>
    %483 = vector.extract_strided_slice %445 {offsets = [2, 0, 0], sizes = [1, 16, 16], strides = [1, 1, 1]} : vector<4x16x16xf32> to vector<1x16x16xf32>
    %484 = vector.shape_cast %483 : vector<1x16x16xf32> to vector<16x16xf32>
    %485 = vector.broadcast %482 : f32 to vector<16x16xf32>
    %486 = arith.mulf %485, %484 : vector<16x16xf32>
    %487 = arith.addf %481, %486 : vector<16x16xf32>
    %c67 = arith.constant 67 : index
    %488 = memref.load %arg2[%c67] : memref<144xf32, #tpu.memory_space<smem>>
    %489 = vector.extract_strided_slice %445 {offsets = [3, 0, 0], sizes = [1, 16, 16], strides = [1, 1, 1]} : vector<4x16x16xf32> to vector<1x16x16xf32>
    %490 = vector.shape_cast %489 : vector<1x16x16xf32> to vector<16x16xf32>
    %491 = vector.broadcast %488 : f32 to vector<16x16xf32>
    %492 = arith.mulf %491, %490 : vector<16x16xf32>
    %493 = arith.addf %487, %492 : vector<16x16xf32>
    %c76 = arith.constant 76 : index
    %494 = memref.load %arg2[%c76] : memref<144xf32, #tpu.memory_space<smem>>
    %495 = vector.extract_strided_slice %445 {offsets = [0, 0, 0], sizes = [1, 16, 16], strides = [1, 1, 1]} : vector<4x16x16xf32> to vector<1x16x16xf32>
    %496 = vector.shape_cast %495 : vector<1x16x16xf32> to vector<16x16xf32>
    %497 = vector.broadcast %494 : f32 to vector<16x16xf32>
    %498 = arith.mulf %497, %496 : vector<16x16xf32>
    %499 = arith.addf %420, %498 : vector<16x16xf32>
    %c85 = arith.constant 85 : index
    %500 = memref.load %arg2[%c85] : memref<144xf32, #tpu.memory_space<smem>>
    %501 = vector.extract_strided_slice %445 {offsets = [1, 0, 0], sizes = [1, 16, 16], strides = [1, 1, 1]} : vector<4x16x16xf32> to vector<1x16x16xf32>
    %502 = vector.shape_cast %501 : vector<1x16x16xf32> to vector<16x16xf32>
    %503 = vector.broadcast %500 : f32 to vector<16x16xf32>
    %504 = arith.mulf %503, %502 : vector<16x16xf32>
    %505 = arith.addf %499, %504 : vector<16x16xf32>
    %c94 = arith.constant 94 : index
    %506 = memref.load %arg2[%c94] : memref<144xf32, #tpu.memory_space<smem>>
    %507 = vector.extract_strided_slice %445 {offsets = [2, 0, 0], sizes = [1, 16, 16], strides = [1, 1, 1]} : vector<4x16x16xf32> to vector<1x16x16xf32>
    %508 = vector.shape_cast %507 : vector<1x16x16xf32> to vector<16x16xf32>
    %509 = vector.broadcast %506 : f32 to vector<16x16xf32>
    %510 = arith.mulf %509, %508 : vector<16x16xf32>
    %511 = arith.addf %505, %510 : vector<16x16xf32>
    %c103 = arith.constant 103 : index
    %512 = memref.load %arg2[%c103] : memref<144xf32, #tpu.memory_space<smem>>
    %513 = vector.extract_strided_slice %445 {offsets = [3, 0, 0], sizes = [1, 16, 16], strides = [1, 1, 1]} : vector<4x16x16xf32> to vector<1x16x16xf32>
    %514 = vector.shape_cast %513 : vector<1x16x16xf32> to vector<16x16xf32>
    %515 = vector.broadcast %512 : f32 to vector<16x16xf32>
    %516 = arith.mulf %515, %514 : vector<16x16xf32>
    %517 = arith.addf %511, %516 : vector<16x16xf32>
    %c112 = arith.constant 112 : index
    %518 = memref.load %arg2[%c112] : memref<144xf32, #tpu.memory_space<smem>>
    %519 = vector.extract_strided_slice %445 {offsets = [0, 0, 0], sizes = [1, 16, 16], strides = [1, 1, 1]} : vector<4x16x16xf32> to vector<1x16x16xf32>
    %520 = vector.shape_cast %519 : vector<1x16x16xf32> to vector<16x16xf32>
    %521 = vector.broadcast %518 : f32 to vector<16x16xf32>
    %522 = arith.mulf %521, %520 : vector<16x16xf32>
    %523 = arith.addf %444, %522 : vector<16x16xf32>
    %c121 = arith.constant 121 : index
    %524 = memref.load %arg2[%c121] : memref<144xf32, #tpu.memory_space<smem>>
    %525 = vector.extract_strided_slice %445 {offsets = [1, 0, 0], sizes = [1, 16, 16], strides = [1, 1, 1]} : vector<4x16x16xf32> to vector<1x16x16xf32>
    %526 = vector.shape_cast %525 : vector<1x16x16xf32> to vector<16x16xf32>
    %527 = vector.broadcast %524 : f32 to vector<16x16xf32>
    %528 = arith.mulf %527, %526 : vector<16x16xf32>
    %529 = arith.addf %523, %528 : vector<16x16xf32>
    %c130 = arith.constant 130 : index
    %530 = memref.load %arg2[%c130] : memref<144xf32, #tpu.memory_space<smem>>
    %531 = vector.extract_strided_slice %445 {offsets = [2, 0, 0], sizes = [1, 16, 16], strides = [1, 1, 1]} : vector<4x16x16xf32> to vector<1x16x16xf32>
    %532 = vector.shape_cast %531 : vector<1x16x16xf32> to vector<16x16xf32>
    %533 = vector.broadcast %530 : f32 to vector<16x16xf32>
    %534 = arith.mulf %533, %532 : vector<16x16xf32>
    %535 = arith.addf %529, %534 : vector<16x16xf32>
    %c139 = arith.constant 139 : index
    %536 = memref.load %arg2[%c139] : memref<144xf32, #tpu.memory_space<smem>>
    %537 = vector.extract_strided_slice %445 {offsets = [3, 0, 0], sizes = [1, 16, 16], strides = [1, 1, 1]} : vector<4x16x16xf32> to vector<1x16x16xf32>
    %538 = vector.shape_cast %537 : vector<1x16x16xf32> to vector<16x16xf32>
    %539 = vector.broadcast %536 : f32 to vector<16x16xf32>
    %540 = arith.mulf %539, %538 : vector<16x16xf32>
    %541 = arith.addf %535, %540 : vector<16x16xf32>
    %542 = vector.extract_strided_slice %343 {offsets = [2, 0], sizes = [16, 16], strides = [1, 1]} : vector<18x16xf32> to vector<16x16xf32>
    %cst_36 = arith.constant 2.000000e+00 : f32
    %543 = vector.broadcast %cst_36 : f32 to vector<16x16xf32>
    %544 = arith.mulf %543, %542 : vector<16x16xf32>
    %545 = arith.addf %347, %544 : vector<16x16xf32>
    %546 = vector.extract_strided_slice %342 {offsets = [0, 2, 0], sizes = [4, 16, 16], strides = [1, 1, 1]} : vector<4x18x16xf32> to vector<4x16x16xf32>
    %c7 = arith.constant 7 : index
    %547 = memref.load %arg2[%c7] : memref<144xf32, #tpu.memory_space<smem>>
    %548 = vector.extract_strided_slice %546 {offsets = [0, 0, 0], sizes = [1, 16, 16], strides = [1, 1, 1]} : vector<4x16x16xf32> to vector<1x16x16xf32>
    %549 = vector.shape_cast %548 : vector<1x16x16xf32> to vector<16x16xf32>
    %550 = vector.broadcast %547 : f32 to vector<16x16xf32>
    %551 = arith.mulf %550, %549 : vector<16x16xf32>
    %552 = arith.addf %469, %551 : vector<16x16xf32>
    %c16 = arith.constant 16 : index
    %553 = memref.load %arg2[%c16] : memref<144xf32, #tpu.memory_space<smem>>
    %554 = vector.extract_strided_slice %546 {offsets = [1, 0, 0], sizes = [1, 16, 16], strides = [1, 1, 1]} : vector<4x16x16xf32> to vector<1x16x16xf32>
    %555 = vector.shape_cast %554 : vector<1x16x16xf32> to vector<16x16xf32>
    %556 = vector.broadcast %553 : f32 to vector<16x16xf32>
    %557 = arith.mulf %556, %555 : vector<16x16xf32>
    %558 = arith.addf %552, %557 : vector<16x16xf32>
    %c25 = arith.constant 25 : index
    %559 = memref.load %arg2[%c25] : memref<144xf32, #tpu.memory_space<smem>>
    %560 = vector.extract_strided_slice %546 {offsets = [2, 0, 0], sizes = [1, 16, 16], strides = [1, 1, 1]} : vector<4x16x16xf32> to vector<1x16x16xf32>
    %561 = vector.shape_cast %560 : vector<1x16x16xf32> to vector<16x16xf32>
    %562 = vector.broadcast %559 : f32 to vector<16x16xf32>
    %563 = arith.mulf %562, %561 : vector<16x16xf32>
    %564 = arith.addf %558, %563 : vector<16x16xf32>
    %c34 = arith.constant 34 : index
    %565 = memref.load %arg2[%c34] : memref<144xf32, #tpu.memory_space<smem>>
    %566 = vector.extract_strided_slice %546 {offsets = [3, 0, 0], sizes = [1, 16, 16], strides = [1, 1, 1]} : vector<4x16x16xf32> to vector<1x16x16xf32>
    %567 = vector.shape_cast %566 : vector<1x16x16xf32> to vector<16x16xf32>
    %568 = vector.broadcast %565 : f32 to vector<16x16xf32>
    %569 = arith.mulf %568, %567 : vector<16x16xf32>
    %570 = arith.addf %564, %569 : vector<16x16xf32>
    %c43 = arith.constant 43 : index
    %571 = memref.load %arg2[%c43] : memref<144xf32, #tpu.memory_space<smem>>
    %572 = vector.extract_strided_slice %546 {offsets = [0, 0, 0], sizes = [1, 16, 16], strides = [1, 1, 1]} : vector<4x16x16xf32> to vector<1x16x16xf32>
    %573 = vector.shape_cast %572 : vector<1x16x16xf32> to vector<16x16xf32>
    %574 = vector.broadcast %571 : f32 to vector<16x16xf32>
    %575 = arith.mulf %574, %573 : vector<16x16xf32>
    %576 = arith.addf %493, %575 : vector<16x16xf32>
    %c52 = arith.constant 52 : index
    %577 = memref.load %arg2[%c52] : memref<144xf32, #tpu.memory_space<smem>>
    %578 = vector.extract_strided_slice %546 {offsets = [1, 0, 0], sizes = [1, 16, 16], strides = [1, 1, 1]} : vector<4x16x16xf32> to vector<1x16x16xf32>
    %579 = vector.shape_cast %578 : vector<1x16x16xf32> to vector<16x16xf32>
    %580 = vector.broadcast %577 : f32 to vector<16x16xf32>
    %581 = arith.mulf %580, %579 : vector<16x16xf32>
    %582 = arith.addf %576, %581 : vector<16x16xf32>
    %c61 = arith.constant 61 : index
    %583 = memref.load %arg2[%c61] : memref<144xf32, #tpu.memory_space<smem>>
    %584 = vector.extract_strided_slice %546 {offsets = [2, 0, 0], sizes = [1, 16, 16], strides = [1, 1, 1]} : vector<4x16x16xf32> to vector<1x16x16xf32>
    %585 = vector.shape_cast %584 : vector<1x16x16xf32> to vector<16x16xf32>
    %586 = vector.broadcast %583 : f32 to vector<16x16xf32>
    %587 = arith.mulf %586, %585 : vector<16x16xf32>
    %588 = arith.addf %582, %587 : vector<16x16xf32>
    %c70 = arith.constant 70 : index
    %589 = memref.load %arg2[%c70] : memref<144xf32, #tpu.memory_space<smem>>
    %590 = vector.extract_strided_slice %546 {offsets = [3, 0, 0], sizes = [1, 16, 16], strides = [1, 1, 1]} : vector<4x16x16xf32> to vector<1x16x16xf32>
    %591 = vector.shape_cast %590 : vector<1x16x16xf32> to vector<16x16xf32>
    %592 = vector.broadcast %589 : f32 to vector<16x16xf32>
    %593 = arith.mulf %592, %591 : vector<16x16xf32>
    %594 = arith.addf %588, %593 : vector<16x16xf32>
    %c79 = arith.constant 79 : index
    %595 = memref.load %arg2[%c79] : memref<144xf32, #tpu.memory_space<smem>>
    %596 = vector.extract_strided_slice %546 {offsets = [0, 0, 0], sizes = [1, 16, 16], strides = [1, 1, 1]} : vector<4x16x16xf32> to vector<1x16x16xf32>
    %597 = vector.shape_cast %596 : vector<1x16x16xf32> to vector<16x16xf32>
    %598 = vector.broadcast %595 : f32 to vector<16x16xf32>
    %599 = arith.mulf %598, %597 : vector<16x16xf32>
    %600 = arith.addf %517, %599 : vector<16x16xf32>
    %c88 = arith.constant 88 : index
    %601 = memref.load %arg2[%c88] : memref<144xf32, #tpu.memory_space<smem>>
    %602 = vector.extract_strided_slice %546 {offsets = [1, 0, 0], sizes = [1, 16, 16], strides = [1, 1, 1]} : vector<4x16x16xf32> to vector<1x16x16xf32>
    %603 = vector.shape_cast %602 : vector<1x16x16xf32> to vector<16x16xf32>
    %604 = vector.broadcast %601 : f32 to vector<16x16xf32>
    %605 = arith.mulf %604, %603 : vector<16x16xf32>
    %606 = arith.addf %600, %605 : vector<16x16xf32>
    %c97 = arith.constant 97 : index
    %607 = memref.load %arg2[%c97] : memref<144xf32, #tpu.memory_space<smem>>
    %608 = vector.extract_strided_slice %546 {offsets = [2, 0, 0], sizes = [1, 16, 16], strides = [1, 1, 1]} : vector<4x16x16xf32> to vector<1x16x16xf32>
    %609 = vector.shape_cast %608 : vector<1x16x16xf32> to vector<16x16xf32>
    %610 = vector.broadcast %607 : f32 to vector<16x16xf32>
    %611 = arith.mulf %610, %609 : vector<16x16xf32>
    %612 = arith.addf %606, %611 : vector<16x16xf32>
    %c106 = arith.constant 106 : index
    %613 = memref.load %arg2[%c106] : memref<144xf32, #tpu.memory_space<smem>>
    %614 = vector.extract_strided_slice %546 {offsets = [3, 0, 0], sizes = [1, 16, 16], strides = [1, 1, 1]} : vector<4x16x16xf32> to vector<1x16x16xf32>
    %615 = vector.shape_cast %614 : vector<1x16x16xf32> to vector<16x16xf32>
    %616 = vector.broadcast %613 : f32 to vector<16x16xf32>
    %617 = arith.mulf %616, %615 : vector<16x16xf32>
    %618 = arith.addf %612, %617 : vector<16x16xf32>
    %c115 = arith.constant 115 : index
    %619 = memref.load %arg2[%c115] : memref<144xf32, #tpu.memory_space<smem>>
    %620 = vector.extract_strided_slice %546 {offsets = [0, 0, 0], sizes = [1, 16, 16], strides = [1, 1, 1]} : vector<4x16x16xf32> to vector<1x16x16xf32>
    %621 = vector.shape_cast %620 : vector<1x16x16xf32> to vector<16x16xf32>
    %622 = vector.broadcast %619 : f32 to vector<16x16xf32>
    %623 = arith.mulf %622, %621 : vector<16x16xf32>
    %624 = arith.addf %541, %623 : vector<16x16xf32>
    %c124 = arith.constant 124 : index
    %625 = memref.load %arg2[%c124] : memref<144xf32, #tpu.memory_space<smem>>
    %626 = vector.extract_strided_slice %546 {offsets = [1, 0, 0], sizes = [1, 16, 16], strides = [1, 1, 1]} : vector<4x16x16xf32> to vector<1x16x16xf32>
    %627 = vector.shape_cast %626 : vector<1x16x16xf32> to vector<16x16xf32>
    %628 = vector.broadcast %625 : f32 to vector<16x16xf32>
    %629 = arith.mulf %628, %627 : vector<16x16xf32>
    %630 = arith.addf %624, %629 : vector<16x16xf32>
    %c133 = arith.constant 133 : index
    %631 = memref.load %arg2[%c133] : memref<144xf32, #tpu.memory_space<smem>>
    %632 = vector.extract_strided_slice %546 {offsets = [2, 0, 0], sizes = [1, 16, 16], strides = [1, 1, 1]} : vector<4x16x16xf32> to vector<1x16x16xf32>
    %633 = vector.shape_cast %632 : vector<1x16x16xf32> to vector<16x16xf32>
    %634 = vector.broadcast %631 : f32 to vector<16x16xf32>
    %635 = arith.mulf %634, %633 : vector<16x16xf32>
    %636 = arith.addf %630, %635 : vector<16x16xf32>
    %c142 = arith.constant 142 : index
    %637 = memref.load %arg2[%c142] : memref<144xf32, #tpu.memory_space<smem>>
    %638 = vector.extract_strided_slice %546 {offsets = [3, 0, 0], sizes = [1, 16, 16], strides = [1, 1, 1]} : vector<4x16x16xf32> to vector<1x16x16xf32>
    %639 = vector.shape_cast %638 : vector<1x16x16xf32> to vector<16x16xf32>
    %640 = vector.broadcast %637 : f32 to vector<16x16xf32>
    %641 = arith.mulf %640, %639 : vector<16x16xf32>
    %642 = arith.addf %636, %641 : vector<16x16xf32>
    %643 = vector.extract_strided_slice %17 {offsets = [0, 0, 2], sizes = [4, 18, 16], strides = [1, 1, 1]} : vector<4x18x18xf32> to vector<4x18x16xf32>
    %644 = vector.extract_strided_slice %24 {offsets = [0, 2], sizes = [18, 16], strides = [1, 1]} : vector<18x18xf32> to vector<18x16xf32>
    %645 = vector.extract_strided_slice %644 {offsets = [0, 0], sizes = [16, 16], strides = [1, 1]} : vector<18x16xf32> to vector<16x16xf32>
    %cst_37 = arith.constant 1.000000e+00 : f32
    %646 = vector.broadcast %cst_37 : f32 to vector<16x16xf32>
    %647 = arith.mulf %646, %645 : vector<16x16xf32>
    %648 = arith.addf %241, %647 : vector<16x16xf32>
    %cst_38 = arith.constant -1.000000e+00 : f32
    %649 = vector.broadcast %cst_38 : f32 to vector<16x16xf32>
    %650 = arith.mulf %649, %645 : vector<16x16xf32>
    %651 = arith.addf %545, %650 : vector<16x16xf32>
    %652 = vector.extract_strided_slice %643 {offsets = [0, 0, 0], sizes = [4, 16, 16], strides = [1, 1, 1]} : vector<4x18x16xf32> to vector<4x16x16xf32>
    %c2 = arith.constant 2 : index
    %653 = memref.load %arg2[%c2] : memref<144xf32, #tpu.memory_space<smem>>
    %654 = vector.extract_strided_slice %652 {offsets = [0, 0, 0], sizes = [1, 16, 16], strides = [1, 1, 1]} : vector<4x16x16xf32> to vector<1x16x16xf32>
    %655 = vector.shape_cast %654 : vector<1x16x16xf32> to vector<16x16xf32>
    %656 = vector.broadcast %653 : f32 to vector<16x16xf32>
    %657 = arith.mulf %656, %655 : vector<16x16xf32>
    %658 = arith.addf %570, %657 : vector<16x16xf32>
    %c11 = arith.constant 11 : index
    %659 = memref.load %arg2[%c11] : memref<144xf32, #tpu.memory_space<smem>>
    %660 = vector.extract_strided_slice %652 {offsets = [1, 0, 0], sizes = [1, 16, 16], strides = [1, 1, 1]} : vector<4x16x16xf32> to vector<1x16x16xf32>
    %661 = vector.shape_cast %660 : vector<1x16x16xf32> to vector<16x16xf32>
    %662 = vector.broadcast %659 : f32 to vector<16x16xf32>
    %663 = arith.mulf %662, %661 : vector<16x16xf32>
    %664 = arith.addf %658, %663 : vector<16x16xf32>
    %c20 = arith.constant 20 : index
    %665 = memref.load %arg2[%c20] : memref<144xf32, #tpu.memory_space<smem>>
    %666 = vector.extract_strided_slice %652 {offsets = [2, 0, 0], sizes = [1, 16, 16], strides = [1, 1, 1]} : vector<4x16x16xf32> to vector<1x16x16xf32>
    %667 = vector.shape_cast %666 : vector<1x16x16xf32> to vector<16x16xf32>
    %668 = vector.broadcast %665 : f32 to vector<16x16xf32>
    %669 = arith.mulf %668, %667 : vector<16x16xf32>
    %670 = arith.addf %664, %669 : vector<16x16xf32>
    %c29 = arith.constant 29 : index
    %671 = memref.load %arg2[%c29] : memref<144xf32, #tpu.memory_space<smem>>
    %672 = vector.extract_strided_slice %652 {offsets = [3, 0, 0], sizes = [1, 16, 16], strides = [1, 1, 1]} : vector<4x16x16xf32> to vector<1x16x16xf32>
    %673 = vector.shape_cast %672 : vector<1x16x16xf32> to vector<16x16xf32>
    %674 = vector.broadcast %671 : f32 to vector<16x16xf32>
    %675 = arith.mulf %674, %673 : vector<16x16xf32>
    %676 = arith.addf %670, %675 : vector<16x16xf32>
    %c38 = arith.constant 38 : index
    %677 = memref.load %arg2[%c38] : memref<144xf32, #tpu.memory_space<smem>>
    %678 = vector.extract_strided_slice %652 {offsets = [0, 0, 0], sizes = [1, 16, 16], strides = [1, 1, 1]} : vector<4x16x16xf32> to vector<1x16x16xf32>
    %679 = vector.shape_cast %678 : vector<1x16x16xf32> to vector<16x16xf32>
    %680 = vector.broadcast %677 : f32 to vector<16x16xf32>
    %681 = arith.mulf %680, %679 : vector<16x16xf32>
    %682 = arith.addf %594, %681 : vector<16x16xf32>
    %c47 = arith.constant 47 : index
    %683 = memref.load %arg2[%c47] : memref<144xf32, #tpu.memory_space<smem>>
    %684 = vector.extract_strided_slice %652 {offsets = [1, 0, 0], sizes = [1, 16, 16], strides = [1, 1, 1]} : vector<4x16x16xf32> to vector<1x16x16xf32>
    %685 = vector.shape_cast %684 : vector<1x16x16xf32> to vector<16x16xf32>
    %686 = vector.broadcast %683 : f32 to vector<16x16xf32>
    %687 = arith.mulf %686, %685 : vector<16x16xf32>
    %688 = arith.addf %682, %687 : vector<16x16xf32>
    %c56 = arith.constant 56 : index
    %689 = memref.load %arg2[%c56] : memref<144xf32, #tpu.memory_space<smem>>
    %690 = vector.extract_strided_slice %652 {offsets = [2, 0, 0], sizes = [1, 16, 16], strides = [1, 1, 1]} : vector<4x16x16xf32> to vector<1x16x16xf32>
    %691 = vector.shape_cast %690 : vector<1x16x16xf32> to vector<16x16xf32>
    %692 = vector.broadcast %689 : f32 to vector<16x16xf32>
    %693 = arith.mulf %692, %691 : vector<16x16xf32>
    %694 = arith.addf %688, %693 : vector<16x16xf32>
    %c65 = arith.constant 65 : index
    %695 = memref.load %arg2[%c65] : memref<144xf32, #tpu.memory_space<smem>>
    %696 = vector.extract_strided_slice %652 {offsets = [3, 0, 0], sizes = [1, 16, 16], strides = [1, 1, 1]} : vector<4x16x16xf32> to vector<1x16x16xf32>
    %697 = vector.shape_cast %696 : vector<1x16x16xf32> to vector<16x16xf32>
    %698 = vector.broadcast %695 : f32 to vector<16x16xf32>
    %699 = arith.mulf %698, %697 : vector<16x16xf32>
    %700 = arith.addf %694, %699 : vector<16x16xf32>
    %c74 = arith.constant 74 : index
    %701 = memref.load %arg2[%c74] : memref<144xf32, #tpu.memory_space<smem>>
    %702 = vector.extract_strided_slice %652 {offsets = [0, 0, 0], sizes = [1, 16, 16], strides = [1, 1, 1]} : vector<4x16x16xf32> to vector<1x16x16xf32>
    %703 = vector.shape_cast %702 : vector<1x16x16xf32> to vector<16x16xf32>
    %704 = vector.broadcast %701 : f32 to vector<16x16xf32>
    %705 = arith.mulf %704, %703 : vector<16x16xf32>
    %706 = arith.addf %618, %705 : vector<16x16xf32>
    %c83 = arith.constant 83 : index
    %707 = memref.load %arg2[%c83] : memref<144xf32, #tpu.memory_space<smem>>
    %708 = vector.extract_strided_slice %652 {offsets = [1, 0, 0], sizes = [1, 16, 16], strides = [1, 1, 1]} : vector<4x16x16xf32> to vector<1x16x16xf32>
    %709 = vector.shape_cast %708 : vector<1x16x16xf32> to vector<16x16xf32>
    %710 = vector.broadcast %707 : f32 to vector<16x16xf32>
    %711 = arith.mulf %710, %709 : vector<16x16xf32>
    %712 = arith.addf %706, %711 : vector<16x16xf32>
    %c92 = arith.constant 92 : index
    %713 = memref.load %arg2[%c92] : memref<144xf32, #tpu.memory_space<smem>>
    %714 = vector.extract_strided_slice %652 {offsets = [2, 0, 0], sizes = [1, 16, 16], strides = [1, 1, 1]} : vector<4x16x16xf32> to vector<1x16x16xf32>
    %715 = vector.shape_cast %714 : vector<1x16x16xf32> to vector<16x16xf32>
    %716 = vector.broadcast %713 : f32 to vector<16x16xf32>
    %717 = arith.mulf %716, %715 : vector<16x16xf32>
    %718 = arith.addf %712, %717 : vector<16x16xf32>
    %c101 = arith.constant 101 : index
    %719 = memref.load %arg2[%c101] : memref<144xf32, #tpu.memory_space<smem>>
    %720 = vector.extract_strided_slice %652 {offsets = [3, 0, 0], sizes = [1, 16, 16], strides = [1, 1, 1]} : vector<4x16x16xf32> to vector<1x16x16xf32>
    %721 = vector.shape_cast %720 : vector<1x16x16xf32> to vector<16x16xf32>
    %722 = vector.broadcast %719 : f32 to vector<16x16xf32>
    %723 = arith.mulf %722, %721 : vector<16x16xf32>
    %724 = arith.addf %718, %723 : vector<16x16xf32>
    %c110 = arith.constant 110 : index
    %725 = memref.load %arg2[%c110] : memref<144xf32, #tpu.memory_space<smem>>
    %726 = vector.extract_strided_slice %652 {offsets = [0, 0, 0], sizes = [1, 16, 16], strides = [1, 1, 1]} : vector<4x16x16xf32> to vector<1x16x16xf32>
    %727 = vector.shape_cast %726 : vector<1x16x16xf32> to vector<16x16xf32>
    %728 = vector.broadcast %725 : f32 to vector<16x16xf32>
    %729 = arith.mulf %728, %727 : vector<16x16xf32>
    %730 = arith.addf %642, %729 : vector<16x16xf32>
    %c119 = arith.constant 119 : index
    %731 = memref.load %arg2[%c119] : memref<144xf32, #tpu.memory_space<smem>>
    %732 = vector.extract_strided_slice %652 {offsets = [1, 0, 0], sizes = [1, 16, 16], strides = [1, 1, 1]} : vector<4x16x16xf32> to vector<1x16x16xf32>
    %733 = vector.shape_cast %732 : vector<1x16x16xf32> to vector<16x16xf32>
    %734 = vector.broadcast %731 : f32 to vector<16x16xf32>
    %735 = arith.mulf %734, %733 : vector<16x16xf32>
    %736 = arith.addf %730, %735 : vector<16x16xf32>
    %c128 = arith.constant 128 : index
    %737 = memref.load %arg2[%c128] : memref<144xf32, #tpu.memory_space<smem>>
    %738 = vector.extract_strided_slice %652 {offsets = [2, 0, 0], sizes = [1, 16, 16], strides = [1, 1, 1]} : vector<4x16x16xf32> to vector<1x16x16xf32>
    %739 = vector.shape_cast %738 : vector<1x16x16xf32> to vector<16x16xf32>
    %740 = vector.broadcast %737 : f32 to vector<16x16xf32>
    %741 = arith.mulf %740, %739 : vector<16x16xf32>
    %742 = arith.addf %736, %741 : vector<16x16xf32>
    %c137 = arith.constant 137 : index
    %743 = memref.load %arg2[%c137] : memref<144xf32, #tpu.memory_space<smem>>
    %744 = vector.extract_strided_slice %652 {offsets = [3, 0, 0], sizes = [1, 16, 16], strides = [1, 1, 1]} : vector<4x16x16xf32> to vector<1x16x16xf32>
    %745 = vector.shape_cast %744 : vector<1x16x16xf32> to vector<16x16xf32>
    %746 = vector.broadcast %743 : f32 to vector<16x16xf32>
    %747 = arith.mulf %746, %745 : vector<16x16xf32>
    %748 = arith.addf %742, %747 : vector<16x16xf32>
    %749 = vector.extract_strided_slice %644 {offsets = [1, 0], sizes = [16, 16], strides = [1, 1]} : vector<18x16xf32> to vector<16x16xf32>
    %cst_39 = arith.constant 2.000000e+00 : f32
    %750 = vector.broadcast %cst_39 : f32 to vector<16x16xf32>
    %751 = arith.mulf %750, %749 : vector<16x16xf32>
    %752 = arith.addf %648, %751 : vector<16x16xf32>
    %753 = vector.extract_strided_slice %643 {offsets = [0, 1, 0], sizes = [4, 16, 16], strides = [1, 1, 1]} : vector<4x18x16xf32> to vector<4x16x16xf32>
    %c5 = arith.constant 5 : index
    %754 = memref.load %arg2[%c5] : memref<144xf32, #tpu.memory_space<smem>>
    %755 = vector.extract_strided_slice %753 {offsets = [0, 0, 0], sizes = [1, 16, 16], strides = [1, 1, 1]} : vector<4x16x16xf32> to vector<1x16x16xf32>
    %756 = vector.shape_cast %755 : vector<1x16x16xf32> to vector<16x16xf32>
    %757 = vector.broadcast %754 : f32 to vector<16x16xf32>
    %758 = arith.mulf %757, %756 : vector<16x16xf32>
    %759 = arith.addf %676, %758 : vector<16x16xf32>
    %c14 = arith.constant 14 : index
    %760 = memref.load %arg2[%c14] : memref<144xf32, #tpu.memory_space<smem>>
    %761 = vector.extract_strided_slice %753 {offsets = [1, 0, 0], sizes = [1, 16, 16], strides = [1, 1, 1]} : vector<4x16x16xf32> to vector<1x16x16xf32>
    %762 = vector.shape_cast %761 : vector<1x16x16xf32> to vector<16x16xf32>
    %763 = vector.broadcast %760 : f32 to vector<16x16xf32>
    %764 = arith.mulf %763, %762 : vector<16x16xf32>
    %765 = arith.addf %759, %764 : vector<16x16xf32>
    %c23 = arith.constant 23 : index
    %766 = memref.load %arg2[%c23] : memref<144xf32, #tpu.memory_space<smem>>
    %767 = vector.extract_strided_slice %753 {offsets = [2, 0, 0], sizes = [1, 16, 16], strides = [1, 1, 1]} : vector<4x16x16xf32> to vector<1x16x16xf32>
    %768 = vector.shape_cast %767 : vector<1x16x16xf32> to vector<16x16xf32>
    %769 = vector.broadcast %766 : f32 to vector<16x16xf32>
    %770 = arith.mulf %769, %768 : vector<16x16xf32>
    %771 = arith.addf %765, %770 : vector<16x16xf32>
    %c32 = arith.constant 32 : index
    %772 = memref.load %arg2[%c32] : memref<144xf32, #tpu.memory_space<smem>>
    %773 = vector.extract_strided_slice %753 {offsets = [3, 0, 0], sizes = [1, 16, 16], strides = [1, 1, 1]} : vector<4x16x16xf32> to vector<1x16x16xf32>
    %774 = vector.shape_cast %773 : vector<1x16x16xf32> to vector<16x16xf32>
    %775 = vector.broadcast %772 : f32 to vector<16x16xf32>
    %776 = arith.mulf %775, %774 : vector<16x16xf32>
    %777 = arith.addf %771, %776 : vector<16x16xf32>
    %c41 = arith.constant 41 : index
    %778 = memref.load %arg2[%c41] : memref<144xf32, #tpu.memory_space<smem>>
    %779 = vector.extract_strided_slice %753 {offsets = [0, 0, 0], sizes = [1, 16, 16], strides = [1, 1, 1]} : vector<4x16x16xf32> to vector<1x16x16xf32>
    %780 = vector.shape_cast %779 : vector<1x16x16xf32> to vector<16x16xf32>
    %781 = vector.broadcast %778 : f32 to vector<16x16xf32>
    %782 = arith.mulf %781, %780 : vector<16x16xf32>
    %783 = arith.addf %700, %782 : vector<16x16xf32>
    %c50 = arith.constant 50 : index
    %784 = memref.load %arg2[%c50] : memref<144xf32, #tpu.memory_space<smem>>
    %785 = vector.extract_strided_slice %753 {offsets = [1, 0, 0], sizes = [1, 16, 16], strides = [1, 1, 1]} : vector<4x16x16xf32> to vector<1x16x16xf32>
    %786 = vector.shape_cast %785 : vector<1x16x16xf32> to vector<16x16xf32>
    %787 = vector.broadcast %784 : f32 to vector<16x16xf32>
    %788 = arith.mulf %787, %786 : vector<16x16xf32>
    %789 = arith.addf %783, %788 : vector<16x16xf32>
    %c59 = arith.constant 59 : index
    %790 = memref.load %arg2[%c59] : memref<144xf32, #tpu.memory_space<smem>>
    %791 = vector.extract_strided_slice %753 {offsets = [2, 0, 0], sizes = [1, 16, 16], strides = [1, 1, 1]} : vector<4x16x16xf32> to vector<1x16x16xf32>
    %792 = vector.shape_cast %791 : vector<1x16x16xf32> to vector<16x16xf32>
    %793 = vector.broadcast %790 : f32 to vector<16x16xf32>
    %794 = arith.mulf %793, %792 : vector<16x16xf32>
    %795 = arith.addf %789, %794 : vector<16x16xf32>
    %c68 = arith.constant 68 : index
    %796 = memref.load %arg2[%c68] : memref<144xf32, #tpu.memory_space<smem>>
    %797 = vector.extract_strided_slice %753 {offsets = [3, 0, 0], sizes = [1, 16, 16], strides = [1, 1, 1]} : vector<4x16x16xf32> to vector<1x16x16xf32>
    %798 = vector.shape_cast %797 : vector<1x16x16xf32> to vector<16x16xf32>
    %799 = vector.broadcast %796 : f32 to vector<16x16xf32>
    %800 = arith.mulf %799, %798 : vector<16x16xf32>
    %801 = arith.addf %795, %800 : vector<16x16xf32>
    %c77 = arith.constant 77 : index
    %802 = memref.load %arg2[%c77] : memref<144xf32, #tpu.memory_space<smem>>
    %803 = vector.extract_strided_slice %753 {offsets = [0, 0, 0], sizes = [1, 16, 16], strides = [1, 1, 1]} : vector<4x16x16xf32> to vector<1x16x16xf32>
    %804 = vector.shape_cast %803 : vector<1x16x16xf32> to vector<16x16xf32>
    %805 = vector.broadcast %802 : f32 to vector<16x16xf32>
    %806 = arith.mulf %805, %804 : vector<16x16xf32>
    %807 = arith.addf %724, %806 : vector<16x16xf32>
    %c86 = arith.constant 86 : index
    %808 = memref.load %arg2[%c86] : memref<144xf32, #tpu.memory_space<smem>>
    %809 = vector.extract_strided_slice %753 {offsets = [1, 0, 0], sizes = [1, 16, 16], strides = [1, 1, 1]} : vector<4x16x16xf32> to vector<1x16x16xf32>
    %810 = vector.shape_cast %809 : vector<1x16x16xf32> to vector<16x16xf32>
    %811 = vector.broadcast %808 : f32 to vector<16x16xf32>
    %812 = arith.mulf %811, %810 : vector<16x16xf32>
    %813 = arith.addf %807, %812 : vector<16x16xf32>
    %c95 = arith.constant 95 : index
    %814 = memref.load %arg2[%c95] : memref<144xf32, #tpu.memory_space<smem>>
    %815 = vector.extract_strided_slice %753 {offsets = [2, 0, 0], sizes = [1, 16, 16], strides = [1, 1, 1]} : vector<4x16x16xf32> to vector<1x16x16xf32>
    %816 = vector.shape_cast %815 : vector<1x16x16xf32> to vector<16x16xf32>
    %817 = vector.broadcast %814 : f32 to vector<16x16xf32>
    %818 = arith.mulf %817, %816 : vector<16x16xf32>
    %819 = arith.addf %813, %818 : vector<16x16xf32>
    %c104 = arith.constant 104 : index
    %820 = memref.load %arg2[%c104] : memref<144xf32, #tpu.memory_space<smem>>
    %821 = vector.extract_strided_slice %753 {offsets = [3, 0, 0], sizes = [1, 16, 16], strides = [1, 1, 1]} : vector<4x16x16xf32> to vector<1x16x16xf32>
    %822 = vector.shape_cast %821 : vector<1x16x16xf32> to vector<16x16xf32>
    %823 = vector.broadcast %820 : f32 to vector<16x16xf32>
    %824 = arith.mulf %823, %822 : vector<16x16xf32>
    %825 = arith.addf %819, %824 : vector<16x16xf32>
    %c113 = arith.constant 113 : index
    %826 = memref.load %arg2[%c113] : memref<144xf32, #tpu.memory_space<smem>>
    %827 = vector.extract_strided_slice %753 {offsets = [0, 0, 0], sizes = [1, 16, 16], strides = [1, 1, 1]} : vector<4x16x16xf32> to vector<1x16x16xf32>
    %828 = vector.shape_cast %827 : vector<1x16x16xf32> to vector<16x16xf32>
    %829 = vector.broadcast %826 : f32 to vector<16x16xf32>
    %830 = arith.mulf %829, %828 : vector<16x16xf32>
    %831 = arith.addf %748, %830 : vector<16x16xf32>
    %c122 = arith.constant 122 : index
    %832 = memref.load %arg2[%c122] : memref<144xf32, #tpu.memory_space<smem>>
    %833 = vector.extract_strided_slice %753 {offsets = [1, 0, 0], sizes = [1, 16, 16], strides = [1, 1, 1]} : vector<4x16x16xf32> to vector<1x16x16xf32>
    %834 = vector.shape_cast %833 : vector<1x16x16xf32> to vector<16x16xf32>
    %835 = vector.broadcast %832 : f32 to vector<16x16xf32>
    %836 = arith.mulf %835, %834 : vector<16x16xf32>
    %837 = arith.addf %831, %836 : vector<16x16xf32>
    %c131 = arith.constant 131 : index
    %838 = memref.load %arg2[%c131] : memref<144xf32, #tpu.memory_space<smem>>
    %839 = vector.extract_strided_slice %753 {offsets = [2, 0, 0], sizes = [1, 16, 16], strides = [1, 1, 1]} : vector<4x16x16xf32> to vector<1x16x16xf32>
    %840 = vector.shape_cast %839 : vector<1x16x16xf32> to vector<16x16xf32>
    %841 = vector.broadcast %838 : f32 to vector<16x16xf32>
    %842 = arith.mulf %841, %840 : vector<16x16xf32>
    %843 = arith.addf %837, %842 : vector<16x16xf32>
    %c140 = arith.constant 140 : index
    %844 = memref.load %arg2[%c140] : memref<144xf32, #tpu.memory_space<smem>>
    %845 = vector.extract_strided_slice %753 {offsets = [3, 0, 0], sizes = [1, 16, 16], strides = [1, 1, 1]} : vector<4x16x16xf32> to vector<1x16x16xf32>
    %846 = vector.shape_cast %845 : vector<1x16x16xf32> to vector<16x16xf32>
    %847 = vector.broadcast %844 : f32 to vector<16x16xf32>
    %848 = arith.mulf %847, %846 : vector<16x16xf32>
    %849 = arith.addf %843, %848 : vector<16x16xf32>
    %850 = vector.extract_strided_slice %644 {offsets = [2, 0], sizes = [16, 16], strides = [1, 1]} : vector<18x16xf32> to vector<16x16xf32>
    %cst_40 = arith.constant 1.000000e+00 : f32
    %851 = vector.broadcast %cst_40 : f32 to vector<16x16xf32>
    %852 = arith.mulf %851, %850 : vector<16x16xf32>
    %853 = arith.addf %752, %852 : vector<16x16xf32>
    %cst_41 = arith.constant 1.000000e+00 : f32
    %854 = vector.broadcast %cst_41 : f32 to vector<16x16xf32>
    %855 = arith.mulf %854, %850 : vector<16x16xf32>
    %856 = arith.addf %651, %855 : vector<16x16xf32>
    %857 = vector.extract_strided_slice %643 {offsets = [0, 2, 0], sizes = [4, 16, 16], strides = [1, 1, 1]} : vector<4x18x16xf32> to vector<4x16x16xf32>
    %c8 = arith.constant 8 : index
    %858 = memref.load %arg2[%c8] : memref<144xf32, #tpu.memory_space<smem>>
    %859 = vector.extract_strided_slice %857 {offsets = [0, 0, 0], sizes = [1, 16, 16], strides = [1, 1, 1]} : vector<4x16x16xf32> to vector<1x16x16xf32>
    %860 = vector.shape_cast %859 : vector<1x16x16xf32> to vector<16x16xf32>
    %861 = vector.broadcast %858 : f32 to vector<16x16xf32>
    %862 = arith.mulf %861, %860 : vector<16x16xf32>
    %863 = arith.addf %777, %862 : vector<16x16xf32>
    %c17 = arith.constant 17 : index
    %864 = memref.load %arg2[%c17] : memref<144xf32, #tpu.memory_space<smem>>
    %865 = vector.extract_strided_slice %857 {offsets = [1, 0, 0], sizes = [1, 16, 16], strides = [1, 1, 1]} : vector<4x16x16xf32> to vector<1x16x16xf32>
    %866 = vector.shape_cast %865 : vector<1x16x16xf32> to vector<16x16xf32>
    %867 = vector.broadcast %864 : f32 to vector<16x16xf32>
    %868 = arith.mulf %867, %866 : vector<16x16xf32>
    %869 = arith.addf %863, %868 : vector<16x16xf32>
    %c26 = arith.constant 26 : index
    %870 = memref.load %arg2[%c26] : memref<144xf32, #tpu.memory_space<smem>>
    %871 = vector.extract_strided_slice %857 {offsets = [2, 0, 0], sizes = [1, 16, 16], strides = [1, 1, 1]} : vector<4x16x16xf32> to vector<1x16x16xf32>
    %872 = vector.shape_cast %871 : vector<1x16x16xf32> to vector<16x16xf32>
    %873 = vector.broadcast %870 : f32 to vector<16x16xf32>
    %874 = arith.mulf %873, %872 : vector<16x16xf32>
    %875 = arith.addf %869, %874 : vector<16x16xf32>
    %c35 = arith.constant 35 : index
    %876 = memref.load %arg2[%c35] : memref<144xf32, #tpu.memory_space<smem>>
    %877 = vector.extract_strided_slice %857 {offsets = [3, 0, 0], sizes = [1, 16, 16], strides = [1, 1, 1]} : vector<4x16x16xf32> to vector<1x16x16xf32>
    %878 = vector.shape_cast %877 : vector<1x16x16xf32> to vector<16x16xf32>
    %879 = vector.broadcast %876 : f32 to vector<16x16xf32>
    %880 = arith.mulf %879, %878 : vector<16x16xf32>
    %881 = arith.addf %875, %880 : vector<16x16xf32>
    %c44 = arith.constant 44 : index
    %882 = memref.load %arg2[%c44] : memref<144xf32, #tpu.memory_space<smem>>
    %883 = vector.extract_strided_slice %857 {offsets = [0, 0, 0], sizes = [1, 16, 16], strides = [1, 1, 1]} : vector<4x16x16xf32> to vector<1x16x16xf32>
    %884 = vector.shape_cast %883 : vector<1x16x16xf32> to vector<16x16xf32>
    %885 = vector.broadcast %882 : f32 to vector<16x16xf32>
    %886 = arith.mulf %885, %884 : vector<16x16xf32>
    %887 = arith.addf %801, %886 : vector<16x16xf32>
    %c53 = arith.constant 53 : index
    %888 = memref.load %arg2[%c53] : memref<144xf32, #tpu.memory_space<smem>>
    %889 = vector.extract_strided_slice %857 {offsets = [1, 0, 0], sizes = [1, 16, 16], strides = [1, 1, 1]} : vector<4x16x16xf32> to vector<1x16x16xf32>
    %890 = vector.shape_cast %889 : vector<1x16x16xf32> to vector<16x16xf32>
    %891 = vector.broadcast %888 : f32 to vector<16x16xf32>
    %892 = arith.mulf %891, %890 : vector<16x16xf32>
    %893 = arith.addf %887, %892 : vector<16x16xf32>
    %c62 = arith.constant 62 : index
    %894 = memref.load %arg2[%c62] : memref<144xf32, #tpu.memory_space<smem>>
    %895 = vector.extract_strided_slice %857 {offsets = [2, 0, 0], sizes = [1, 16, 16], strides = [1, 1, 1]} : vector<4x16x16xf32> to vector<1x16x16xf32>
    %896 = vector.shape_cast %895 : vector<1x16x16xf32> to vector<16x16xf32>
    %897 = vector.broadcast %894 : f32 to vector<16x16xf32>
    %898 = arith.mulf %897, %896 : vector<16x16xf32>
    %899 = arith.addf %893, %898 : vector<16x16xf32>
    %c71 = arith.constant 71 : index
    %900 = memref.load %arg2[%c71] : memref<144xf32, #tpu.memory_space<smem>>
    %901 = vector.extract_strided_slice %857 {offsets = [3, 0, 0], sizes = [1, 16, 16], strides = [1, 1, 1]} : vector<4x16x16xf32> to vector<1x16x16xf32>
    %902 = vector.shape_cast %901 : vector<1x16x16xf32> to vector<16x16xf32>
    %903 = vector.broadcast %900 : f32 to vector<16x16xf32>
    %904 = arith.mulf %903, %902 : vector<16x16xf32>
    %905 = arith.addf %899, %904 : vector<16x16xf32>
    %c80 = arith.constant 80 : index
    %906 = memref.load %arg2[%c80] : memref<144xf32, #tpu.memory_space<smem>>
    %907 = vector.extract_strided_slice %857 {offsets = [0, 0, 0], sizes = [1, 16, 16], strides = [1, 1, 1]} : vector<4x16x16xf32> to vector<1x16x16xf32>
    %908 = vector.shape_cast %907 : vector<1x16x16xf32> to vector<16x16xf32>
    %909 = vector.broadcast %906 : f32 to vector<16x16xf32>
    %910 = arith.mulf %909, %908 : vector<16x16xf32>
    %911 = arith.addf %825, %910 : vector<16x16xf32>
    %c89 = arith.constant 89 : index
    %912 = memref.load %arg2[%c89] : memref<144xf32, #tpu.memory_space<smem>>
    %913 = vector.extract_strided_slice %857 {offsets = [1, 0, 0], sizes = [1, 16, 16], strides = [1, 1, 1]} : vector<4x16x16xf32> to vector<1x16x16xf32>
    %914 = vector.shape_cast %913 : vector<1x16x16xf32> to vector<16x16xf32>
    %915 = vector.broadcast %912 : f32 to vector<16x16xf32>
    %916 = arith.mulf %915, %914 : vector<16x16xf32>
    %917 = arith.addf %911, %916 : vector<16x16xf32>
    %c98 = arith.constant 98 : index
    %918 = memref.load %arg2[%c98] : memref<144xf32, #tpu.memory_space<smem>>
    %919 = vector.extract_strided_slice %857 {offsets = [2, 0, 0], sizes = [1, 16, 16], strides = [1, 1, 1]} : vector<4x16x16xf32> to vector<1x16x16xf32>
    %920 = vector.shape_cast %919 : vector<1x16x16xf32> to vector<16x16xf32>
    %921 = vector.broadcast %918 : f32 to vector<16x16xf32>
    %922 = arith.mulf %921, %920 : vector<16x16xf32>
    %923 = arith.addf %917, %922 : vector<16x16xf32>
    %c107 = arith.constant 107 : index
    %924 = memref.load %arg2[%c107] : memref<144xf32, #tpu.memory_space<smem>>
    %925 = vector.extract_strided_slice %857 {offsets = [3, 0, 0], sizes = [1, 16, 16], strides = [1, 1, 1]} : vector<4x16x16xf32> to vector<1x16x16xf32>
    %926 = vector.shape_cast %925 : vector<1x16x16xf32> to vector<16x16xf32>
    %927 = vector.broadcast %924 : f32 to vector<16x16xf32>
    %928 = arith.mulf %927, %926 : vector<16x16xf32>
    %929 = arith.addf %923, %928 : vector<16x16xf32>
    %c116 = arith.constant 116 : index
    %930 = memref.load %arg2[%c116] : memref<144xf32, #tpu.memory_space<smem>>
    %931 = vector.extract_strided_slice %857 {offsets = [0, 0, 0], sizes = [1, 16, 16], strides = [1, 1, 1]} : vector<4x16x16xf32> to vector<1x16x16xf32>
    %932 = vector.shape_cast %931 : vector<1x16x16xf32> to vector<16x16xf32>
    %933 = vector.broadcast %930 : f32 to vector<16x16xf32>
    %934 = arith.mulf %933, %932 : vector<16x16xf32>
    %935 = arith.addf %849, %934 : vector<16x16xf32>
    %c125 = arith.constant 125 : index
    %936 = memref.load %arg2[%c125] : memref<144xf32, #tpu.memory_space<smem>>
    %937 = vector.extract_strided_slice %857 {offsets = [1, 0, 0], sizes = [1, 16, 16], strides = [1, 1, 1]} : vector<4x16x16xf32> to vector<1x16x16xf32>
    %938 = vector.shape_cast %937 : vector<1x16x16xf32> to vector<16x16xf32>
    %939 = vector.broadcast %936 : f32 to vector<16x16xf32>
    %940 = arith.mulf %939, %938 : vector<16x16xf32>
    %941 = arith.addf %935, %940 : vector<16x16xf32>
    %c134 = arith.constant 134 : index
    %942 = memref.load %arg2[%c134] : memref<144xf32, #tpu.memory_space<smem>>
    %943 = vector.extract_strided_slice %857 {offsets = [2, 0, 0], sizes = [1, 16, 16], strides = [1, 1, 1]} : vector<4x16x16xf32> to vector<1x16x16xf32>
    %944 = vector.shape_cast %943 : vector<1x16x16xf32> to vector<16x16xf32>
    %945 = vector.broadcast %942 : f32 to vector<16x16xf32>
    %946 = arith.mulf %945, %944 : vector<16x16xf32>
    %947 = arith.addf %941, %946 : vector<16x16xf32>
    %c143 = arith.constant 143 : index
    %948 = memref.load %arg2[%c143] : memref<144xf32, #tpu.memory_space<smem>>
    %949 = vector.extract_strided_slice %857 {offsets = [3, 0, 0], sizes = [1, 16, 16], strides = [1, 1, 1]} : vector<4x16x16xf32> to vector<1x16x16xf32>
    %950 = vector.shape_cast %949 : vector<1x16x16xf32> to vector<16x16xf32>
    %951 = vector.broadcast %948 : f32 to vector<16x16xf32>
    %952 = arith.mulf %951, %950 : vector<16x16xf32>
    %953 = arith.addf %947, %952 : vector<16x16xf32>
    %954 = arith.mulf %853, %853 : vector<16x16xf32>
    %955 = arith.mulf %856, %856 : vector<16x16xf32>
    %956 = arith.addf %954, %955 : vector<16x16xf32>
    %cst_42 = arith.constant 9.99999997E-7 : f32
    %cst_43 = arith.constant 5.000000e+01 : f32
    %957 = vector.broadcast %cst_42 : f32 to vector<16x16xf32>
    %958 = arith.maximumf %957, %956 : vector<16x16xf32>
    %959 = vector.broadcast %cst_43 : f32 to vector<16x16xf32>
    %960 = arith.minimumf %959, %958 : vector<16x16xf32>
    %961 = math.sqrt %960 : vector<16x16xf32>
    %962 = arith.negf %961 : vector<16x16xf32>
    %963 = math.exp %962 : vector<16x16xf32>
    %cst_44 = arith.constant 1.000000e+00 : f32
    %964 = vector.broadcast %cst_44 : f32 to vector<16x16xf32>
    %965 = arith.addf %964, %963 : vector<16x16xf32>
    %966 = arith.divf %964, %965 : vector<16x16xf32>
    %cst_45 = arith.constant 2.000000e-01 : f32
    %cst_46 = arith.constant 8.000000e-01 : f32
    %967 = vector.broadcast %cst_45 : f32 to vector<16x16xf32>
    %968 = arith.maximumf %967, %966 : vector<16x16xf32>
    %969 = vector.broadcast %cst_46 : f32 to vector<16x16xf32>
    %970 = arith.minimumf %969, %968 : vector<16x16xf32>
    %c0_47 = arith.constant 0 : index
    %971 = memref.load %arg3[%c0_47] : memref<4xf32, #tpu.memory_space<smem>>
    %972 = vector.broadcast %971 : f32 to vector<16x16xf32>
    %973 = arith.addf %881, %972 : vector<16x16xf32>
    %cst_48 = arith.constant 0.000000e+00 : f32
    %974 = vector.broadcast %cst_48 : f32 to vector<16x16xf32>
    %975 = arith.maximumf %973, %974 : vector<16x16xf32>
    %976 = vector.extract_strided_slice %1 {offsets = [0, 0, 0], sizes = [1, 16, 16], strides = [1, 1, 1]} : vector<4x16x16xf32> to vector<1x16x16xf32>
    %977 = vector.shape_cast %976 : vector<1x16x16xf32> to vector<16x16xf32>
    %978 = arith.mulf %975, %970 : vector<16x16xf32>
    %979 = arith.addf %977, %978 : vector<16x16xf32>
    %c0_49 = arith.constant 0 : index
    %c0_50 = arith.constant 0 : index
    %c0_51 = arith.constant 0 : index
    %c0_52 = arith.constant 0 : index
    %980 = vector.load %arg4[%c0_49, %c0_50, %c0_51, %c0_52] : memref<1x4x16x16xf32, #tpu.memory_space<vmem>>, vector<1x1x16x16xf32>
    %981 = vector.shape_cast %980 : vector<1x1x16x16xf32> to vector<16x16xf32>
    %982 = vector.shape_cast %979 : vector<16x16xf32> to vector<1x1x16x16xf32>
    tpu.vector_store %arg4[%c0_49, %c0_50, %c0_51, %c0_52], %982 {strides = array<i32>} : memref<1x4x16x16xf32, #tpu.memory_space<vmem>>, vector<1x1x16x16xf32>,
    %c1_53 = arith.constant 1 : index
    %983 = memref.load %arg3[%c1_53] : memref<4xf32, #tpu.memory_space<smem>>
    %984 = vector.broadcast %983 : f32 to vector<16x16xf32>
    %985 = arith.addf %905, %984 : vector<16x16xf32>
    %cst_54 = arith.constant 0.000000e+00 : f32
    %986 = vector.broadcast %cst_54 : f32 to vector<16x16xf32>
    %987 = arith.maximumf %985, %986 : vector<16x16xf32>
    %988 = vector.extract_strided_slice %1 {offsets = [1, 0, 0], sizes = [1, 16, 16], strides = [1, 1, 1]} : vector<4x16x16xf32> to vector<1x16x16xf32>
    %989 = vector.shape_cast %988 : vector<1x16x16xf32> to vector<16x16xf32>
    %990 = arith.mulf %987, %970 : vector<16x16xf32>
    %991 = arith.addf %989, %990 : vector<16x16xf32>
    %c0_55 = arith.constant 0 : index
    %c1_56 = arith.constant 1 : index
    %c0_57 = arith.constant 0 : index
    %c0_58 = arith.constant 0 : index
    %992 = vector.load %arg4[%c0_55, %c1_56, %c0_57, %c0_58] : memref<1x4x16x16xf32, #tpu.memory_space<vmem>>, vector<1x1x16x16xf32>
    %993 = vector.shape_cast %992 : vector<1x1x16x16xf32> to vector<16x16xf32>
    %994 = vector.shape_cast %991 : vector<16x16xf32> to vector<1x1x16x16xf32>
    tpu.vector_store %arg4[%c0_55, %c1_56, %c0_57, %c0_58], %994 {strides = array<i32>} : memref<1x4x16x16xf32, #tpu.memory_space<vmem>>, vector<1x1x16x16xf32>,
    %c2_59 = arith.constant 2 : index
    %995 = memref.load %arg3[%c2_59] : memref<4xf32, #tpu.memory_space<smem>>
    %996 = vector.broadcast %995 : f32 to vector<16x16xf32>
    %997 = arith.addf %929, %996 : vector<16x16xf32>
    %cst_60 = arith.constant 0.000000e+00 : f32
    %998 = vector.broadcast %cst_60 : f32 to vector<16x16xf32>
    %999 = arith.maximumf %997, %998 : vector<16x16xf32>
    %1000 = vector.extract_strided_slice %1 {offsets = [2, 0, 0], sizes = [1, 16, 16], strides = [1, 1, 1]} : vector<4x16x16xf32> to vector<1x16x16xf32>
    %1001 = vector.shape_cast %1000 : vector<1x16x16xf32> to vector<16x16xf32>
    %1002 = arith.mulf %999, %970 : vector<16x16xf32>
    %1003 = arith.addf %1001, %1002 : vector<16x16xf32>
    %c0_61 = arith.constant 0 : index
    %c2_62 = arith.constant 2 : index
    %c0_63 = arith.constant 0 : index
    %c0_64 = arith.constant 0 : index
    %1004 = vector.load %arg4[%c0_61, %c2_62, %c0_63, %c0_64] : memref<1x4x16x16xf32, #tpu.memory_space<vmem>>, vector<1x1x16x16xf32>
    %1005 = vector.shape_cast %1004 : vector<1x1x16x16xf32> to vector<16x16xf32>
    %1006 = vector.shape_cast %1003 : vector<16x16xf32> to vector<1x1x16x16xf32>
    tpu.vector_store %arg4[%c0_61, %c2_62, %c0_63, %c0_64], %1006 {strides = array<i32>} : memref<1x4x16x16xf32, #tpu.memory_space<vmem>>, vector<1x1x16x16xf32>,
    %c3_65 = arith.constant 3 : index
    %1007 = memref.load %arg3[%c3_65] : memref<4xf32, #tpu.memory_space<smem>>
    %1008 = vector.broadcast %1007 : f32 to vector<16x16xf32>
    %1009 = arith.addf %953, %1008 : vector<16x16xf32>
    %cst_66 = arith.constant 0.000000e+00 : f32
    %1010 = vector.broadcast %cst_66 : f32 to vector<16x16xf32>
    %1011 = arith.maximumf %1009, %1010 : vector<16x16xf32>
    %1012 = vector.extract_strided_slice %1 {offsets = [3, 0, 0], sizes = [1, 16, 16], strides = [1, 1, 1]} : vector<4x16x16xf32> to vector<1x16x16xf32>
    %1013 = vector.shape_cast %1012 : vector<1x16x16xf32> to vector<16x16xf32>
    %1014 = arith.mulf %1011, %970 : vector<16x16xf32>
    %1015 = arith.addf %1013, %1014 : vector<16x16xf32>
    %c0_67 = arith.constant 0 : index
    %c3_68 = arith.constant 3 : index
    %c0_69 = arith.constant 0 : index
    %c0_70 = arith.constant 0 : index
    %1016 = vector.load %arg4[%c0_67, %c3_68, %c0_69, %c0_70] : memref<1x4x16x16xf32, #tpu.memory_space<vmem>>, vector<1x1x16x16xf32>
    %1017 = vector.shape_cast %1016 : vector<1x1x16x16xf32> to vector<16x16xf32>
    %1018 = vector.shape_cast %1015 : vector<16x16xf32> to vector<1x1x16x16xf32>
    tpu.vector_store %arg4[%c0_67, %c3_68, %c0_69, %c0_70], %1018 {strides = array<i32>} : memref<1x4x16x16xf32, #tpu.memory_space<vmem>>, vector<1x1x16x16xf32>,
    return
  }
  func.func @transform_0(%arg0: i32) -> (i32, i32, i32, i32) {
    %c0_i32 = arith.constant 0 : i32
    %c0_i32_0 = arith.constant 0 : i32
    %c0_i32_1 = arith.constant 0 : i32
    %c0_i32_2 = arith.constant 0 : i32
    return %arg0, %c0_i32, %c0_i32_0, %c0_i32_1 : i32, i32, i32, i32
  }
  func.func @transform_1(%arg0: i32) -> i32 {
    %c0_i32 = arith.constant 0 : i32
    %c0_i32_0 = arith.constant 0 : i32
    return %c0_i32 : i32
  }
  func.func @transform_2(%arg0: i32) -> i32 {
    %c0_i32 = arith.constant 0 : i32
    %c0_i32_0 = arith.constant 0 : i32
    return %c0_i32 : i32
  }
  func.func @transform_3(%arg0: i32) -> (i32, i32, i32, i32) {
    %c0_i32 = arith.constant 0 : i32
    %c0_i32_0 = arith.constant 0 : i32
    %c0_i32_1 = arith.constant 0 : i32
    %c0_i32_2 = arith.constant 0 : i32
    return %arg0, %c0_i32, %c0_i32_0, %c0_i32_1 : i32, i32, i32, i32
  }
  func.func @transform_4(%arg0: i32) -> (i32, i32, i32) {
    %c0_i32 = arith.constant 0 : i32
    %c0_i32_0 = arith.constant 0 : i32
    %c0_i32_1 = arith.constant 0 : i32
    return %arg0, %c0_i32, %c0_i32_0 : i32, i32, i32
  }
}

</mosaic_0001>

<llo_original>
// kernel: edge_enhance_forward.1
$region0: #{edge_enhance_forward.1}
  #allocation0 [shape = 'u32[]', space=smem, size = 0x4, offset = 0x4, fixed_abs, tag = 'smem constant byte address 0x4 - core index']
  #allocation1 [shape = 'u32[72,128]{1,0:T(1,128)}', space=vmem, size = 0x9000, scoped, tag = 'internal scratch']
  #allocation2 [shape = 'f32[4,18,18]{2,1,0:T(8,128)}', space=vmem, size = 0xc000, scoped, tag = 'scratch operand']
  %s0 = inlined_call_operand.vmem [shape: f32[2,4,16,16], index: 0, kind: input, shape index: {}]
  %s1 = inlined_call_operand.vmem [shape: f32[144], index: 1, kind: input, shape index: {}]
  %s2 = inlined_call_operand.vmem [shape: f32[4], index: 2, kind: input, shape index: {}]
  %s3 = inlined_call_operand.vmem [shape: f32[2,4,16,16], index: 3, kind: output, shape index: {0}]
  %s4 = inlined_call_operand.vmem [shape: f32[2,8,128], index: 4, kind: output, shape index: {1}]
  %5 = xla_tuple %s3, %s4
  %s6 = sld [smem:[#allocation0]]
  $region61: #{edge_enhance_forward.1} parent=0
    _
  %s8 = ssub.s32 1, %s6
  %s9 = scalar_select 0, %s8, %s6
  $region1: #{edge_enhance_forward.1} parent=0
    #allocation3 [shape = 'u8[1024]{0}', space=smem, size = 0x400, scoped, tag = 'input window, operand 1, single buffered']
    #allocation4 [shape = 's32[2]{0}', space=sflag, size = 0x8, scoped, tag = 'scoped memory for edge_enhance_forward.1']
    #allocation5 [shape = 'u8[512]{0}', space=smem, size = 0x200, scoped, tag = 'input window, operand 2, single buffered']
    #allocation6 [shape = 's32[1]{0}', space=sflag, size = 0x4, scoped, tag = 'scoped memory for edge_enhance_forward.1']
    %10 = vsyncpa [#allocation4], 0
    %11 = vsyncpa [#allocation6], 0
    loop: start=0, step=1, limit=4
    $region2: #{edge_enhance_forward.1} parent=1 // loop_pre_header
      _
    $region3: #{edge_enhance_forward.1} parent=1 // loop_header
      %s13 = sphi 0, %s17
      %p14 = scmp.ge.s32.totalorder %s13, 4
      %s23 = sphi 0, %s25
      %s26 = sphi 0, %s23
      %s27 = sphi 0, %s26
      %s43 = sphi 0, %s27
      %s47 = sphi 0, %s47
      %s49 = sphi 0, %s47
      %s50 = sphi 0, %s49
      %s64 = sphi 0, %s50
      %s68 = sphi 0, %s68
      %s70 = sphi 0, %s68
      %s71 = sphi 0, %s70
      %s85 = sphi 0, %s71
      %s91 = sphi 0, %s93
      %s94 = sphi 0, %s91
      %s95 = sphi 0, %s94
      %s111 = sphi 0, %s95
      %s117 = sphi 0, %s119
      %s120 = sphi 0, %s117
      %s121 = sphi 0, %s120
      %s137 = sphi 0, %s121
    $region4: #{edge_enhance_forward.1} parent=1 // loop_header_branch
      %16 = sbr.rel (%p14) target = $region8
    $region5: #{edge_enhance_forward.1} parent=1 // loop_body
      %s18 = ssub.s32 %s13, 1
      %s19 = ssub.s32 %s13, 2
      %s20 = sadd.s32 %s13, 1
      %s21 = ssub.s32 %s13, %s20
      %p22 = scmp.eq.s32.totalorder %s21, 0
      %s24 = sadd.s32 %s23, 1
      %s25 = scalar_select %p22, %s23, %s24
      %p28 = pneg %p22
      %p29 = scmp.eq.s32.totalorder %s13, 1
      %p30 = por %p28, %p29
      %p31 = scmp.ne.s32.totalorder %s23, %s26
      %p32 = scmp.eq.s32.totalorder %s13, 0
      %p33 = por %p31, %p32
      %p34 = scmp.ne.s32.totalorder %s23, %s26
      %p35 = scmp.eq.s32.totalorder %s18, 1
      %p36 = por %p34, %p35
      %p37 = scmp.ne.s32.totalorder %s26, %s27
      %p38 = scmp.eq.s32.totalorder %s18, 0
      %p39 = por %p37, %p38
      %p40 = scmp.ne.s32.totalorder %s26, %s27
      %p41 = scmp.eq.s32.totalorder %s19, 1
      %p42 = por %p40, %p41
      %p44 = scmp.ne.s32.totalorder %s27, %s43
      %p45 = scmp.eq.s32.totalorder %s19, 0
      %p46 = por %p44, %p45
      %s48 = sadd.s32 %s47, 1
      %p51 = scmp.eq.s32.totalorder %s13, 1
      %p52 = scmp.ne.s32.totalorder %s47, %s49
      %p53 = scmp.eq.s32.totalorder %s13, 0
      %p54 = por %p52, %p53
      %p55 = scmp.ne.s32.totalorder %s47, %s49
      %p56 = scmp.eq.s32.totalorder %s18, 1
      %p57 = por %p55, %p56
      %p58 = scmp.ne.s32.totalorder %s49, %s50
      %p59 = scmp.eq.s32.totalorder %s18, 0
      %p60 = por %p58, %p59
      %p61 = scmp.ne.s32.totalorder %s49, %s50
      %p62 = scmp.eq.s32.totalorder %s19, 1
      %p63 = por %p61, %p62
      %p65 = scmp.ne.s32.totalorder %s50, %s64
      %p66 = scmp.eq.s32.totalorder %s19, 0
      %p67 = por %p65, %p66
      %s69 = sadd.s32 %s68, 1
      %p72 = scmp.eq.s32.totalorder %s13, 1
      %p73 = scmp.ne.s32.totalorder %s68, %s70
      %p74 = scmp.eq.s32.totalorder %s13, 0
      %p75 = por %p73, %p74
      %p76 = scmp.ne.s32.totalorder %s68, %s70
      %p77 = scmp.eq.s32.totalorder %s18, 1
      %p78 = por %p76, %p77
      %p79 = scmp.ne.s32.totalorder %s70, %s71
      %p80 = scmp.eq.s32.totalorder %s18, 0
      %p81 = por %p79, %p80
      %p82 = scmp.ne.s32.totalorder %s70, %s71
      %p83 = scmp.eq.s32.totalorder %s19, 1
      %p84 = por %p82, %p83
      %p86 = scmp.ne.s32.totalorder %s71, %s85
      %p87 = scmp.eq.s32.totalorder %s19, 0
      %p88 = por %p86, %p87
      %s89 = ssub.s32 %s13, %s20
      %p90 = scmp.eq.s32.totalorder %s89, 0
      %s92 = sadd.s32 %s91, 1
      %s93 = scalar_select %p90, %s91, %s92
      %p96 = pneg %p90
      %p97 = scmp.eq.s32.totalorder %s13, 1
      %p98 = por %p96, %p97
      %p99 = scmp.ne.s32.totalorder %s91, %s94
      %p100 = scmp.eq.s32.totalorder %s13, 0
      %p101 = por %p99, %p100
      %p102 = scmp.ne.s32.totalorder %s91, %s94
      %p103 = scmp.eq.s32.totalorder %s18, 1
      %p104 = por %p102, %p103
      %p105 = scmp.ne.s32.totalorder %s94, %s95
      %p106 = scmp.eq.s32.totalorder %s18, 0
      %p107 = por %p105, %p106
      %p108 = scmp.ne.s32.totalorder %s94, %s95
      %p109 = scmp.eq.s32.totalorder %s19, 1
      %p110 = por %p108, %p109
      %p112 = scmp.ne.s32.totalorder %s95, %s111
      %p113 = scmp.eq.s32.totalorder %s19, 0
      %p114 = por %p112, %p113
      %s115 = ssub.s32 %s13, %s20
      %p116 = scmp.eq.s32.totalorder %s115, 0
      %s118 = sadd.s32 %s117, 1
      %s119 = scalar_select %p116, %s117, %s118
      %p122 = pneg %p116
      %p123 = scmp.eq.s32.totalorder %s13, 1
      %p124 = por %p122, %p123
      %p125 = scmp.ne.s32.totalorder %s117, %s120
      %p126 = scmp.eq.s32.totalorder %s13, 0
      %p127 = por %p125, %p126
      %p128 = scmp.ne.s32.totalorder %s117, %s120
      %p129 = scmp.eq.s32.totalorder %s18, 1
      %p130 = por %p128, %p129
      %p131 = scmp.ne.s32.totalorder %s120, %s121
      %p132 = scmp.eq.s32.totalorder %s18, 0
      %p133 = por %p131, %p132
      %p134 = scmp.ne.s32.totalorder %s120, %s121
      %p135 = scmp.eq.s32.totalorder %s19, 1
      %p136 = por %p134, %p135
      %p138 = scmp.ne.s32.totalorder %s121, %s137
      %p139 = scmp.eq.s32.totalorder %s19, 0
      %p140 = por %p138, %p139
      %p141 = scmp.le.s32.totalorder 1, %s13
      %p142 = scmp.lt.s32.totalorder %s13, 3
      %p143 = pnand %p141, %p142
      %p144 = pneg %p143
      // Predicated region
      $region9: #{edge_enhance_forward.1} parent=5 // pred_check
        _
      $region10: #{edge_enhance_forward.1} parent=5 // pred_check_branch
        %146 = sbr.rel (%p143) target = $region12
      $region11: #{edge_enhance_forward.1} parent=5 // pred_region
        %s147 = ssub.s32 %s13, 1
        // Predicated region
        $region13: #{edge_enhance_forward.1} parent=11 // pred_check
          %p148 = pneg %p60
        $region14: #{edge_enhance_forward.1} parent=11 // pred_check_branch
          %150 = sbr.rel (%p148) target = $region16
        $region15: #{edge_enhance_forward.1} parent=11 // pred_region
          %152 = vsyncadd [#allocation4], 0
          %s154 = sshll.u32 %s1, 4
          %s155 = int_to_ptr.vmem [resolvable:$true] %s154
          %157 = dma.vmem_to_smem %s155, 32, [#allocation3], [#allocation4]
        $region16: #{edge_enhance_forward.1} parent=11 // pred_fallthru
          _
        // Predicated region
        $region17: #{edge_enhance_forward.1} parent=11 // pred_check
          %p158 = pneg %p81
        $region18: #{edge_enhance_forward.1} parent=11 // pred_check_branch
          %160 = sbr.rel (%p158) target = $region20
        $region19: #{edge_enhance_forward.1} parent=11 // pred_region
          %162 = vsyncadd [#allocation6], 0
          %s164 = sshll.u32 %s2, 4
          %s165 = int_to_ptr.vmem [resolvable:$true] %s164
          %167 = dma.vmem_to_smem %s165, 16, [#allocation5], [#allocation6]
        $region20: #{edge_enhance_forward.1} parent=11 // pred_fallthru
          _
      $region12: #{edge_enhance_forward.1} parent=5 // pred_fallthru
        _
      %p168 = scmp.lt.s32.totalorder %s13, 2
      // Predicated region
      $region21: #{edge_enhance_forward.1} parent=5 // pred_check
        %p169 = pneg %p168
      $region22: #{edge_enhance_forward.1} parent=5 // pred_check_branch
        %171 = sbr.rel (%p169) target = $region24
      $region23: #{edge_enhance_forward.1} parent=5 // pred_region
        // Predicated region
        $region25: #{edge_enhance_forward.1} parent=23 // pred_check
          %p172 = pneg %p33
        $region26: #{edge_enhance_forward.1} parent=23 // pred_check_branch
          %174 = sbr.rel (%p172) target = $region28
        $region27: #{edge_enhance_forward.1} parent=23 // pred_region
          %p175 = scmp.lt.s32.totalorder %s13, 1
          %s176 = scalar_select %p175, %s13, 1
          %s177 = smul.addr %s176, 8
          %s178 = smul.addr %s177, 8
          %s179 = scalar_lea.vmem %s0, %s178
        $region28: #{edge_enhance_forward.1} parent=23 // pred_fallthru
          _
      $region24: #{edge_enhance_forward.1} parent=5 // pred_fallthru
        _
      %p180 = scmp.le.s32.totalorder 1, %s13
      %p181 = scmp.lt.s32.totalorder %s13, 3
      %p182 = pnand %p180, %p181
      %p183 = pneg %p182
      // Predicated region
      $region29: #{edge_enhance_forward.1} parent=5 // pred_check
        _
      $region30: #{edge_enhance_forward.1} parent=5 // pred_check_branch
        %185 = sbr.rel (%p182) target = $region32
      $region31: #{edge_enhance_forward.1} parent=5 // pred_region
        %s186 = ssub.s32 %s13, 1
        // Predicated region
        $region33: #{edge_enhance_forward.1} parent=31 // pred_check
          %p187 = pneg %p60
        $region34: #{edge_enhance_forward.1} parent=31 // pred_check_branch
          %189 = sbr.rel (%p187) target = $region36
        $region35: #{edge_enhance_forward.1} parent=31 // pred_region
          %191 = dma.done [#allocation4], 32
        $region36: #{edge_enhance_forward.1} parent=31 // pred_fallthru
          _
        // Predicated region
        $region37: #{edge_enhance_forward.1} parent=31 // pred_check
          %p192 = pneg %p81
        $region38: #{edge_enhance_forward.1} parent=31 // pred_check_branch
          %194 = sbr.rel (%p192) target = $region40
        $region39: #{edge_enhance_forward.1} parent=31 // pred_region
          %196 = dma.done [#allocation6], 16
        $region40: #{edge_enhance_forward.1} parent=31 // pred_fallthru
          _
        %197 = sfence
        %p198 = scmp.lt.s32.totalorder %s18, 1
        %s199 = scalar_select %p198, %s18, 1
        %s200 = smul.addr %s199, 8
        %s201 = smul.addr %s200, 8
        %s202 = scalar_lea.vmem %s0, %s201
        %p203 = pneg %p39
        %p204 = pneg %p36
        %p205 = pneg %p60
        %p206 = pneg %p57
        %p207 = pneg %p81
        %p208 = pneg %p78
        %p209 = pneg %p107
        %p210 = pneg %p104
        %p211 = scmp.lt.s32.totalorder %s18, 1
        %s212 = scalar_select %p211, %s18, 1
        %s213 = smul.addr %s212, 8
        %s214 = smul.addr %s213, 8
        %s215 = scalar_lea.vmem %s3, %s214
        %p216 = pneg %p133
        %p217 = pneg %p130
        %p218 = scmp.lt.s32.totalorder %s18, 1
        %s219 = scalar_select %p218, %s18, 1
        %s220 = smul.addr %s219, 8
        %s221 = scalar_lea.vmem %s4, %s220
        %p222 = scmp.lt.s32.totalorder %s18, 1
        %s223 = scalar_select %p222, %s18, 1
        %s224 = smul.addr %s223, 8
        %s225 = smul.addr %s224, 8
        %s226 = scalar_lea.vmem %s0, %s225
        %p227 = scmp.lt.s32.totalorder %s18, 1
        %s228 = scalar_select %p227, %s18, 1
        %s229 = smul.addr %s228, 8
        %s230 = smul.addr %s229, 8
        %s231 = scalar_lea.vmem %s3, %s230
        %p232 = scmp.lt.s32.totalorder %s18, 1
        %s233 = scalar_select %p232, %s18, 1
        %s234 = smul.addr %s233, 8
        %s235 = scalar_lea.vmem %s4, %s234
        %v236 = vld [vmem:[%s226] sm:$0xff]
        %v237 = vld [vmem:[%s226 + $0x8] sm:$0xff]
        %v238 = vld [vmem:[%s226 + $0x10] sm:$0xff]
        %v239 = vld [vmem:[%s226 + $0x18] sm:$0xff]
        %v240 = vld [vmem:[%s226 + $0x20] sm:$0xff]
        %v241 = vld [vmem:[%s226 + $0x28] sm:$0xff]
        %v242 = vld [vmem:[%s226 + $0x30] sm:$0xff]
        %v243 = vld [vmem:[%s226 + $0x38] sm:$0xff]
        %v244 = vand.u32 2147483647, %v236
        %v245 = vand.u32 2147483647, %v237
        %v246 = vand.u32 2147483647, %v238
        %v247 = vand.u32 2147483647, %v239
        %v248 = vand.u32 2147483647, %v240
        %v249 = vand.u32 2147483647, %v241
        %v250 = vand.u32 2147483647, %v242
        %v251 = vand.u32 2147483647, %v243
        %vm252 = vcmp.le.f32.partialorder %v244, 3.4028235e+38
        %vm253 = vcmp.le.f32.partialorder %v245, 3.4028235e+38
        %vm254 = vcmp.le.f32.partialorder %v246, 3.4028235e+38
        %vm255 = vcmp.le.f32.partialorder %v247, 3.4028235e+38
        %vm256 = vcmp.le.f32.partialorder %v248, 3.4028235e+38
        %vm257 = vcmp.le.f32.partialorder %v249, 3.4028235e+38
        %vm258 = vcmp.le.f32.partialorder %v250, 3.4028235e+38
        %vm259 = vcmp.le.f32.partialorder %v251, 3.4028235e+38
        %v260 = vsel %vm252, 0.0, 1.0
        %v261 = vsel %vm253, 0.0, 1.0
        %v262 = vsel %vm254, 0.0, 1.0
        %v263 = vsel %vm255, 0.0, 1.0
        %v264 = vsel %vm256, 0.0, 1.0
        %v265 = vsel %vm257, 0.0, 1.0
        %v266 = vsel %vm258, 0.0, 1.0
        %v267 = vsel %vm259, 0.0, 1.0
        %vm268 = vcmask 130048
        %v269 = vsel %vm268, %v260, 0.0
        %v270 = vsel %vm268, %v261, 0.0
        %v271 = vadd.f32 %v269, %v270
        %v272 = vsel %vm268, %v262, 0.0
        %v273 = vadd.f32 %v271, %v272
        %v274 = vsel %vm268, %v263, 0.0
        %v275 = vadd.f32 %v273, %v274
        %v276 = vsel %vm268, %v264, 0.0
        %v277 = vadd.f32 %v275, %v276
        %v278 = vsel %vm268, %v265, 0.0
        %v279 = vadd.f32 %v277, %v278
        %v280 = vsel %vm268, %v266, 0.0
        %v281 = vadd.f32 %v279, %v280
        %v282 = vsel %vm268, %v267, 0.0
        %v283 = vadd.f32 %v281, %v282
        %284 = vadd.xlane.f32.xlu0 %v283
        %v285 = vpop.xlane.xlu0 %284
        %v286 = vrot.slane %v285, 4
        %v287 = vadd.f32 %v285, %v286
        %v288 = vrot.slane %v287, 2
        %v289 = vadd.f32 %v287, %v288
        %v290 = vrot.slane %v289, 1
        %v291 = vadd.f32 %v289, %v290
        %s292 = vtos %v291
        %v293 = vstv %s292
        %294 = vst [vmem:[%s235] sm:$0xff] %v293
        %vm295 = vcmask 146432
        %296 = vst.msk [vmem:[#allocation2] sm:$0xff] %vm295, 0.0
        %297 = vst.msk [vmem:[#allocation2 + $0x8] sm:$0xff] %vm295, 0.0
        %vm298 = vcmask 140288
        %299 = vst.msk [vmem:[#allocation2 + $0x10] sm:$0x3] %vm298, 0.0
        %300 = vst.msk [vmem:[#allocation2 + $0x18] sm:$0xff] %vm295, 0.0
        %301 = vst.msk [vmem:[#allocation2 + $0x20] sm:$0xff] %vm295, 0.0
        %302 = vst.msk [vmem:[#allocation2 + $0x28] sm:$0x3] %vm298, 0.0
        %303 = vst.msk [vmem:[#allocation2 + $0x30] sm:$0xff] %vm295, 0.0
        %304 = vst.msk [vmem:[#allocation2 + $0x38] sm:$0xff] %vm295, 0.0
        %305 = vst.msk [vmem:[#allocation2 + $0x40] sm:$0x3] %vm298, 0.0
        %306 = vst.msk [vmem:[#allocation2 + $0x48] sm:$0xff] %vm295, 0.0
        %307 = vst.msk [vmem:[#allocation2 + $0x50] sm:$0xff] %vm295, 0.0
        %308 = vst.msk [vmem:[#allocation2 + $0x58] sm:$0x3] %vm298, 0.0
        %317 = vrot.lane.b32.xlu0 %v236, 1
        %v318 = vpop.permute.xlu0 %317
        %319 = vrot.lane.b32.xlu0 %v237, 1
        %v320 = vpop.permute.xlu0 %319
        %321 = vrot.lane.b32.xlu0 %v238, 1
        %v322 = vpop.permute.xlu0 %321
        %323 = vrot.lane.b32.xlu0 %v239, 1
        %v324 = vpop.permute.xlu0 %323
        %325 = vrot.lane.b32.xlu0 %v240, 1
        %v326 = vpop.permute.xlu0 %325
        %327 = vrot.lane.b32.xlu0 %v241, 1
        %v328 = vpop.permute.xlu0 %327
        %329 = vrot.lane.b32.xlu0 %v242, 1
        %v330 = vpop.permute.xlu0 %329
        %331 = vrot.lane.b32.xlu0 %v243, 1
        %v332 = vpop.permute.xlu0 %331
        %vm341 = vcmask 138248
        %342 = vst.msk [vmem:[#allocation2 + $0x1] sm:$0xff] %vm341, %v318
        %343 = vst.msk [vmem:[#allocation2 + $0x9] sm:$0xff] %vm341, %v320
        %344 = vst.msk [vmem:[#allocation2 + $0x19] sm:$0xff] %vm341, %v322
        %345 = vst.msk [vmem:[#allocation2 + $0x21] sm:$0xff] %vm341, %v324
        %346 = vst.msk [vmem:[#allocation2 + $0x31] sm:$0xff] %vm341, %v326
        %347 = vst.msk [vmem:[#allocation2 + $0x39] sm:$0xff] %vm341, %v328
        %348 = vst.msk [vmem:[#allocation2 + $0x49] sm:$0xff] %vm341, %v330
        %349 = vst.msk [vmem:[#allocation2 + $0x51] sm:$0xff] %vm341, %v332
        %v350 = vld [vmem:[#allocation2] sm:$0xff]
        %v351 = vld [vmem:[#allocation2 + $0x8] sm:$0xff]
        %v352 = vld [vmem:[#allocation2 + $0x10] sm:$0x3]
        %v353 = vld [vmem:[#allocation2 + $0x18] sm:$0xff]
        %v354 = vld [vmem:[#allocation2 + $0x20] sm:$0xff]
        %v355 = vld [vmem:[#allocation2 + $0x28] sm:$0x3]
        %v356 = vld [vmem:[#allocation2 + $0x30] sm:$0xff]
        %v357 = vld [vmem:[#allocation2 + $0x38] sm:$0xff]
        %v358 = vld [vmem:[#allocation2 + $0x40] sm:$0x3]
        %v359 = vld [vmem:[#allocation2 + $0x48] sm:$0xff]
        %v360 = vld [vmem:[#allocation2 + $0x50] sm:$0xff]
        %v361 = vld [vmem:[#allocation2 + $0x58] sm:$0x3]
        %v362 = vsel %vm295, %v350, 0.0
        %v363 = vsel %vm295, %v353, 0.0
        %v364 = vadd.f32 %v362, %v363
        %v365 = vsel %vm295, %v356, 0.0
        %v366 = vadd.f32 %v364, %v365
        %v367 = vsel %vm295, %v359, 0.0
        %v368 = vadd.f32 %v366, %v367
        %v369 = vsel %vm295, %v351, 0.0
        %v370 = vsel %vm295, %v354, 0.0
        %v371 = vadd.f32 %v369, %v370
        %v372 = vsel %vm295, %v357, 0.0
        %v373 = vadd.f32 %v371, %v372
        %v374 = vsel %vm295, %v360, 0.0
        %v375 = vadd.f32 %v373, %v374
        %v376 = vsel %vm298, %v352, 0.0
        %v377 = vsel %vm298, %v355, 0.0
        %v378 = vadd.f32 %v376, %v377
        %v379 = vsel %vm298, %v358, 0.0
        %v380 = vadd.f32 %v378, %v379
        %v381 = vsel %vm298, %v361, 0.0
        %v382 = vadd.f32 %v380, %v381
        %v383 = vrcp.pop 4.0
        %v384 = vmul.f32 4.0, %v383
        %v385 = vsub.f32 1.0, %v384
        %v386 = vmul.f32 %v383, %v385
        %v387 = vadd.f32 %v383, %v386
        %vm388 = vweird.f32 %v383
        %v389 = vsel %vm388, %v383, %v387
        %v390 = vmul.f32 %v368, %v389
        %v391 = vmul.f32 %v375, %v389
        %v392 = vmul.f32 %v382, %v389
        %v393 = vmax.f32 %v390, -10.0
        %v394 = vmax.f32 %v391, -10.0
        %v395 = vmax.f32 %v392, -10.0
        %v396 = vmin.f32 %v393, 10.0
        %v397 = vmin.f32 %v394, 10.0
        %v398 = vmin.f32 %v395, 10.0
        %v399 = vmul.f32 %v396, -1.0
        %v400 = vmul.f32 %v397, -1.0
        %v401 = vadd.f32 %v399, 0.0
        %v402 = vadd.f32 %v400, 0.0
        %s403 = sld [smem:[#allocation3]]
        %v404 = vstv %s403
        %v405 = vmul.f32 %v404, %v350
        %v406 = vmul.f32 %v404, %v351
        %v407 = vadd.f32 %v405, 0.0
        %v408 = vadd.f32 %v406, 0.0
        %s409 = sld [smem:[#allocation3 + $0x9]]
        %v410 = vstv %s409
        %v411 = vmul.f32 %v410, %v353
        %v412 = vmul.f32 %v410, %v354
        %v413 = vadd.f32 %v407, %v411
        %v414 = vadd.f32 %v408, %v412
        %s415 = sld [smem:[#allocation3 + $0x12]]
        %v416 = vstv %s415
        %v417 = vmul.f32 %v416, %v356
        %v418 = vmul.f32 %v416, %v357
        %v419 = vadd.f32 %v413, %v417
        %v420 = vadd.f32 %v414, %v418
        %s421 = sld [smem:[#allocation3 + $0x1b]]
        %v422 = vstv %s421
        %v423 = vmul.f32 %v422, %v359
        %v424 = vmul.f32 %v422, %v360
        %v425 = vadd.f32 %v419, %v423
        %v426 = vadd.f32 %v420, %v424
        %s427 = sld [smem:[#allocation3 + $0x24]]
        %v428 = vstv %s427
        %v429 = vmul.f32 %v428, %v350
        %v430 = vmul.f32 %v428, %v351
        %v431 = vadd.f32 %v429, 0.0
        %v432 = vadd.f32 %v430, 0.0
        %s433 = sld [smem:[#allocation3 + $0x2d]]
        %v434 = vstv %s433
        %v435 = vmul.f32 %v434, %v353
        %v436 = vmul.f32 %v434, %v354
        %v437 = vadd.f32 %v431, %v435
        %v438 = vadd.f32 %v432, %v436
        %s439 = sld [smem:[#allocation3 + $0x36]]
        %v440 = vstv %s439
        %v441 = vmul.f32 %v440, %v356
        %v442 = vmul.f32 %v440, %v357
        %v443 = vadd.f32 %v437, %v441
        %v444 = vadd.f32 %v438, %v442
        %s445 = sld [smem:[#allocation3 + $0x3f]]
        %v446 = vstv %s445
        %v447 = vmul.f32 %v446, %v359
        %v448 = vmul.f32 %v446, %v360
        %v449 = vadd.f32 %v443, %v447
        %v450 = vadd.f32 %v444, %v448
        %s451 = sld [smem:[#allocation3 + $0x48]]
        %v452 = vstv %s451
        %v453 = vmul.f32 %v452, %v350
        %v454 = vmul.f32 %v452, %v351
        %v455 = vadd.f32 %v453, 0.0
        %v456 = vadd.f32 %v454, 0.0
        %s457 = sld [smem:[#allocation3 + $0x51]]
        %v458 = vstv %s457
        %v459 = vmul.f32 %v458, %v353
        %v460 = vmul.f32 %v458, %v354
        %v461 = vadd.f32 %v455, %v459
        %v462 = vadd.f32 %v456, %v460
        %s463 = sld [smem:[#allocation3 + $0x5a]]
        %v464 = vstv %s463
        %v465 = vmul.f32 %v464, %v356
        %v466 = vmul.f32 %v464, %v357
        %v467 = vadd.f32 %v461, %v465
        %v468 = vadd.f32 %v462, %v466
        %s469 = sld [smem:[#allocation3 + $0x63]]
        %v470 = vstv %s469
        %v471 = vmul.f32 %v470, %v359
        %v472 = vmul.f32 %v470, %v360
        %v473 = vadd.f32 %v467, %v471
        %v474 = vadd.f32 %v468, %v472
        %s475 = sld [smem:[#allocation3 + $0x6c]]
        %v476 = vstv %s475
        %v477 = vmul.f32 %v476, %v350
        %v478 = vmul.f32 %v476, %v351
        %v479 = vadd.f32 %v477, 0.0
        %v480 = vadd.f32 %v478, 0.0
        %s481 = sld [smem:[#allocation3 + $0x75]]
        %v482 = vstv %s481
        %v483 = vmul.f32 %v482, %v353
        %v484 = vmul.f32 %v482, %v354
        %v485 = vadd.f32 %v479, %v483
        %v486 = vadd.f32 %v480, %v484
        %s487 = sld [smem:[#allocation3 + $0x7e]]
        %v488 = vstv %s487
        %v489 = vmul.f32 %v488, %v356
        %v490 = vmul.f32 %v488, %v357
        %v491 = vadd.f32 %v485, %v489
        %v492 = vadd.f32 %v486, %v490
        %s493 = sld [smem:[#allocation3 + $0x87]]
        %v494 = vstv %s493
        %v495 = vmul.f32 %v494, %v359
        %v496 = vmul.f32 %v494, %v360
        %v497 = vadd.f32 %v491, %v495
        %v498 = vadd.f32 %v492, %v496
        %v499 = vmul.f32 %v396, -2.0
        %v500 = vmul.f32 %v397, -2.0
        %v501 = vmul.f32 %v398, -2.0
        %vm505 = vcmask 1046528
        %v506 = vrot.slane %v499, 1
        %v507 = vrot.slane %v500, 1
        %v508 = vsel %vm505, %v506, %v507
        %v509 = vrot.slane %v501, 1
        %v510 = vsel %vm505, %v507, %v509
        %v513 = vadd.f32 %v401, %v508
        %v514 = vadd.f32 %v402, %v510
        %s515 = sld [smem:[#allocation3 + $0x3]]
        %v516 = vstv %s515
        %v517 = vmul.f32 %v516, %v350
        %v518 = vmul.f32 %v516, %v351
        %v519 = vmul.f32 %v516, %v352
        %v523 = vrot.slane %v517, 1
        %v524 = vrot.slane %v518, 1
        %v525 = vsel %vm505, %v523, %v524
        %v526 = vrot.slane %v519, 1
        %v527 = vsel %vm505, %v524, %v526
        %v530 = vadd.f32 %v425, %v525
        %v531 = vadd.f32 %v426, %v527
        %s532 = sld [smem:[#allocation3 + $0xc]]
        %v533 = vstv %s532
        %v534 = vmul.f32 %v533, %v353
        %v535 = vmul.f32 %v533, %v354
        %v536 = vmul.f32 %v533, %v355
        %v540 = vrot.slane %v534, 1
        %v541 = vrot.slane %v535, 1
        %v542 = vsel %vm505, %v540, %v541
        %v543 = vrot.slane %v536, 1
        %v544 = vsel %vm505, %v541, %v543
        %v547 = vadd.f32 %v530, %v542
        %v548 = vadd.f32 %v531, %v544
        %s549 = sld [smem:[#allocation3 + $0x15]]
        %v550 = vstv %s549
        %v551 = vmul.f32 %v550, %v356
        %v552 = vmul.f32 %v550, %v357
        %v553 = vmul.f32 %v550, %v358
        %v557 = vrot.slane %v551, 1
        %v558 = vrot.slane %v552, 1
        %v559 = vsel %vm505, %v557, %v558
        %v560 = vrot.slane %v553, 1
        %v561 = vsel %vm505, %v558, %v560
        %v564 = vadd.f32 %v547, %v559
        %v565 = vadd.f32 %v548, %v561
        %s566 = sld [smem:[#allocation3 + $0x1e]]
        %v567 = vstv %s566
        %v568 = vmul.f32 %v567, %v359
        %v569 = vmul.f32 %v567, %v360
        %v570 = vmul.f32 %v567, %v361
        %v574 = vrot.slane %v568, 1
        %v575 = vrot.slane %v569, 1
        %v576 = vsel %vm505, %v574, %v575
        %v577 = vrot.slane %v570, 1
        %v578 = vsel %vm505, %v575, %v577
        %v581 = vadd.f32 %v564, %v576
        %v582 = vadd.f32 %v565, %v578
        %s583 = sld [smem:[#allocation3 + $0x27]]
        %v584 = vstv %s583
        %v585 = vmul.f32 %v584, %v350
        %v586 = vmul.f32 %v584, %v351
        %v587 = vmul.f32 %v584, %v352
        %v591 = vrot.slane %v585, 1
        %v592 = vrot.slane %v586, 1
        %v593 = vsel %vm505, %v591, %v592
        %v594 = vrot.slane %v587, 1
        %v595 = vsel %vm505, %v592, %v594
        %v598 = vadd.f32 %v449, %v593
        %v599 = vadd.f32 %v450, %v595
        %s600 = sld [smem:[#allocation3 + $0x30]]
        %v601 = vstv %s600
        %v602 = vmul.f32 %v601, %v353
        %v603 = vmul.f32 %v601, %v354
        %v604 = vmul.f32 %v601, %v355
        %v608 = vrot.slane %v602, 1
        %v609 = vrot.slane %v603, 1
        %v610 = vsel %vm505, %v608, %v609
        %v611 = vrot.slane %v604, 1
        %v612 = vsel %vm505, %v609, %v611
        %v615 = vadd.f32 %v598, %v610
        %v616 = vadd.f32 %v599, %v612
        %s617 = sld [smem:[#allocation3 + $0x39]]
        %v618 = vstv %s617
        %v619 = vmul.f32 %v618, %v356
        %v620 = vmul.f32 %v618, %v357
        %v621 = vmul.f32 %v618, %v358
        %v625 = vrot.slane %v619, 1
        %v626 = vrot.slane %v620, 1
        %v627 = vsel %vm505, %v625, %v626
        %v628 = vrot.slane %v621, 1
        %v629 = vsel %vm505, %v626, %v628
        %v632 = vadd.f32 %v615, %v627
        %v633 = vadd.f32 %v616, %v629
        %s634 = sld [smem:[#allocation3 + $0x42]]
        %v635 = vstv %s634
        %v636 = vmul.f32 %v635, %v359
        %v637 = vmul.f32 %v635, %v360
        %v638 = vmul.f32 %v635, %v361
        %v642 = vrot.slane %v636, 1
        %v643 = vrot.slane %v637, 1
        %v644 = vsel %vm505, %v642, %v643
        %v645 = vrot.slane %v638, 1
        %v646 = vsel %vm505, %v643, %v645
        %v649 = vadd.f32 %v632, %v644
        %v650 = vadd.f32 %v633, %v646
        %s651 = sld [smem:[#allocation3 + $0x4b]]
        %v652 = vstv %s651
        %v653 = vmul.f32 %v652, %v350
        %v654 = vmul.f32 %v652, %v351
        %v655 = vmul.f32 %v652, %v352
        %v659 = vrot.slane %v653, 1
        %v660 = vrot.slane %v654, 1
        %v661 = vsel %vm505, %v659, %v660
        %v662 = vrot.slane %v655, 1
        %v663 = vsel %vm505, %v660, %v662
        %v666 = vadd.f32 %v473, %v661
        %v667 = vadd.f32 %v474, %v663
        %s668 = sld [smem:[#allocation3 + $0x54]]
        %v669 = vstv %s668
        %v670 = vmul.f32 %v669, %v353
        %v671 = vmul.f32 %v669, %v354
        %v672 = vmul.f32 %v669, %v355
        %v676 = vrot.slane %v670, 1
        %v677 = vrot.slane %v671, 1
        %v678 = vsel %vm505, %v676, %v677
        %v679 = vrot.slane %v672, 1
        %v680 = vsel %vm505, %v677, %v679
        %v683 = vadd.f32 %v666, %v678
        %v684 = vadd.f32 %v667, %v680
        %s685 = sld [smem:[#allocation3 + $0x5d]]
        %v686 = vstv %s685
        %v687 = vmul.f32 %v686, %v356
        %v688 = vmul.f32 %v686, %v357
        %v689 = vmul.f32 %v686, %v358
        %v693 = vrot.slane %v687, 1
        %v694 = vrot.slane %v688, 1
        %v695 = vsel %vm505, %v693, %v694
        %v696 = vrot.slane %v689, 1
        %v697 = vsel %vm505, %v694, %v696
        %v700 = vadd.f32 %v683, %v695
        %v701 = vadd.f32 %v684, %v697
        %s702 = sld [smem:[#allocation3 + $0x66]]
        %v703 = vstv %s702
        %v704 = vmul.f32 %v703, %v359
        %v705 = vmul.f32 %v703, %v360
        %v706 = vmul.f32 %v703, %v361
        %v710 = vrot.slane %v704, 1
        %v711 = vrot.slane %v705, 1
        %v712 = vsel %vm505, %v710, %v711
        %v713 = vrot.slane %v706, 1
        %v714 = vsel %vm505, %v711, %v713
        %v717 = vadd.f32 %v700, %v712
        %v718 = vadd.f32 %v701, %v714
        %s719 = sld [smem:[#allocation3 + $0x6f]]
        %v720 = vstv %s719
        %v721 = vmul.f32 %v720, %v350
        %v722 = vmul.f32 %v720, %v351
        %v723 = vmul.f32 %v720, %v352
        %v727 = vrot.slane %v721, 1
        %v728 = vrot.slane %v722, 1
        %v729 = vsel %vm505, %v727, %v728
        %v730 = vrot.slane %v723, 1
        %v731 = vsel %vm505, %v728, %v730
        %v734 = vadd.f32 %v497, %v729
        %v735 = vadd.f32 %v498, %v731
        %s736 = sld [smem:[#allocation3 + $0x78]]
        %v737 = vstv %s736
        %v738 = vmul.f32 %v737, %v353
        %v739 = vmul.f32 %v737, %v354
        %v740 = vmul.f32 %v737, %v355
        %v744 = vrot.slane %v738, 1
        %v745 = vrot.slane %v739, 1
        %v746 = vsel %vm505, %v744, %v745
        %v747 = vrot.slane %v740, 1
        %v748 = vsel %vm505, %v745, %v747
        %v751 = vadd.f32 %v734, %v746
        %v752 = vadd.f32 %v735, %v748
        %s753 = sld [smem:[#allocation3 + $0x81]]
        %v754 = vstv %s753
        %v755 = vmul.f32 %v754, %v356
        %v756 = vmul.f32 %v754, %v357
        %v757 = vmul.f32 %v754, %v358
        %v761 = vrot.slane %v755, 1
        %v762 = vrot.slane %v756, 1
        %v763 = vsel %vm505, %v761, %v762
        %v764 = vrot.slane %v757, 1
        %v765 = vsel %vm505, %v762, %v764
        %v768 = vadd.f32 %v751, %v763
        %v769 = vadd.f32 %v752, %v765
        %s770 = sld [smem:[#allocation3 + $0x8a]]
        %v771 = vstv %s770
        %v772 = vmul.f32 %v771, %v359
        %v773 = vmul.f32 %v771, %v360
        %v774 = vmul.f32 %v771, %v361
        %v778 = vrot.slane %v772, 1
        %v779 = vrot.slane %v773, 1
        %v780 = vsel %vm505, %v778, %v779
        %v781 = vrot.slane %v774, 1
        %v782 = vsel %vm505, %v779, %v781
        %v785 = vadd.f32 %v768, %v780
        %v786 = vadd.f32 %v769, %v782
        %v787 = vmul.f32 %v398, -1.0
        %vm791 = vcmask 1045504
        %v792 = vrot.slane %v399, 2
        %v793 = vrot.slane %v400, 2
        %v794 = vsel %vm791, %v792, %v793
        %v795 = vrot.slane %v787, 2
        %v796 = vsel %vm791, %v793, %v795
        %v799 = vadd.f32 %v513, %v794
        %v800 = vadd.f32 %v514, %v796
        %v804 = vrot.slane %v396, 2
        %v805 = vrot.slane %v397, 2
        %v806 = vsel %vm791, %v804, %v805
        %v807 = vrot.slane %v398, 2
        %v808 = vsel %vm791, %v805, %v807
        %v811 = vadd.f32 %v401, %v806
        %v812 = vadd.f32 %v402, %v808
        %s813 = sld [smem:[#allocation3 + $0x6]]
        %v814 = vstv %s813
        %v815 = vmul.f32 %v814, %v350
        %v816 = vmul.f32 %v814, %v351
        %v817 = vmul.f32 %v814, %v352
        %v821 = vrot.slane %v815, 2
        %v822 = vrot.slane %v816, 2
        %v823 = vsel %vm791, %v821, %v822
        %v824 = vrot.slane %v817, 2
        %v825 = vsel %vm791, %v822, %v824
        %v828 = vadd.f32 %v581, %v823
        %v829 = vadd.f32 %v582, %v825
        %s830 = sld [smem:[#allocation3 + $0xf]]
        %v831 = vstv %s830
        %v832 = vmul.f32 %v831, %v353
        %v833 = vmul.f32 %v831, %v354
        %v834 = vmul.f32 %v831, %v355
        %v838 = vrot.slane %v832, 2
        %v839 = vrot.slane %v833, 2
        %v840 = vsel %vm791, %v838, %v839
        %v841 = vrot.slane %v834, 2
        %v842 = vsel %vm791, %v839, %v841
        %v845 = vadd.f32 %v828, %v840
        %v846 = vadd.f32 %v829, %v842
        %s847 = sld [smem:[#allocation3 + $0x18]]
        %v848 = vstv %s847
        %v849 = vmul.f32 %v848, %v356
        %v850 = vmul.f32 %v848, %v357
        %v851 = vmul.f32 %v848, %v358
        %v855 = vrot.slane %v849, 2
        %v856 = vrot.slane %v850, 2
        %v857 = vsel %vm791, %v855, %v856
        %v858 = vrot.slane %v851, 2
        %v859 = vsel %vm791, %v856, %v858
        %v862 = vadd.f32 %v845, %v857
        %v863 = vadd.f32 %v846, %v859
        %s864 = sld [smem:[#allocation3 + $0x21]]
        %v865 = vstv %s864
        %v866 = vmul.f32 %v865, %v359
        %v867 = vmul.f32 %v865, %v360
        %v868 = vmul.f32 %v865, %v361
        %v872 = vrot.slane %v866, 2
        %v873 = vrot.slane %v867, 2
        %v874 = vsel %vm791, %v872, %v873
        %v875 = vrot.slane %v868, 2
        %v876 = vsel %vm791, %v873, %v875
        %v879 = vadd.f32 %v862, %v874
        %v880 = vadd.f32 %v863, %v876
        %s881 = sld [smem:[#allocation3 + $0x2a]]
        %v882 = vstv %s881
        %v883 = vmul.f32 %v882, %v350
        %v884 = vmul.f32 %v882, %v351
        %v885 = vmul.f32 %v882, %v352
        %v889 = vrot.slane %v883, 2
        %v890 = vrot.slane %v884, 2
        %v891 = vsel %vm791, %v889, %v890
        %v892 = vrot.slane %v885, 2
        %v893 = vsel %vm791, %v890, %v892
        %v896 = vadd.f32 %v649, %v891
        %v897 = vadd.f32 %v650, %v893
        %s898 = sld [smem:[#allocation3 + $0x33]]
        %v899 = vstv %s898
        %v900 = vmul.f32 %v899, %v353
        %v901 = vmul.f32 %v899, %v354
        %v902 = vmul.f32 %v899, %v355
        %v906 = vrot.slane %v900, 2
        %v907 = vrot.slane %v901, 2
        %v908 = vsel %vm791, %v906, %v907
        %v909 = vrot.slane %v902, 2
        %v910 = vsel %vm791, %v907, %v909
        %v913 = vadd.f32 %v896, %v908
        %v914 = vadd.f32 %v897, %v910
        %s915 = sld [smem:[#allocation3 + $0x3c]]
        %v916 = vstv %s915
        %v917 = vmul.f32 %v916, %v356
        %v918 = vmul.f32 %v916, %v357
        %v919 = vmul.f32 %v916, %v358
        %v923 = vrot.slane %v917, 2
        %v924 = vrot.slane %v918, 2
        %v925 = vsel %vm791, %v923, %v924
        %v926 = vrot.slane %v919, 2
        %v927 = vsel %vm791, %v924, %v926
        %v930 = vadd.f32 %v913, %v925
        %v931 = vadd.f32 %v914, %v927
        %s932 = sld [smem:[#allocation3 + $0x45]]
        %v933 = vstv %s932
        %v934 = vmul.f32 %v933, %v359
        %v935 = vmul.f32 %v933, %v360
        %v936 = vmul.f32 %v933, %v361
        %v940 = vrot.slane %v934, 2
        %v941 = vrot.slane %v935, 2
        %v942 = vsel %vm791, %v940, %v941
        %v943 = vrot.slane %v936, 2
        %v944 = vsel %vm791, %v941, %v943
        %v947 = vadd.f32 %v930, %v942
        %v948 = vadd.f32 %v931, %v944
        %s949 = sld [smem:[#allocation3 + $0x4e]]
        %v950 = vstv %s949
        %v951 = vmul.f32 %v950, %v350
        %v952 = vmul.f32 %v950, %v351
        %v953 = vmul.f32 %v950, %v352
        %v957 = vrot.slane %v951, 2
        %v958 = vrot.slane %v952, 2
        %v959 = vsel %vm791, %v957, %v958
        %v960 = vrot.slane %v953, 2
        %v961 = vsel %vm791, %v958, %v960
        %v964 = vadd.f32 %v717, %v959
        %v965 = vadd.f32 %v718, %v961
        %s966 = sld [smem:[#allocation3 + $0x57]]
        %v967 = vstv %s966
        %v968 = vmul.f32 %v967, %v353
        %v969 = vmul.f32 %v967, %v354
        %v970 = vmul.f32 %v967, %v355
        %v974 = vrot.slane %v968, 2
        %v975 = vrot.slane %v969, 2
        %v976 = vsel %vm791, %v974, %v975
        %v977 = vrot.slane %v970, 2
        %v978 = vsel %vm791, %v975, %v977
        %v981 = vadd.f32 %v964, %v976
        %v982 = vadd.f32 %v965, %v978
        %s983 = sld [smem:[#allocation3 + $0x60]]
        %v984 = vstv %s983
        %v985 = vmul.f32 %v984, %v356
        %v986 = vmul.f32 %v984, %v357
        %v987 = vmul.f32 %v984, %v358
        %v991 = vrot.slane %v985, 2
        %v992 = vrot.slane %v986, 2
        %v993 = vsel %vm791, %v991, %v992
        %v994 = vrot.slane %v987, 2
        %v995 = vsel %vm791, %v992, %v994
        %v998 = vadd.f32 %v981, %v993
        %v999 = vadd.f32 %v982, %v995
        %s1000 = sld [smem:[#allocation3 + $0x69]]
        %v1001 = vstv %s1000
        %v1002 = vmul.f32 %v1001, %v359
        %v1003 = vmul.f32 %v1001, %v360
        %v1004 = vmul.f32 %v1001, %v361
        %v1008 = vrot.slane %v1002, 2
        %v1009 = vrot.slane %v1003, 2
        %v1010 = vsel %vm791, %v1008, %v1009
        %v1011 = vrot.slane %v1004, 2
        %v1012 = vsel %vm791, %v1009, %v1011
        %v1015 = vadd.f32 %v998, %v1010
        %v1016 = vadd.f32 %v999, %v1012
        %s1017 = sld [smem:[#allocation3 + $0x72]]
        %v1018 = vstv %s1017
        %v1019 = vmul.f32 %v1018, %v350
        %v1020 = vmul.f32 %v1018, %v351
        %v1021 = vmul.f32 %v1018, %v352
        %v1025 = vrot.slane %v1019, 2
        %v1026 = vrot.slane %v1020, 2
        %v1027 = vsel %vm791, %v1025, %v1026
        %v1028 = vrot.slane %v1021, 2
        %v1029 = vsel %vm791, %v1026, %v1028
        %v1032 = vadd.f32 %v785, %v1027
        %v1033 = vadd.f32 %v786, %v1029
        %s1034 = sld [smem:[#allocation3 + $0x7b]]
        %v1035 = vstv %s1034
        %v1036 = vmul.f32 %v1035, %v353
        %v1037 = vmul.f32 %v1035, %v354
        %v1038 = vmul.f32 %v1035, %v355
        %v1042 = vrot.slane %v1036, 2
        %v1043 = vrot.slane %v1037, 2
        %v1044 = vsel %vm791, %v1042, %v1043
        %v1045 = vrot.slane %v1038, 2
        %v1046 = vsel %vm791, %v1043, %v1045
        %v1049 = vadd.f32 %v1032, %v1044
        %v1050 = vadd.f32 %v1033, %v1046
        %s1051 = sld [smem:[#allocation3 + $0x84]]
        %v1052 = vstv %s1051
        %v1053 = vmul.f32 %v1052, %v356
        %v1054 = vmul.f32 %v1052, %v357
        %v1055 = vmul.f32 %v1052, %v358
        %v1059 = vrot.slane %v1053, 2
        %v1060 = vrot.slane %v1054, 2
        %v1061 = vsel %vm791, %v1059, %v1060
        %v1062 = vrot.slane %v1055, 2
        %v1063 = vsel %vm791, %v1060, %v1062
        %v1066 = vadd.f32 %v1049, %v1061
        %v1067 = vadd.f32 %v1050, %v1063
        %s1068 = sld [smem:[#allocation3 + $0x8d]]
        %v1069 = vstv %s1068
        %v1070 = vmul.f32 %v1069, %v359
        %v1071 = vmul.f32 %v1069, %v360
        %v1072 = vmul.f32 %v1069, %v361
        %v1076 = vrot.slane %v1070, 2
        %v1077 = vrot.slane %v1071, 2
        %v1078 = vsel %vm791, %v1076, %v1077
        %v1079 = vrot.slane %v1072, 2
        %v1080 = vsel %vm791, %v1077, %v1079
        %v1083 = vadd.f32 %v1066, %v1078
        %v1084 = vadd.f32 %v1067, %v1080
        %1085 = vrot.lane.b32.xlu0 %v499, 127
        %v1086 = vpop.permute.xlu0 %1085
        %1087 = vrot.lane.b32.xlu0 %v500, 127
        %v1088 = vpop.permute.xlu0 %1087
        %v1091 = vadd.f32 %v811, %v1086
        %v1092 = vadd.f32 %v812, %v1088
        %s1093 = sld [smem:[#allocation3 + $0x1]]
        %v1094 = vstv %s1093
        %v1095 = vmul.f32 %v1094, %v350
        %v1096 = vmul.f32 %v1094, %v351
        %1099 = vrot.lane.b32.xlu0 %v1095, 127
        %v1100 = vpop.permute.xlu0 %1099
        %1101 = vrot.lane.b32.xlu0 %v1096, 127
        %v1102 = vpop.permute.xlu0 %1101
        %v1105 = vadd.f32 %v879, %v1100
        %v1106 = vadd.f32 %v880, %v1102
        %s1107 = sld [smem:[#allocation3 + $0xa]]
        %v1108 = vstv %s1107
        %v1109 = vmul.f32 %v1108, %v353
        %v1110 = vmul.f32 %v1108, %v354
        %1113 = vrot.lane.b32.xlu0 %v1109, 127
        %v1114 = vpop.permute.xlu0 %1113
        %1115 = vrot.lane.b32.xlu0 %v1110, 127
        %v1116 = vpop.permute.xlu0 %1115
        %v1119 = vadd.f32 %v1105, %v1114
        %v1120 = vadd.f32 %v1106, %v1116
        %s1121 = sld [smem:[#allocation3 + $0x13]]
        %v1122 = vstv %s1121
        %v1123 = vmul.f32 %v1122, %v356
        %v1124 = vmul.f32 %v1122, %v357
        %1127 = vrot.lane.b32.xlu0 %v1123, 127
        %v1128 = vpop.permute.xlu0 %1127
        %1129 = vrot.lane.b32.xlu0 %v1124, 127
        %v1130 = vpop.permute.xlu0 %1129
        %v1133 = vadd.f32 %v1119, %v1128
        %v1134 = vadd.f32 %v1120, %v1130
        %s1135 = sld [smem:[#allocation3 + $0x1c]]
        %v1136 = vstv %s1135
        %v1137 = vmul.f32 %v1136, %v359
        %v1138 = vmul.f32 %v1136, %v360
        %1141 = vrot.lane.b32.xlu0 %v1137, 127
        %v1142 = vpop.permute.xlu0 %1141
        %1143 = vrot.lane.b32.xlu0 %v1138, 127
        %v1144 = vpop.permute.xlu0 %1143
        %v1147 = vadd.f32 %v1133, %v1142
        %v1148 = vadd.f32 %v1134, %v1144
        %s1149 = sld [smem:[#allocation3 + $0x25]]
        %v1150 = vstv %s1149
        %v1151 = vmul.f32 %v1150, %v350
        %v1152 = vmul.f32 %v1150, %v351
        %1155 = vrot.lane.b32.xlu0 %v1151, 127
        %v1156 = vpop.permute.xlu0 %1155
        %1157 = vrot.lane.b32.xlu0 %v1152, 127
        %v1158 = vpop.permute.xlu0 %1157
        %v1161 = vadd.f32 %v947, %v1156
        %v1162 = vadd.f32 %v948, %v1158
        %s1163 = sld [smem:[#allocation3 + $0x2e]]
        %v1164 = vstv %s1163
        %v1165 = vmul.f32 %v1164, %v353
        %v1166 = vmul.f32 %v1164, %v354
        %1169 = vrot.lane.b32.xlu0 %v1165, 127
        %v1170 = vpop.permute.xlu0 %1169
        %1171 = vrot.lane.b32.xlu0 %v1166, 127
        %v1172 = vpop.permute.xlu0 %1171
        %v1175 = vadd.f32 %v1161, %v1170
        %v1176 = vadd.f32 %v1162, %v1172
        %s1177 = sld [smem:[#allocation3 + $0x37]]
        %v1178 = vstv %s1177
        %v1179 = vmul.f32 %v1178, %v356
        %v1180 = vmul.f32 %v1178, %v357
        %1183 = vrot.lane.b32.xlu0 %v1179, 127
        %v1184 = vpop.permute.xlu0 %1183
        %1185 = vrot.lane.b32.xlu0 %v1180, 127
        %v1186 = vpop.permute.xlu0 %1185
        %v1189 = vadd.f32 %v1175, %v1184
        %v1190 = vadd.f32 %v1176, %v1186
        %s1191 = sld [smem:[#allocation3 + $0x40]]
        %v1192 = vstv %s1191
        %v1193 = vmul.f32 %v1192, %v359
        %v1194 = vmul.f32 %v1192, %v360
        %1197 = vrot.lane.b32.xlu0 %v1193, 127
        %v1198 = vpop.permute.xlu0 %1197
        %1199 = vrot.lane.b32.xlu0 %v1194, 127
        %v1200 = vpop.permute.xlu0 %1199
        %v1203 = vadd.f32 %v1189, %v1198
        %v1204 = vadd.f32 %v1190, %v1200
        %s1205 = sld [smem:[#allocation3 + $0x49]]
        %v1206 = vstv %s1205
        %v1207 = vmul.f32 %v1206, %v350
        %v1208 = vmul.f32 %v1206, %v351
        %1211 = vrot.lane.b32.xlu0 %v1207, 127
        %v1212 = vpop.permute.xlu0 %1211
        %1213 = vrot.lane.b32.xlu0 %v1208, 127
        %v1214 = vpop.permute.xlu0 %1213
        %v1217 = vadd.f32 %v1015, %v1212
        %v1218 = vadd.f32 %v1016, %v1214
        %s1219 = sld [smem:[#allocation3 + $0x52]]
        %v1220 = vstv %s1219
        %v1221 = vmul.f32 %v1220, %v353
        %v1222 = vmul.f32 %v1220, %v354
        %1225 = vrot.lane.b32.xlu0 %v1221, 127
        %v1226 = vpop.permute.xlu0 %1225
        %1227 = vrot.lane.b32.xlu0 %v1222, 127
        %v1228 = vpop.permute.xlu0 %1227
        %v1231 = vadd.f32 %v1217, %v1226
        %v1232 = vadd.f32 %v1218, %v1228
        %s1233 = sld [smem:[#allocation3 + $0x5b]]
        %v1234 = vstv %s1233
        %v1235 = vmul.f32 %v1234, %v356
        %v1236 = vmul.f32 %v1234, %v357
        %1239 = vrot.lane.b32.xlu0 %v1235, 127
        %v1240 = vpop.permute.xlu0 %1239
        %1241 = vrot.lane.b32.xlu0 %v1236, 127
        %v1242 = vpop.permute.xlu0 %1241
        %v1245 = vadd.f32 %v1231, %v1240
        %v1246 = vadd.f32 %v1232, %v1242
        %s1247 = sld [smem:[#allocation3 + $0x64]]
        %v1248 = vstv %s1247
        %v1249 = vmul.f32 %v1248, %v359
        %v1250 = vmul.f32 %v1248, %v360
        %1253 = vrot.lane.b32.xlu0 %v1249, 127
        %v1254 = vpop.permute.xlu0 %1253
        %1255 = vrot.lane.b32.xlu0 %v1250, 127
        %v1256 = vpop.permute.xlu0 %1255
        %v1259 = vadd.f32 %v1245, %v1254
        %v1260 = vadd.f32 %v1246, %v1256
        %s1261 = sld [smem:[#allocation3 + $0x6d]]
        %v1262 = vstv %s1261
        %v1263 = vmul.f32 %v1262, %v350
        %v1264 = vmul.f32 %v1262, %v351
        %1267 = vrot.lane.b32.xlu0 %v1263, 127
        %v1268 = vpop.permute.xlu0 %1267
        %1269 = vrot.lane.b32.xlu0 %v1264, 127
        %v1270 = vpop.permute.xlu0 %1269
        %v1273 = vadd.f32 %v1083, %v1268
        %v1274 = vadd.f32 %v1084, %v1270
        %s1275 = sld [smem:[#allocation3 + $0x76]]
        %v1276 = vstv %s1275
        %v1277 = vmul.f32 %v1276, %v353
        %v1278 = vmul.f32 %v1276, %v354
        %1281 = vrot.lane.b32.xlu0 %v1277, 127
        %v1282 = vpop.permute.xlu0 %1281
        %1283 = vrot.lane.b32.xlu0 %v1278, 127
        %v1284 = vpop.permute.xlu0 %1283
        %v1287 = vadd.f32 %v1273, %v1282
        %v1288 = vadd.f32 %v1274, %v1284
        %s1289 = sld [smem:[#allocation3 + $0x7f]]
        %v1290 = vstv %s1289
        %v1291 = vmul.f32 %v1290, %v356
        %v1292 = vmul.f32 %v1290, %v357
        %1295 = vrot.lane.b32.xlu0 %v1291, 127
        %v1296 = vpop.permute.xlu0 %1295
        %1297 = vrot.lane.b32.xlu0 %v1292, 127
        %v1298 = vpop.permute.xlu0 %1297
        %v1301 = vadd.f32 %v1287, %v1296
        %v1302 = vadd.f32 %v1288, %v1298
        %s1303 = sld [smem:[#allocation3 + $0x88]]
        %v1304 = vstv %s1303
        %v1305 = vmul.f32 %v1304, %v359
        %v1306 = vmul.f32 %v1304, %v360
        %1309 = vrot.lane.b32.xlu0 %v1305, 127
        %v1310 = vpop.permute.xlu0 %1309
        %1311 = vrot.lane.b32.xlu0 %v1306, 127
        %v1312 = vpop.permute.xlu0 %1311
        %v1315 = vadd.f32 %v1301, %v1310
        %v1316 = vadd.f32 %v1302, %v1312
        %s1317 = sld [smem:[#allocation3 + $0x4]]
        %v1318 = vstv %s1317
        %v1319 = vmul.f32 %v1318, %v350
        %v1320 = vmul.f32 %v1318, %v351
        %v1321 = vmul.f32 %v1318, %v352
        %v1325 = vrot.slane %v1319, 1
        %v1326 = vrot.slane %v1320, 1
        %v1327 = vsel %vm505, %v1325, %v1326
        %v1328 = vrot.slane %v1321, 1
        %v1329 = vsel %vm505, %v1326, %v1328
        %1330 = vrot.lane.b32.xlu0 %v1327, 127
        %v1331 = vpop.permute.xlu0 %1330
        %1332 = vrot.lane.b32.xlu0 %v1329, 127
        %v1333 = vpop.permute.xlu0 %1332
        %v1336 = vadd.f32 %v1147, %v1331
        %v1337 = vadd.f32 %v1148, %v1333
        %s1338 = sld [smem:[#allocation3 + $0xd]]
        %v1339 = vstv %s1338
        %v1340 = vmul.f32 %v1339, %v353
        %v1341 = vmul.f32 %v1339, %v354
        %v1342 = vmul.f32 %v1339, %v355
        %v1346 = vrot.slane %v1340, 1
        %v1347 = vrot.slane %v1341, 1
        %v1348 = vsel %vm505, %v1346, %v1347
        %v1349 = vrot.slane %v1342, 1
        %v1350 = vsel %vm505, %v1347, %v1349
        %1351 = vrot.lane.b32.xlu0 %v1348, 127
        %v1352 = vpop.permute.xlu0 %1351
        %1353 = vrot.lane.b32.xlu0 %v1350, 127
        %v1354 = vpop.permute.xlu0 %1353
        %v1357 = vadd.f32 %v1336, %v1352
        %v1358 = vadd.f32 %v1337, %v1354
        %s1359 = sld [smem:[#allocation3 + $0x16]]
        %v1360 = vstv %s1359
        %v1361 = vmul.f32 %v1360, %v356
        %v1362 = vmul.f32 %v1360, %v357
        %v1363 = vmul.f32 %v1360, %v358
        %v1367 = vrot.slane %v1361, 1
        %v1368 = vrot.slane %v1362, 1
        %v1369 = vsel %vm505, %v1367, %v1368
        %v1370 = vrot.slane %v1363, 1
        %v1371 = vsel %vm505, %v1368, %v1370
        %1372 = vrot.lane.b32.xlu0 %v1369, 127
        %v1373 = vpop.permute.xlu0 %1372
        %1374 = vrot.lane.b32.xlu0 %v1371, 127
        %v1375 = vpop.permute.xlu0 %1374
        %v1378 = vadd.f32 %v1357, %v1373
        %v1379 = vadd.f32 %v1358, %v1375
        %s1380 = sld [smem:[#allocation3 + $0x1f]]
        %v1381 = vstv %s1380
        %v1382 = vmul.f32 %v1381, %v359
        %v1383 = vmul.f32 %v1381, %v360
        %v1384 = vmul.f32 %v1381, %v361
        %v1388 = vrot.slane %v1382, 1
        %v1389 = vrot.slane %v1383, 1
        %v1390 = vsel %vm505, %v1388, %v1389
        %v1391 = vrot.slane %v1384, 1
        %v1392 = vsel %vm505, %v1389, %v1391
        %1393 = vrot.lane.b32.xlu0 %v1390, 127
        %v1394 = vpop.permute.xlu0 %1393
        %1395 = vrot.lane.b32.xlu0 %v1392, 127
        %v1396 = vpop.permute.xlu0 %1395
        %v1399 = vadd.f32 %v1378, %v1394
        %v1400 = vadd.f32 %v1379, %v1396
        %s1401 = sld [smem:[#allocation3 + $0x28]]
        %v1402 = vstv %s1401
        %v1403 = vmul.f32 %v1402, %v350
        %v1404 = vmul.f32 %v1402, %v351
        %v1405 = vmul.f32 %v1402, %v352
        %v1409 = vrot.slane %v1403, 1
        %v1410 = vrot.slane %v1404, 1
        %v1411 = vsel %vm505, %v1409, %v1410
        %v1412 = vrot.slane %v1405, 1
        %v1413 = vsel %vm505, %v1410, %v1412
        %1414 = vrot.lane.b32.xlu0 %v1411, 127
        %v1415 = vpop.permute.xlu0 %1414
        %1416 = vrot.lane.b32.xlu0 %v1413, 127
        %v1417 = vpop.permute.xlu0 %1416
        %v1420 = vadd.f32 %v1203, %v1415
        %v1421 = vadd.f32 %v1204, %v1417
        %s1422 = sld [smem:[#allocation3 + $0x31]]
        %v1423 = vstv %s1422
        %v1424 = vmul.f32 %v1423, %v353
        %v1425 = vmul.f32 %v1423, %v354
        %v1426 = vmul.f32 %v1423, %v355
        %v1430 = vrot.slane %v1424, 1
        %v1431 = vrot.slane %v1425, 1
        %v1432 = vsel %vm505, %v1430, %v1431
        %v1433 = vrot.slane %v1426, 1
        %v1434 = vsel %vm505, %v1431, %v1433
        %1435 = vrot.lane.b32.xlu0 %v1432, 127
        %v1436 = vpop.permute.xlu0 %1435
        %1437 = vrot.lane.b32.xlu0 %v1434, 127
        %v1438 = vpop.permute.xlu0 %1437
        %v1441 = vadd.f32 %v1420, %v1436
        %v1442 = vadd.f32 %v1421, %v1438
        %s1443 = sld [smem:[#allocation3 + $0x3a]]
        %v1444 = vstv %s1443
        %v1445 = vmul.f32 %v1444, %v356
        %v1446 = vmul.f32 %v1444, %v357
        %v1447 = vmul.f32 %v1444, %v358
        %v1451 = vrot.slane %v1445, 1
        %v1452 = vrot.slane %v1446, 1
        %v1453 = vsel %vm505, %v1451, %v1452
        %v1454 = vrot.slane %v1447, 1
        %v1455 = vsel %vm505, %v1452, %v1454
        %1456 = vrot.lane.b32.xlu0 %v1453, 127
        %v1457 = vpop.permute.xlu0 %1456
        %1458 = vrot.lane.b32.xlu0 %v1455, 127
        %v1459 = vpop.permute.xlu0 %1458
        %v1462 = vadd.f32 %v1441, %v1457
        %v1463 = vadd.f32 %v1442, %v1459
        %s1464 = sld [smem:[#allocation3 + $0x43]]
        %v1465 = vstv %s1464
        %v1466 = vmul.f32 %v1465, %v359
        %v1467 = vmul.f32 %v1465, %v360
        %v1468 = vmul.f32 %v1465, %v361
        %v1472 = vrot.slane %v1466, 1
        %v1473 = vrot.slane %v1467, 1
        %v1474 = vsel %vm505, %v1472, %v1473
        %v1475 = vrot.slane %v1468, 1
        %v1476 = vsel %vm505, %v1473, %v1475
        %1477 = vrot.lane.b32.xlu0 %v1474, 127
        %v1478 = vpop.permute.xlu0 %1477
        %1479 = vrot.lane.b32.xlu0 %v1476, 127
        %v1480 = vpop.permute.xlu0 %1479
        %v1483 = vadd.f32 %v1462, %v1478
        %v1484 = vadd.f32 %v1463, %v1480
        %s1485 = sld [smem:[#allocation3 + $0x4c]]
        %v1486 = vstv %s1485
        %v1487 = vmul.f32 %v1486, %v350
        %v1488 = vmul.f32 %v1486, %v351
        %v1489 = vmul.f32 %v1486, %v352
        %v1493 = vrot.slane %v1487, 1
        %v1494 = vrot.slane %v1488, 1
        %v1495 = vsel %vm505, %v1493, %v1494
        %v1496 = vrot.slane %v1489, 1
        %v1497 = vsel %vm505, %v1494, %v1496
        %1498 = vrot.lane.b32.xlu0 %v1495, 127
        %v1499 = vpop.permute.xlu0 %1498
        %1500 = vrot.lane.b32.xlu0 %v1497, 127
        %v1501 = vpop.permute.xlu0 %1500
        %v1504 = vadd.f32 %v1259, %v1499
        %v1505 = vadd.f32 %v1260, %v1501
        %s1506 = sld [smem:[#allocation3 + $0x55]]
        %v1507 = vstv %s1506
        %v1508 = vmul.f32 %v1507, %v353
        %v1509 = vmul.f32 %v1507, %v354
        %v1510 = vmul.f32 %v1507, %v355
        %v1514 = vrot.slane %v1508, 1
        %v1515 = vrot.slane %v1509, 1
        %v1516 = vsel %vm505, %v1514, %v1515
        %v1517 = vrot.slane %v1510, 1
        %v1518 = vsel %vm505, %v1515, %v1517
        %1519 = vrot.lane.b32.xlu0 %v1516, 127
        %v1520 = vpop.permute.xlu0 %1519
        %1521 = vrot.lane.b32.xlu0 %v1518, 127
        %v1522 = vpop.permute.xlu0 %1521
        %v1525 = vadd.f32 %v1504, %v1520
        %v1526 = vadd.f32 %v1505, %v1522
        %s1527 = sld [smem:[#allocation3 + $0x5e]]
        %v1528 = vstv %s1527
        %v1529 = vmul.f32 %v1528, %v356
        %v1530 = vmul.f32 %v1528, %v357
        %v1531 = vmul.f32 %v1528, %v358
        %v1535 = vrot.slane %v1529, 1
        %v1536 = vrot.slane %v1530, 1
        %v1537 = vsel %vm505, %v1535, %v1536
        %v1538 = vrot.slane %v1531, 1
        %v1539 = vsel %vm505, %v1536, %v1538
        %1540 = vrot.lane.b32.xlu0 %v1537, 127
        %v1541 = vpop.permute.xlu0 %1540
        %1542 = vrot.lane.b32.xlu0 %v1539, 127
        %v1543 = vpop.permute.xlu0 %1542
        %v1546 = vadd.f32 %v1525, %v1541
        %v1547 = vadd.f32 %v1526, %v1543
        %s1548 = sld [smem:[#allocation3 + $0x67]]
        %v1549 = vstv %s1548
        %v1550 = vmul.f32 %v1549, %v359
        %v1551 = vmul.f32 %v1549, %v360
        %v1552 = vmul.f32 %v1549, %v361
        %v1556 = vrot.slane %v1550, 1
        %v1557 = vrot.slane %v1551, 1
        %v1558 = vsel %vm505, %v1556, %v1557
        %v1559 = vrot.slane %v1552, 1
        %v1560 = vsel %vm505, %v1557, %v1559
        %1561 = vrot.lane.b32.xlu0 %v1558, 127
        %v1562 = vpop.permute.xlu0 %1561
        %1563 = vrot.lane.b32.xlu0 %v1560, 127
        %v1564 = vpop.permute.xlu0 %1563
        %v1567 = vadd.f32 %v1546, %v1562
        %v1568 = vadd.f32 %v1547, %v1564
        %s1569 = sld [smem:[#allocation3 + $0x70]]
        %v1570 = vstv %s1569
        %v1571 = vmul.f32 %v1570, %v350
        %v1572 = vmul.f32 %v1570, %v351
        %v1573 = vmul.f32 %v1570, %v352
        %v1577 = vrot.slane %v1571, 1
        %v1578 = vrot.slane %v1572, 1
        %v1579 = vsel %vm505, %v1577, %v1578
        %v1580 = vrot.slane %v1573, 1
        %v1581 = vsel %vm505, %v1578, %v1580
        %1582 = vrot.lane.b32.xlu0 %v1579, 127
        %v1583 = vpop.permute.xlu0 %1582
        %1584 = vrot.lane.b32.xlu0 %v1581, 127
        %v1585 = vpop.permute.xlu0 %1584
        %v1588 = vadd.f32 %v1315, %v1583
        %v1589 = vadd.f32 %v1316, %v1585
        %s1590 = sld [smem:[#allocation3 + $0x79]]
        %v1591 = vstv %s1590
        %v1592 = vmul.f32 %v1591, %v353
        %v1593 = vmul.f32 %v1591, %v354
        %v1594 = vmul.f32 %v1591, %v355
        %v1598 = vrot.slane %v1592, 1
        %v1599 = vrot.slane %v1593, 1
        %v1600 = vsel %vm505, %v1598, %v1599
        %v1601 = vrot.slane %v1594, 1
        %v1602 = vsel %vm505, %v1599, %v1601
        %1603 = vrot.lane.b32.xlu0 %v1600, 127
        %v1604 = vpop.permute.xlu0 %1603
        %1605 = vrot.lane.b32.xlu0 %v1602, 127
        %v1606 = vpop.permute.xlu0 %1605
        %v1609 = vadd.f32 %v1588, %v1604
        %v1610 = vadd.f32 %v1589, %v1606
        %s1611 = sld [smem:[#allocation3 + $0x82]]
        %v1612 = vstv %s1611
        %v1613 = vmul.f32 %v1612, %v356
        %v1614 = vmul.f32 %v1612, %v357
        %v1615 = vmul.f32 %v1612, %v358
        %v1619 = vrot.slane %v1613, 1
        %v1620 = vrot.slane %v1614, 1
        %v1621 = vsel %vm505, %v1619, %v1620
        %v1622 = vrot.slane %v1615, 1
        %v1623 = vsel %vm505, %v1620, %v1622
        %1624 = vrot.lane.b32.xlu0 %v1621, 127
        %v1625 = vpop.permute.xlu0 %1624
        %1626 = vrot.lane.b32.xlu0 %v1623, 127
        %v1627 = vpop.permute.xlu0 %1626
        %v1630 = vadd.f32 %v1609, %v1625
        %v1631 = vadd.f32 %v1610, %v1627
        %s1632 = sld [smem:[#allocation3 + $0x8b]]
        %v1633 = vstv %s1632
        %v1634 = vmul.f32 %v1633, %v359
        %v1635 = vmul.f32 %v1633, %v360
        %v1636 = vmul.f32 %v1633, %v361
        %v1640 = vrot.slane %v1634, 1
        %v1641 = vrot.slane %v1635, 1
        %v1642 = vsel %vm505, %v1640, %v1641
        %v1643 = vrot.slane %v1636, 1
        %v1644 = vsel %vm505, %v1641, %v1643
        %1645 = vrot.lane.b32.xlu0 %v1642, 127
        %v1646 = vpop.permute.xlu0 %1645
        %1647 = vrot.lane.b32.xlu0 %v1644, 127
        %v1648 = vpop.permute.xlu0 %1647
        %v1651 = vadd.f32 %v1630, %v1646
        %v1652 = vadd.f32 %v1631, %v1648
        %v1653 = vmul.f32 %v396, 2.0
        %v1654 = vmul.f32 %v397, 2.0
        %v1655 = vmul.f32 %v398, 2.0
        %v1659 = vrot.slane %v1653, 2
        %v1660 = vrot.slane %v1654, 2
        %v1661 = vsel %vm791, %v1659, %v1660
        %v1662 = vrot.slane %v1655, 2
        %v1663 = vsel %vm791, %v1660, %v1662
        %1664 = vrot.lane.b32.xlu0 %v1661, 127
        %v1665 = vpop.permute.xlu0 %1664
        %1666 = vrot.lane.b32.xlu0 %v1663, 127
        %v1667 = vpop.permute.xlu0 %1666
        %v1670 = vadd.f32 %v1091, %v1665
        %v1671 = vadd.f32 %v1092, %v1667
        %s1672 = sld [smem:[#allocation3 + $0x7]]
        %v1673 = vstv %s1672
        %v1674 = vmul.f32 %v1673, %v350
        %v1675 = vmul.f32 %v1673, %v351
        %v1676 = vmul.f32 %v1673, %v352
        %v1680 = vrot.slane %v1674, 2
        %v1681 = vrot.slane %v1675, 2
        %v1682 = vsel %vm791, %v1680, %v1681
        %v1683 = vrot.slane %v1676, 2
        %v1684 = vsel %vm791, %v1681, %v1683
        %1685 = vrot.lane.b32.xlu0 %v1682, 127
        %v1686 = vpop.permute.xlu0 %1685
        %1687 = vrot.lane.b32.xlu0 %v1684, 127
        %v1688 = vpop.permute.xlu0 %1687
        %v1691 = vadd.f32 %v1399, %v1686
        %v1692 = vadd.f32 %v1400, %v1688
        %s1693 = sld [smem:[#allocation3 + $0x10]]
        %v1694 = vstv %s1693
        %v1695 = vmul.f32 %v1694, %v353
        %v1696 = vmul.f32 %v1694, %v354
        %v1697 = vmul.f32 %v1694, %v355
        %v1701 = vrot.slane %v1695, 2
        %v1702 = vrot.slane %v1696, 2
        %v1703 = vsel %vm791, %v1701, %v1702
        %v1704 = vrot.slane %v1697, 2
        %v1705 = vsel %vm791, %v1702, %v1704
        %1706 = vrot.lane.b32.xlu0 %v1703, 127
        %v1707 = vpop.permute.xlu0 %1706
        %1708 = vrot.lane.b32.xlu0 %v1705, 127
        %v1709 = vpop.permute.xlu0 %1708
        %v1712 = vadd.f32 %v1691, %v1707
        %v1713 = vadd.f32 %v1692, %v1709
        %s1714 = sld [smem:[#allocation3 + $0x19]]
        %v1715 = vstv %s1714
        %v1716 = vmul.f32 %v1715, %v356
        %v1717 = vmul.f32 %v1715, %v357
        %v1718 = vmul.f32 %v1715, %v358
        %v1722 = vrot.slane %v1716, 2
        %v1723 = vrot.slane %v1717, 2
        %v1724 = vsel %vm791, %v1722, %v1723
        %v1725 = vrot.slane %v1718, 2
        %v1726 = vsel %vm791, %v1723, %v1725
        %1727 = vrot.lane.b32.xlu0 %v1724, 127
        %v1728 = vpop.permute.xlu0 %1727
        %1729 = vrot.lane.b32.xlu0 %v1726, 127
        %v1730 = vpop.permute.xlu0 %1729
        %v1733 = vadd.f32 %v1712, %v1728
        %v1734 = vadd.f32 %v1713, %v1730
        %s1735 = sld [smem:[#allocation3 + $0x22]]
        %v1736 = vstv %s1735
        %v1737 = vmul.f32 %v1736, %v359
        %v1738 = vmul.f32 %v1736, %v360
        %v1739 = vmul.f32 %v1736, %v361
        %v1743 = vrot.slane %v1737, 2
        %v1744 = vrot.slane %v1738, 2
        %v1745 = vsel %vm791, %v1743, %v1744
        %v1746 = vrot.slane %v1739, 2
        %v1747 = vsel %vm791, %v1744, %v1746
        %1748 = vrot.lane.b32.xlu0 %v1745, 127
        %v1749 = vpop.permute.xlu0 %1748
        %1750 = vrot.lane.b32.xlu0 %v1747, 127
        %v1751 = vpop.permute.xlu0 %1750
        %v1754 = vadd.f32 %v1733, %v1749
        %v1755 = vadd.f32 %v1734, %v1751
        %s1756 = sld [smem:[#allocation3 + $0x2b]]
        %v1757 = vstv %s1756
        %v1758 = vmul.f32 %v1757, %v350
        %v1759 = vmul.f32 %v1757, %v351
        %v1760 = vmul.f32 %v1757, %v352
        %v1764 = vrot.slane %v1758, 2
        %v1765 = vrot.slane %v1759, 2
        %v1766 = vsel %vm791, %v1764, %v1765
        %v1767 = vrot.slane %v1760, 2
        %v1768 = vsel %vm791, %v1765, %v1767
        %1769 = vrot.lane.b32.xlu0 %v1766, 127
        %v1770 = vpop.permute.xlu0 %1769
        %1771 = vrot.lane.b32.xlu0 %v1768, 127
        %v1772 = vpop.permute.xlu0 %1771
        %v1775 = vadd.f32 %v1483, %v1770
        %v1776 = vadd.f32 %v1484, %v1772
        %s1777 = sld [smem:[#allocation3 + $0x34]]
        %v1778 = vstv %s1777
        %v1779 = vmul.f32 %v1778, %v353
        %v1780 = vmul.f32 %v1778, %v354
        %v1781 = vmul.f32 %v1778, %v355
        %v1785 = vrot.slane %v1779, 2
        %v1786 = vrot.slane %v1780, 2
        %v1787 = vsel %vm791, %v1785, %v1786
        %v1788 = vrot.slane %v1781, 2
        %v1789 = vsel %vm791, %v1786, %v1788
        %1790 = vrot.lane.b32.xlu0 %v1787, 127
        %v1791 = vpop.permute.xlu0 %1790
        %1792 = vrot.lane.b32.xlu0 %v1789, 127
        %v1793 = vpop.permute.xlu0 %1792
        %v1796 = vadd.f32 %v1775, %v1791
        %v1797 = vadd.f32 %v1776, %v1793
        %s1798 = sld [smem:[#allocation3 + $0x3d]]
        %v1799 = vstv %s1798
        %v1800 = vmul.f32 %v1799, %v356
        %v1801 = vmul.f32 %v1799, %v357
        %v1802 = vmul.f32 %v1799, %v358
        %v1806 = vrot.slane %v1800, 2
        %v1807 = vrot.slane %v1801, 2
        %v1808 = vsel %vm791, %v1806, %v1807
        %v1809 = vrot.slane %v1802, 2
        %v1810 = vsel %vm791, %v1807, %v1809
        %1811 = vrot.lane.b32.xlu0 %v1808, 127
        %v1812 = vpop.permute.xlu0 %1811
        %1813 = vrot.lane.b32.xlu0 %v1810, 127
        %v1814 = vpop.permute.xlu0 %1813
        %v1817 = vadd.f32 %v1796, %v1812
        %v1818 = vadd.f32 %v1797, %v1814
        %s1819 = sld [smem:[#allocation3 + $0x46]]
        %v1820 = vstv %s1819
        %v1821 = vmul.f32 %v1820, %v359
        %v1822 = vmul.f32 %v1820, %v360
        %v1823 = vmul.f32 %v1820, %v361
        %v1827 = vrot.slane %v1821, 2
        %v1828 = vrot.slane %v1822, 2
        %v1829 = vsel %vm791, %v1827, %v1828
        %v1830 = vrot.slane %v1823, 2
        %v1831 = vsel %vm791, %v1828, %v1830
        %1832 = vrot.lane.b32.xlu0 %v1829, 127
        %v1833 = vpop.permute.xlu0 %1832
        %1834 = vrot.lane.b32.xlu0 %v1831, 127
        %v1835 = vpop.permute.xlu0 %1834
        %v1838 = vadd.f32 %v1817, %v1833
        %v1839 = vadd.f32 %v1818, %v1835
        %s1840 = sld [smem:[#allocation3 + $0x4f]]
        %v1841 = vstv %s1840
        %v1842 = vmul.f32 %v1841, %v350
        %v1843 = vmul.f32 %v1841, %v351
        %v1844 = vmul.f32 %v1841, %v352
        %v1848 = vrot.slane %v1842, 2
        %v1849 = vrot.slane %v1843, 2
        %v1850 = vsel %vm791, %v1848, %v1849
        %v1851 = vrot.slane %v1844, 2
        %v1852 = vsel %vm791, %v1849, %v1851
        %1853 = vrot.lane.b32.xlu0 %v1850, 127
        %v1854 = vpop.permute.xlu0 %1853
        %1855 = vrot.lane.b32.xlu0 %v1852, 127
        %v1856 = vpop.permute.xlu0 %1855
        %v1859 = vadd.f32 %v1567, %v1854
        %v1860 = vadd.f32 %v1568, %v1856
        %s1861 = sld [smem:[#allocation3 + $0x58]]
        %v1862 = vstv %s1861
        %v1863 = vmul.f32 %v1862, %v353
        %v1864 = vmul.f32 %v1862, %v354
        %v1865 = vmul.f32 %v1862, %v355
        %v1869 = vrot.slane %v1863, 2
        %v1870 = vrot.slane %v1864, 2
        %v1871 = vsel %vm791, %v1869, %v1870
        %v1872 = vrot.slane %v1865, 2
        %v1873 = vsel %vm791, %v1870, %v1872
        %1874 = vrot.lane.b32.xlu0 %v1871, 127
        %v1875 = vpop.permute.xlu0 %1874
        %1876 = vrot.lane.b32.xlu0 %v1873, 127
        %v1877 = vpop.permute.xlu0 %1876
        %v1880 = vadd.f32 %v1859, %v1875
        %v1881 = vadd.f32 %v1860, %v1877
        %s1882 = sld [smem:[#allocation3 + $0x61]]
        %v1883 = vstv %s1882
        %v1884 = vmul.f32 %v1883, %v356
        %v1885 = vmul.f32 %v1883, %v357
        %v1886 = vmul.f32 %v1883, %v358
        %v1890 = vrot.slane %v1884, 2
        %v1891 = vrot.slane %v1885, 2
        %v1892 = vsel %vm791, %v1890, %v1891
        %v1893 = vrot.slane %v1886, 2
        %v1894 = vsel %vm791, %v1891, %v1893
        %1895 = vrot.lane.b32.xlu0 %v1892, 127
        %v1896 = vpop.permute.xlu0 %1895
        %1897 = vrot.lane.b32.xlu0 %v1894, 127
        %v1898 = vpop.permute.xlu0 %1897
        %v1901 = vadd.f32 %v1880, %v1896
        %v1902 = vadd.f32 %v1881, %v1898
        %s1903 = sld [smem:[#allocation3 + $0x6a]]
        %v1904 = vstv %s1903
        %v1905 = vmul.f32 %v1904, %v359
        %v1906 = vmul.f32 %v1904, %v360
        %v1907 = vmul.f32 %v1904, %v361
        %v1911 = vrot.slane %v1905, 2
        %v1912 = vrot.slane %v1906, 2
        %v1913 = vsel %vm791, %v1911, %v1912
        %v1914 = vrot.slane %v1907, 2
        %v1915 = vsel %vm791, %v1912, %v1914
        %1916 = vrot.lane.b32.xlu0 %v1913, 127
        %v1917 = vpop.permute.xlu0 %1916
        %1918 = vrot.lane.b32.xlu0 %v1915, 127
        %v1919 = vpop.permute.xlu0 %1918
        %v1922 = vadd.f32 %v1901, %v1917
        %v1923 = vadd.f32 %v1902, %v1919
        %s1924 = sld [smem:[#allocation3 + $0x73]]
        %v1925 = vstv %s1924
        %v1926 = vmul.f32 %v1925, %v350
        %v1927 = vmul.f32 %v1925, %v351
        %v1928 = vmul.f32 %v1925, %v352
        %v1932 = vrot.slane %v1926, 2
        %v1933 = vrot.slane %v1927, 2
        %v1934 = vsel %vm791, %v1932, %v1933
        %v1935 = vrot.slane %v1928, 2
        %v1936 = vsel %vm791, %v1933, %v1935
        %1937 = vrot.lane.b32.xlu0 %v1934, 127
        %v1938 = vpop.permute.xlu0 %1937
        %1939 = vrot.lane.b32.xlu0 %v1936, 127
        %v1940 = vpop.permute.xlu0 %1939
        %v1943 = vadd.f32 %v1651, %v1938
        %v1944 = vadd.f32 %v1652, %v1940
        %s1945 = sld [smem:[#allocation3 + $0x7c]]
        %v1946 = vstv %s1945
        %v1947 = vmul.f32 %v1946, %v353
        %v1948 = vmul.f32 %v1946, %v354
        %v1949 = vmul.f32 %v1946, %v355
        %v1953 = vrot.slane %v1947, 2
        %v1954 = vrot.slane %v1948, 2
        %v1955 = vsel %vm791, %v1953, %v1954
        %v1956 = vrot.slane %v1949, 2
        %v1957 = vsel %vm791, %v1954, %v1956
        %1958 = vrot.lane.b32.xlu0 %v1955, 127
        %v1959 = vpop.permute.xlu0 %1958
        %1960 = vrot.lane.b32.xlu0 %v1957, 127
        %v1961 = vpop.permute.xlu0 %1960
        %v1964 = vadd.f32 %v1943, %v1959
        %v1965 = vadd.f32 %v1944, %v1961
        %s1966 = sld [smem:[#allocation3 + $0x85]]
        %v1967 = vstv %s1966
        %v1968 = vmul.f32 %v1967, %v356
        %v1969 = vmul.f32 %v1967, %v357
        %v1970 = vmul.f32 %v1967, %v358
        %v1974 = vrot.slane %v1968, 2
        %v1975 = vrot.slane %v1969, 2
        %v1976 = vsel %vm791, %v1974, %v1975
        %v1977 = vrot.slane %v1970, 2
        %v1978 = vsel %vm791, %v1975, %v1977
        %1979 = vrot.lane.b32.xlu0 %v1976, 127
        %v1980 = vpop.permute.xlu0 %1979
        %1981 = vrot.lane.b32.xlu0 %v1978, 127
        %v1982 = vpop.permute.xlu0 %1981
        %v1985 = vadd.f32 %v1964, %v1980
        %v1986 = vadd.f32 %v1965, %v1982
        %s1987 = sld [smem:[#allocation3 + $0x8e]]
        %v1988 = vstv %s1987
        %v1989 = vmul.f32 %v1988, %v359
        %v1990 = vmul.f32 %v1988, %v360
        %v1991 = vmul.f32 %v1988, %v361
        %v1995 = vrot.slane %v1989, 2
        %v1996 = vrot.slane %v1990, 2
        %v1997 = vsel %vm791, %v1995, %v1996
        %v1998 = vrot.slane %v1991, 2
        %v1999 = vsel %vm791, %v1996, %v1998
        %2000 = vrot.lane.b32.xlu0 %v1997, 127
        %v2001 = vpop.permute.xlu0 %2000
        %2002 = vrot.lane.b32.xlu0 %v1999, 127
        %v2003 = vpop.permute.xlu0 %2002
        %v2006 = vadd.f32 %v1985, %v2001
        %v2007 = vadd.f32 %v1986, %v2003
        %2008 = vrot.lane.b32.xlu0 %v396, 126
        %v2009 = vpop.permute.xlu0 %2008
        %2010 = vrot.lane.b32.xlu0 %v397, 126
        %v2011 = vpop.permute.xlu0 %2010
        %v2014 = vadd.f32 %v799, %v2009
        %v2015 = vadd.f32 %v800, %v2011
        %2016 = vrot.lane.b32.xlu0 %v399, 126
        %v2017 = vpop.permute.xlu0 %2016
        %2018 = vrot.lane.b32.xlu0 %v400, 126
        %v2019 = vpop.permute.xlu0 %2018
        %v2022 = vadd.f32 %v1670, %v2017
        %v2023 = vadd.f32 %v1671, %v2019
        %s2024 = sld [smem:[#allocation3 + $0x2]]
        %v2025 = vstv %s2024
        %v2026 = vmul.f32 %v2025, %v350
        %v2027 = vmul.f32 %v2025, %v351
        %2030 = vrot.lane.b32.xlu0 %v2026, 126
        %v2031 = vpop.permute.xlu0 %2030
        %2032 = vrot.lane.b32.xlu0 %v2027, 126
        %v2033 = vpop.permute.xlu0 %2032
        %v2036 = vadd.f32 %v1754, %v2031
        %v2037 = vadd.f32 %v1755, %v2033
        %s2038 = sld [smem:[#allocation3 + $0xb]]
        %v2039 = vstv %s2038
        %v2040 = vmul.f32 %v2039, %v353
        %v2041 = vmul.f32 %v2039, %v354
        %2044 = vrot.lane.b32.xlu0 %v2040, 126
        %v2045 = vpop.permute.xlu0 %2044
        %2046 = vrot.lane.b32.xlu0 %v2041, 126
        %v2047 = vpop.permute.xlu0 %2046
        %v2050 = vadd.f32 %v2036, %v2045
        %v2051 = vadd.f32 %v2037, %v2047
        %s2052 = sld [smem:[#allocation3 + $0x14]]
        %v2053 = vstv %s2052
        %v2054 = vmul.f32 %v2053, %v356
        %v2055 = vmul.f32 %v2053, %v357
        %2058 = vrot.lane.b32.xlu0 %v2054, 126
        %v2059 = vpop.permute.xlu0 %2058
        %2060 = vrot.lane.b32.xlu0 %v2055, 126
        %v2061 = vpop.permute.xlu0 %2060
        %v2064 = vadd.f32 %v2050, %v2059
        %v2065 = vadd.f32 %v2051, %v2061
        %s2066 = sld [smem:[#allocation3 + $0x1d]]
        %v2067 = vstv %s2066
        %v2068 = vmul.f32 %v2067, %v359
        %v2069 = vmul.f32 %v2067, %v360
        %2072 = vrot.lane.b32.xlu0 %v2068, 126
        %v2073 = vpop.permute.xlu0 %2072
        %2074 = vrot.lane.b32.xlu0 %v2069, 126
        %v2075 = vpop.permute.xlu0 %2074
        %v2078 = vadd.f32 %v2064, %v2073
        %v2079 = vadd.f32 %v2065, %v2075
        %s2080 = sld [smem:[#allocation3 + $0x26]]
        %v2081 = vstv %s2080
        %v2082 = vmul.f32 %v2081, %v350
        %v2083 = vmul.f32 %v2081, %v351
        %2086 = vrot.lane.b32.xlu0 %v2082, 126
        %v2087 = vpop.permute.xlu0 %2086
        %2088 = vrot.lane.b32.xlu0 %v2083, 126
        %v2089 = vpop.permute.xlu0 %2088
        %v2092 = vadd.f32 %v1838, %v2087
        %v2093 = vadd.f32 %v1839, %v2089
        %s2094 = sld [smem:[#allocation3 + $0x2f]]
        %v2095 = vstv %s2094
        %v2096 = vmul.f32 %v2095, %v353
        %v2097 = vmul.f32 %v2095, %v354
        %2100 = vrot.lane.b32.xlu0 %v2096, 126
        %v2101 = vpop.permute.xlu0 %2100
        %2102 = vrot.lane.b32.xlu0 %v2097, 126
        %v2103 = vpop.permute.xlu0 %2102
        %v2106 = vadd.f32 %v2092, %v2101
        %v2107 = vadd.f32 %v2093, %v2103
        %s2108 = sld [smem:[#allocation3 + $0x38]]
        %v2109 = vstv %s2108
        %v2110 = vmul.f32 %v2109, %v356
        %v2111 = vmul.f32 %v2109, %v357
        %2114 = vrot.lane.b32.xlu0 %v2110, 126
        %v2115 = vpop.permute.xlu0 %2114
        %2116 = vrot.lane.b32.xlu0 %v2111, 126
        %v2117 = vpop.permute.xlu0 %2116
        %v2120 = vadd.f32 %v2106, %v2115
        %v2121 = vadd.f32 %v2107, %v2117
        %s2122 = sld [smem:[#allocation3 + $0x41]]
        %v2123 = vstv %s2122
        %v2124 = vmul.f32 %v2123, %v359
        %v2125 = vmul.f32 %v2123, %v360
        %2128 = vrot.lane.b32.xlu0 %v2124, 126
        %v2129 = vpop.permute.xlu0 %2128
        %2130 = vrot.lane.b32.xlu0 %v2125, 126
        %v2131 = vpop.permute.xlu0 %2130
        %v2134 = vadd.f32 %v2120, %v2129
        %v2135 = vadd.f32 %v2121, %v2131
        %s2136 = sld [smem:[#allocation3 + $0x4a]]
        %v2137 = vstv %s2136
        %v2138 = vmul.f32 %v2137, %v350
        %v2139 = vmul.f32 %v2137, %v351
        %2142 = vrot.lane.b32.xlu0 %v2138, 126
        %v2143 = vpop.permute.xlu0 %2142
        %2144 = vrot.lane.b32.xlu0 %v2139, 126
        %v2145 = vpop.permute.xlu0 %2144
        %v2148 = vadd.f32 %v1922, %v2143
        %v2149 = vadd.f32 %v1923, %v2145
        %s2150 = sld [smem:[#allocation3 + $0x53]]
        %v2151 = vstv %s2150
        %v2152 = vmul.f32 %v2151, %v353
        %v2153 = vmul.f32 %v2151, %v354
        %2156 = vrot.lane.b32.xlu0 %v2152, 126
        %v2157 = vpop.permute.xlu0 %2156
        %2158 = vrot.lane.b32.xlu0 %v2153, 126
        %v2159 = vpop.permute.xlu0 %2158
        %v2162 = vadd.f32 %v2148, %v2157
        %v2163 = vadd.f32 %v2149, %v2159
        %s2164 = sld [smem:[#allocation3 + $0x5c]]
        %v2165 = vstv %s2164
        %v2166 = vmul.f32 %v2165, %v356
        %v2167 = vmul.f32 %v2165, %v357
        %2170 = vrot.lane.b32.xlu0 %v2166, 126
        %v2171 = vpop.permute.xlu0 %2170
        %2172 = vrot.lane.b32.xlu0 %v2167, 126
        %v2173 = vpop.permute.xlu0 %2172
        %v2176 = vadd.f32 %v2162, %v2171
        %v2177 = vadd.f32 %v2163, %v2173
        %s2178 = sld [smem:[#allocation3 + $0x65]]
        %v2179 = vstv %s2178
        %v2180 = vmul.f32 %v2179, %v359
        %v2181 = vmul.f32 %v2179, %v360
        %2184 = vrot.lane.b32.xlu0 %v2180, 126
        %v2185 = vpop.permute.xlu0 %2184
        %2186 = vrot.lane.b32.xlu0 %v2181, 126
        %v2187 = vpop.permute.xlu0 %2186
        %v2190 = vadd.f32 %v2176, %v2185
        %v2191 = vadd.f32 %v2177, %v2187
        %s2192 = sld [smem:[#allocation3 + $0x6e]]
        %v2193 = vstv %s2192
        %v2194 = vmul.f32 %v2193, %v350
        %v2195 = vmul.f32 %v2193, %v351
        %2198 = vrot.lane.b32.xlu0 %v2194, 126
        %v2199 = vpop.permute.xlu0 %2198
        %2200 = vrot.lane.b32.xlu0 %v2195, 126
        %v2201 = vpop.permute.xlu0 %2200
        %v2204 = vadd.f32 %v2006, %v2199
        %v2205 = vadd.f32 %v2007, %v2201
        %s2206 = sld [smem:[#allocation3 + $0x77]]
        %v2207 = vstv %s2206
        %v2208 = vmul.f32 %v2207, %v353
        %v2209 = vmul.f32 %v2207, %v354
        %2212 = vrot.lane.b32.xlu0 %v2208, 126
        %v2213 = vpop.permute.xlu0 %2212
        %2214 = vrot.lane.b32.xlu0 %v2209, 126
        %v2215 = vpop.permute.xlu0 %2214
        %v2218 = vadd.f32 %v2204, %v2213
        %v2219 = vadd.f32 %v2205, %v2215
        %s2220 = sld [smem:[#allocation3 + $0x80]]
        %v2221 = vstv %s2220
        %v2222 = vmul.f32 %v2221, %v356
        %v2223 = vmul.f32 %v2221, %v357
        %2226 = vrot.lane.b32.xlu0 %v2222, 126
        %v2227 = vpop.permute.xlu0 %2226
        %2228 = vrot.lane.b32.xlu0 %v2223, 126
        %v2229 = vpop.permute.xlu0 %2228
        %v2232 = vadd.f32 %v2218, %v2227
        %v2233 = vadd.f32 %v2219, %v2229
        %s2234 = sld [smem:[#allocation3 + $0x89]]
        %v2235 = vstv %s2234
        %v2236 = vmul.f32 %v2235, %v359
        %v2237 = vmul.f32 %v2235, %v360
        %2240 = vrot.lane.b32.xlu0 %v2236, 126
        %v2241 = vpop.permute.xlu0 %2240
        %2242 = vrot.lane.b32.xlu0 %v2237, 126
        %v2243 = vpop.permute.xlu0 %2242
        %v2246 = vadd.f32 %v2232, %v2241
        %v2247 = vadd.f32 %v2233, %v2243
        %v2248 = vrot.slane %v1653, 1
        %v2249 = vrot.slane %v1654, 1
        %v2250 = vsel %vm505, %v2248, %v2249
        %v2251 = vrot.slane %v1655, 1
        %v2252 = vsel %vm505, %v2249, %v2251
        %2253 = vrot.lane.b32.xlu0 %v2250, 126
        %v2254 = vpop.permute.xlu0 %2253
        %2255 = vrot.lane.b32.xlu0 %v2252, 126
        %v2256 = vpop.permute.xlu0 %2255
        %v2259 = vadd.f32 %v2014, %v2254
        %v2260 = vadd.f32 %v2015, %v2256
        %s2261 = sld [smem:[#allocation3 + $0x5]]
        %v2262 = vstv %s2261
        %v2263 = vmul.f32 %v2262, %v350
        %v2264 = vmul.f32 %v2262, %v351
        %v2265 = vmul.f32 %v2262, %v352
        %v2269 = vrot.slane %v2263, 1
        %v2270 = vrot.slane %v2264, 1
        %v2271 = vsel %vm505, %v2269, %v2270
        %v2272 = vrot.slane %v2265, 1
        %v2273 = vsel %vm505, %v2270, %v2272
        %2274 = vrot.lane.b32.xlu0 %v2271, 126
        %v2275 = vpop.permute.xlu0 %2274
        %2276 = vrot.lane.b32.xlu0 %v2273, 126
        %v2277 = vpop.permute.xlu0 %2276
        %v2280 = vadd.f32 %v2078, %v2275
        %v2281 = vadd.f32 %v2079, %v2277
        %s2282 = sld [smem:[#allocation3 + $0xe]]
        %v2283 = vstv %s2282
        %v2284 = vmul.f32 %v2283, %v353
        %v2285 = vmul.f32 %v2283, %v354
        %v2286 = vmul.f32 %v2283, %v355
        %v2290 = vrot.slane %v2284, 1
        %v2291 = vrot.slane %v2285, 1
        %v2292 = vsel %vm505, %v2290, %v2291
        %v2293 = vrot.slane %v2286, 1
        %v2294 = vsel %vm505, %v2291, %v2293
        %2295 = vrot.lane.b32.xlu0 %v2292, 126
        %v2296 = vpop.permute.xlu0 %2295
        %2297 = vrot.lane.b32.xlu0 %v2294, 126
        %v2298 = vpop.permute.xlu0 %2297
        %v2301 = vadd.f32 %v2280, %v2296
        %v2302 = vadd.f32 %v2281, %v2298
        %s2303 = sld [smem:[#allocation3 + $0x17]]
        %v2304 = vstv %s2303
        %v2305 = vmul.f32 %v2304, %v356
        %v2306 = vmul.f32 %v2304, %v357
        %v2307 = vmul.f32 %v2304, %v358
        %v2311 = vrot.slane %v2305, 1
        %v2312 = vrot.slane %v2306, 1
        %v2313 = vsel %vm505, %v2311, %v2312
        %v2314 = vrot.slane %v2307, 1
        %v2315 = vsel %vm505, %v2312, %v2314
        %2316 = vrot.lane.b32.xlu0 %v2313, 126
        %v2317 = vpop.permute.xlu0 %2316
        %2318 = vrot.lane.b32.xlu0 %v2315, 126
        %v2319 = vpop.permute.xlu0 %2318
        %v2322 = vadd.f32 %v2301, %v2317
        %v2323 = vadd.f32 %v2302, %v2319
        %s2324 = sld [smem:[#allocation3 + $0x20]]
        %v2325 = vstv %s2324
        %v2326 = vmul.f32 %v2325, %v359
        %v2327 = vmul.f32 %v2325, %v360
        %v2328 = vmul.f32 %v2325, %v361
        %v2332 = vrot.slane %v2326, 1
        %v2333 = vrot.slane %v2327, 1
        %v2334 = vsel %vm505, %v2332, %v2333
        %v2335 = vrot.slane %v2328, 1
        %v2336 = vsel %vm505, %v2333, %v2335
        %2337 = vrot.lane.b32.xlu0 %v2334, 126
        %v2338 = vpop.permute.xlu0 %2337
        %2339 = vrot.lane.b32.xlu0 %v2336, 126
        %v2340 = vpop.permute.xlu0 %2339
        %v2343 = vadd.f32 %v2322, %v2338
        %v2344 = vadd.f32 %v2323, %v2340
        %s2345 = sld [smem:[#allocation3 + $0x29]]
        %v2346 = vstv %s2345
        %v2347 = vmul.f32 %v2346, %v350
        %v2348 = vmul.f32 %v2346, %v351
        %v2349 = vmul.f32 %v2346, %v352
        %v2353 = vrot.slane %v2347, 1
        %v2354 = vrot.slane %v2348, 1
        %v2355 = vsel %vm505, %v2353, %v2354
        %v2356 = vrot.slane %v2349, 1
        %v2357 = vsel %vm505, %v2354, %v2356
        %2358 = vrot.lane.b32.xlu0 %v2355, 126
        %v2359 = vpop.permute.xlu0 %2358
        %2360 = vrot.lane.b32.xlu0 %v2357, 126
        %v2361 = vpop.permute.xlu0 %2360
        %v2364 = vadd.f32 %v2134, %v2359
        %v2365 = vadd.f32 %v2135, %v2361
        %s2366 = sld [smem:[#allocation3 + $0x32]]
        %v2367 = vstv %s2366
        %v2368 = vmul.f32 %v2367, %v353
        %v2369 = vmul.f32 %v2367, %v354
        %v2370 = vmul.f32 %v2367, %v355
        %v2374 = vrot.slane %v2368, 1
        %v2375 = vrot.slane %v2369, 1
        %v2376 = vsel %vm505, %v2374, %v2375
        %v2377 = vrot.slane %v2370, 1
        %v2378 = vsel %vm505, %v2375, %v2377
        %2379 = vrot.lane.b32.xlu0 %v2376, 126
        %v2380 = vpop.permute.xlu0 %2379
        %2381 = vrot.lane.b32.xlu0 %v2378, 126
        %v2382 = vpop.permute.xlu0 %2381
        %v2385 = vadd.f32 %v2364, %v2380
        %v2386 = vadd.f32 %v2365, %v2382
        %s2387 = sld [smem:[#allocation3 + $0x3b]]
        %v2388 = vstv %s2387
        %v2389 = vmul.f32 %v2388, %v356
        %v2390 = vmul.f32 %v2388, %v357
        %v2391 = vmul.f32 %v2388, %v358
        %v2395 = vrot.slane %v2389, 1
        %v2396 = vrot.slane %v2390, 1
        %v2397 = vsel %vm505, %v2395, %v2396
        %v2398 = vrot.slane %v2391, 1
        %v2399 = vsel %vm505, %v2396, %v2398
        %2400 = vrot.lane.b32.xlu0 %v2397, 126
        %v2401 = vpop.permute.xlu0 %2400
        %2402 = vrot.lane.b32.xlu0 %v2399, 126
        %v2403 = vpop.permute.xlu0 %2402
        %v2406 = vadd.f32 %v2385, %v2401
        %v2407 = vadd.f32 %v2386, %v2403
        %s2408 = sld [smem:[#allocation3 + $0x44]]
        %v2409 = vstv %s2408
        %v2410 = vmul.f32 %v2409, %v359
        %v2411 = vmul.f32 %v2409, %v360
        %v2412 = vmul.f32 %v2409, %v361
        %v2416 = vrot.slane %v2410, 1
        %v2417 = vrot.slane %v2411, 1
        %v2418 = vsel %vm505, %v2416, %v2417
        %v2419 = vrot.slane %v2412, 1
        %v2420 = vsel %vm505, %v2417, %v2419
        %2421 = vrot.lane.b32.xlu0 %v2418, 126
        %v2422 = vpop.permute.xlu0 %2421
        %2423 = vrot.lane.b32.xlu0 %v2420, 126
        %v2424 = vpop.permute.xlu0 %2423
        %v2427 = vadd.f32 %v2406, %v2422
        %v2428 = vadd.f32 %v2407, %v2424
        %s2429 = sld [smem:[#allocation3 + $0x4d]]
        %v2430 = vstv %s2429
        %v2431 = vmul.f32 %v2430, %v350
        %v2432 = vmul.f32 %v2430, %v351
        %v2433 = vmul.f32 %v2430, %v352
        %v2437 = vrot.slane %v2431, 1
        %v2438 = vrot.slane %v2432, 1
        %v2439 = vsel %vm505, %v2437, %v2438
        %v2440 = vrot.slane %v2433, 1
        %v2441 = vsel %vm505, %v2438, %v2440
        %2442 = vrot.lane.b32.xlu0 %v2439, 126
        %v2443 = vpop.permute.xlu0 %2442
        %2444 = vrot.lane.b32.xlu0 %v2441, 126
        %v2445 = vpop.permute.xlu0 %2444
        %v2448 = vadd.f32 %v2190, %v2443
        %v2449 = vadd.f32 %v2191, %v2445
        %s2450 = sld [smem:[#allocation3 + $0x56]]
        %v2451 = vstv %s2450
        %v2452 = vmul.f32 %v2451, %v353
        %v2453 = vmul.f32 %v2451, %v354
        %v2454 = vmul.f32 %v2451, %v355
        %v2458 = vrot.slane %v2452, 1
        %v2459 = vrot.slane %v2453, 1
        %v2460 = vsel %vm505, %v2458, %v2459
        %v2461 = vrot.slane %v2454, 1
        %v2462 = vsel %vm505, %v2459, %v2461
        %2463 = vrot.lane.b32.xlu0 %v2460, 126
        %v2464 = vpop.permute.xlu0 %2463
        %2465 = vrot.lane.b32.xlu0 %v2462, 126
        %v2466 = vpop.permute.xlu0 %2465
        %v2469 = vadd.f32 %v2448, %v2464
        %v2470 = vadd.f32 %v2449, %v2466
        %s2471 = sld [smem:[#allocation3 + $0x5f]]
        %v2472 = vstv %s2471
        %v2473 = vmul.f32 %v2472, %v356
        %v2474 = vmul.f32 %v2472, %v357
        %v2475 = vmul.f32 %v2472, %v358
        %v2479 = vrot.slane %v2473, 1
        %v2480 = vrot.slane %v2474, 1
        %v2481 = vsel %vm505, %v2479, %v2480
        %v2482 = vrot.slane %v2475, 1
        %v2483 = vsel %vm505, %v2480, %v2482
        %2484 = vrot.lane.b32.xlu0 %v2481, 126
        %v2485 = vpop.permute.xlu0 %2484
        %2486 = vrot.lane.b32.xlu0 %v2483, 126
        %v2487 = vpop.permute.xlu0 %2486
        %v2490 = vadd.f32 %v2469, %v2485
        %v2491 = vadd.f32 %v2470, %v2487
        %s2492 = sld [smem:[#allocation3 + $0x68]]
        %v2493 = vstv %s2492
        %v2494 = vmul.f32 %v2493, %v359
        %v2495 = vmul.f32 %v2493, %v360
        %v2496 = vmul.f32 %v2493, %v361
        %v2500 = vrot.slane %v2494, 1
        %v2501 = vrot.slane %v2495, 1
        %v2502 = vsel %vm505, %v2500, %v2501
        %v2503 = vrot.slane %v2496, 1
        %v2504 = vsel %vm505, %v2501, %v2503
        %2505 = vrot.lane.b32.xlu0 %v2502, 126
        %v2506 = vpop.permute.xlu0 %2505
        %2507 = vrot.lane.b32.xlu0 %v2504, 126
        %v2508 = vpop.permute.xlu0 %2507
        %v2511 = vadd.f32 %v2490, %v2506
        %v2512 = vadd.f32 %v2491, %v2508
        %s2513 = sld [smem:[#allocation3 + $0x71]]
        %v2514 = vstv %s2513
        %v2515 = vmul.f32 %v2514, %v350
        %v2516 = vmul.f32 %v2514, %v351
        %v2517 = vmul.f32 %v2514, %v352
        %v2521 = vrot.slane %v2515, 1
        %v2522 = vrot.slane %v2516, 1
        %v2523 = vsel %vm505, %v2521, %v2522
        %v2524 = vrot.slane %v2517, 1
        %v2525 = vsel %vm505, %v2522, %v2524
        %2526 = vrot.lane.b32.xlu0 %v2523, 126
        %v2527 = vpop.permute.xlu0 %2526
        %2528 = vrot.lane.b32.xlu0 %v2525, 126
        %v2529 = vpop.permute.xlu0 %2528
        %v2532 = vadd.f32 %v2246, %v2527
        %v2533 = vadd.f32 %v2247, %v2529
        %s2534 = sld [smem:[#allocation3 + $0x7a]]
        %v2535 = vstv %s2534
        %v2536 = vmul.f32 %v2535, %v353
        %v2537 = vmul.f32 %v2535, %v354
        %v2538 = vmul.f32 %v2535, %v355
        %v2542 = vrot.slane %v2536, 1
        %v2543 = vrot.slane %v2537, 1
        %v2544 = vsel %vm505, %v2542, %v2543
        %v2545 = vrot.slane %v2538, 1
        %v2546 = vsel %vm505, %v2543, %v2545
        %2547 = vrot.lane.b32.xlu0 %v2544, 126
        %v2548 = vpop.permute.xlu0 %2547
        %2549 = vrot.lane.b32.xlu0 %v2546, 126
        %v2550 = vpop.permute.xlu0 %2549
        %v2553 = vadd.f32 %v2532, %v2548
        %v2554 = vadd.f32 %v2533, %v2550
        %s2555 = sld [smem:[#allocation3 + $0x83]]
        %v2556 = vstv %s2555
        %v2557 = vmul.f32 %v2556, %v356
        %v2558 = vmul.f32 %v2556, %v357
        %v2559 = vmul.f32 %v2556, %v358
        %v2563 = vrot.slane %v2557, 1
        %v2564 = vrot.slane %v2558, 1
        %v2565 = vsel %vm505, %v2563, %v2564
        %v2566 = vrot.slane %v2559, 1
        %v2567 = vsel %vm505, %v2564, %v2566
        %2568 = vrot.lane.b32.xlu0 %v2565, 126
        %v2569 = vpop.permute.xlu0 %2568
        %2570 = vrot.lane.b32.xlu0 %v2567, 126
        %v2571 = vpop.permute.xlu0 %2570
        %v2574 = vadd.f32 %v2553, %v2569
        %v2575 = vadd.f32 %v2554, %v2571
        %s2576 = sld [smem:[#allocation3 + $0x8c]]
        %v2577 = vstv %s2576
        %v2578 = vmul.f32 %v2577, %v359
        %v2579 = vmul.f32 %v2577, %v360
        %v2580 = vmul.f32 %v2577, %v361
        %v2584 = vrot.slane %v2578, 1
        %v2585 = vrot.slane %v2579, 1
        %v2586 = vsel %vm505, %v2584, %v2585
        %v2587 = vrot.slane %v2580, 1
        %v2588 = vsel %vm505, %v2585, %v2587
        %2589 = vrot.lane.b32.xlu0 %v2586, 126
        %v2590 = vpop.permute.xlu0 %2589
        %2591 = vrot.lane.b32.xlu0 %v2588, 126
        %v2592 = vpop.permute.xlu0 %2591
        %v2595 = vadd.f32 %v2574, %v2590
        %v2596 = vadd.f32 %v2575, %v2592
        %2597 = vrot.lane.b32.xlu0 %v806, 126
        %v2598 = vpop.permute.xlu0 %2597
        %2599 = vrot.lane.b32.xlu0 %v808, 126
        %v2600 = vpop.permute.xlu0 %2599
        %v2603 = vadd.f32 %v2259, %v2598
        %v2604 = vadd.f32 %v2260, %v2600
        %v2605 = vadd.f32 %v2022, %v2598
        %v2606 = vadd.f32 %v2023, %v2600
        %s2607 = sld [smem:[#allocation3 + $0x8]]
        %v2608 = vstv %s2607
        %v2609 = vmul.f32 %v2608, %v350
        %v2610 = vmul.f32 %v2608, %v351
        %v2611 = vmul.f32 %v2608, %v352
        %v2615 = vrot.slane %v2609, 2
        %v2616 = vrot.slane %v2610, 2
        %v2617 = vsel %vm791, %v2615, %v2616
        %v2618 = vrot.slane %v2611, 2
        %v2619 = vsel %vm791, %v2616, %v2618
        %2620 = vrot.lane.b32.xlu0 %v2617, 126
        %v2621 = vpop.permute.xlu0 %2620
        %2622 = vrot.lane.b32.xlu0 %v2619, 126
        %v2623 = vpop.permute.xlu0 %2622
        %v2626 = vadd.f32 %v2343, %v2621
        %v2627 = vadd.f32 %v2344, %v2623
        %s2628 = sld [smem:[#allocation3 + $0x11]]
        %v2629 = vstv %s2628
        %v2630 = vmul.f32 %v2629, %v353
        %v2631 = vmul.f32 %v2629, %v354
        %v2632 = vmul.f32 %v2629, %v355
        %v2636 = vrot.slane %v2630, 2
        %v2637 = vrot.slane %v2631, 2
        %v2638 = vsel %vm791, %v2636, %v2637
        %v2639 = vrot.slane %v2632, 2
        %v2640 = vsel %vm791, %v2637, %v2639
        %2641 = vrot.lane.b32.xlu0 %v2638, 126
        %v2642 = vpop.permute.xlu0 %2641
        %2643 = vrot.lane.b32.xlu0 %v2640, 126
        %v2644 = vpop.permute.xlu0 %2643
        %v2647 = vadd.f32 %v2626, %v2642
        %v2648 = vadd.f32 %v2627, %v2644
        %s2649 = sld [smem:[#allocation3 + $0x1a]]
        %v2650 = vstv %s2649
        %v2651 = vmul.f32 %v2650, %v356
        %v2652 = vmul.f32 %v2650, %v357
        %v2653 = vmul.f32 %v2650, %v358
        %v2657 = vrot.slane %v2651, 2
        %v2658 = vrot.slane %v2652, 2
        %v2659 = vsel %vm791, %v2657, %v2658
        %v2660 = vrot.slane %v2653, 2
        %v2661 = vsel %vm791, %v2658, %v2660
        %2662 = vrot.lane.b32.xlu0 %v2659, 126
        %v2663 = vpop.permute.xlu0 %2662
        %2664 = vrot.lane.b32.xlu0 %v2661, 126
        %v2665 = vpop.permute.xlu0 %2664
        %v2668 = vadd.f32 %v2647, %v2663
        %v2669 = vadd.f32 %v2648, %v2665
        %s2670 = sld [smem:[#allocation3 + $0x23]]
        %v2671 = vstv %s2670
        %v2672 = vmul.f32 %v2671, %v359
        %v2673 = vmul.f32 %v2671, %v360
        %v2674 = vmul.f32 %v2671, %v361
        %v2678 = vrot.slane %v2672, 2
        %v2679 = vrot.slane %v2673, 2
        %v2680 = vsel %vm791, %v2678, %v2679
        %v2681 = vrot.slane %v2674, 2
        %v2682 = vsel %vm791, %v2679, %v2681
        %2683 = vrot.lane.b32.xlu0 %v2680, 126
        %v2684 = vpop.permute.xlu0 %2683
        %2685 = vrot.lane.b32.xlu0 %v2682, 126
        %v2686 = vpop.permute.xlu0 %2685
        %v2689 = vadd.f32 %v2668, %v2684
        %v2690 = vadd.f32 %v2669, %v2686
        %s2691 = sld [smem:[#allocation3 + $0x2c]]
        %v2692 = vstv %s2691
        %v2693 = vmul.f32 %v2692, %v350
        %v2694 = vmul.f32 %v2692, %v351
        %v2695 = vmul.f32 %v2692, %v352
        %v2699 = vrot.slane %v2693, 2
        %v2700 = vrot.slane %v2694, 2
        %v2701 = vsel %vm791, %v2699, %v2700
        %v2702 = vrot.slane %v2695, 2
        %v2703 = vsel %vm791, %v2700, %v2702
        %2704 = vrot.lane.b32.xlu0 %v2701, 126
        %v2705 = vpop.permute.xlu0 %2704
        %2706 = vrot.lane.b32.xlu0 %v2703, 126
        %v2707 = vpop.permute.xlu0 %2706
        %v2710 = vadd.f32 %v2427, %v2705
        %v2711 = vadd.f32 %v2428, %v2707
        %s2712 = sld [smem:[#allocation3 + $0x35]]
        %v2713 = vstv %s2712
        %v2714 = vmul.f32 %v2713, %v353
        %v2715 = vmul.f32 %v2713, %v354
        %v2716 = vmul.f32 %v2713, %v355
        %v2720 = vrot.slane %v2714, 2
        %v2721 = vrot.slane %v2715, 2
        %v2722 = vsel %vm791, %v2720, %v2721
        %v2723 = vrot.slane %v2716, 2
        %v2724 = vsel %vm791, %v2721, %v2723
        %2725 = vrot.lane.b32.xlu0 %v2722, 126
        %v2726 = vpop.permute.xlu0 %2725
        %2727 = vrot.lane.b32.xlu0 %v2724, 126
        %v2728 = vpop.permute.xlu0 %2727
        %v2731 = vadd.f32 %v2710, %v2726
        %v2732 = vadd.f32 %v2711, %v2728
        %s2733 = sld [smem:[#allocation3 + $0x3e]]
        %v2734 = vstv %s2733
        %v2735 = vmul.f32 %v2734, %v356
        %v2736 = vmul.f32 %v2734, %v357
        %v2737 = vmul.f32 %v2734, %v358
        %v2741 = vrot.slane %v2735, 2
        %v2742 = vrot.slane %v2736, 2
        %v2743 = vsel %vm791, %v2741, %v2742
        %v2744 = vrot.slane %v2737, 2
        %v2745 = vsel %vm791, %v2742, %v2744
        %2746 = vrot.lane.b32.xlu0 %v2743, 126
        %v2747 = vpop.permute.xlu0 %2746
        %2748 = vrot.lane.b32.xlu0 %v2745, 126
        %v2749 = vpop.permute.xlu0 %2748
        %v2752 = vadd.f32 %v2731, %v2747
        %v2753 = vadd.f32 %v2732, %v2749
        %s2754 = sld [smem:[#allocation3 + $0x47]]
        %v2755 = vstv %s2754
        %v2756 = vmul.f32 %v2755, %v359
        %v2757 = vmul.f32 %v2755, %v360
        %v2758 = vmul.f32 %v2755, %v361
        %v2762 = vrot.slane %v2756, 2
        %v2763 = vrot.slane %v2757, 2
        %v2764 = vsel %vm791, %v2762, %v2763
        %v2765 = vrot.slane %v2758, 2
        %v2766 = vsel %vm791, %v2763, %v2765
        %2767 = vrot.lane.b32.xlu0 %v2764, 126
        %v2768 = vpop.permute.xlu0 %2767
        %2769 = vrot.lane.b32.xlu0 %v2766, 126
        %v2770 = vpop.permute.xlu0 %2769
        %v2773 = vadd.f32 %v2752, %v2768
        %v2774 = vadd.f32 %v2753, %v2770
        %s2775 = sld [smem:[#allocation3 + $0x50]]
        %v2776 = vstv %s2775
        %v2777 = vmul.f32 %v2776, %v350
        %v2778 = vmul.f32 %v2776, %v351
        %v2779 = vmul.f32 %v2776, %v352
        %v2783 = vrot.slane %v2777, 2
        %v2784 = vrot.slane %v2778, 2
        %v2785 = vsel %vm791, %v2783, %v2784
        %v2786 = vrot.slane %v2779, 2
        %v2787 = vsel %vm791, %v2784, %v2786
        %2788 = vrot.lane.b32.xlu0 %v2785, 126
        %v2789 = vpop.permute.xlu0 %2788
        %2790 = vrot.lane.b32.xlu0 %v2787, 126
        %v2791 = vpop.permute.xlu0 %2790
        %v2794 = vadd.f32 %v2511, %v2789
        %v2795 = vadd.f32 %v2512, %v2791
        %s2796 = sld [smem:[#allocation3 + $0x59]]
        %v2797 = vstv %s2796
        %v2798 = vmul.f32 %v2797, %v353
        %v2799 = vmul.f32 %v2797, %v354
        %v2800 = vmul.f32 %v2797, %v355
        %v2804 = vrot.slane %v2798, 2
        %v2805 = vrot.slane %v2799, 2
        %v2806 = vsel %vm791, %v2804, %v2805
        %v2807 = vrot.slane %v2800, 2
        %v2808 = vsel %vm791, %v2805, %v2807
        %2809 = vrot.lane.b32.xlu0 %v2806, 126
        %v2810 = vpop.permute.xlu0 %2809
        %2811 = vrot.lane.b32.xlu0 %v2808, 126
        %v2812 = vpop.permute.xlu0 %2811
        %v2815 = vadd.f32 %v2794, %v2810
        %v2816 = vadd.f32 %v2795, %v2812
        %s2817 = sld [smem:[#allocation3 + $0x62]]
        %v2818 = vstv %s2817
        %v2819 = vmul.f32 %v2818, %v356
        %v2820 = vmul.f32 %v2818, %v357
        %v2821 = vmul.f32 %v2818, %v358
        %v2825 = vrot.slane %v2819, 2
        %v2826 = vrot.slane %v2820, 2
        %v2827 = vsel %vm791, %v2825, %v2826
        %v2828 = vrot.slane %v2821, 2
        %v2829 = vsel %vm791, %v2826, %v2828
        %2830 = vrot.lane.b32.xlu0 %v2827, 126
        %v2831 = vpop.permute.xlu0 %2830
        %2832 = vrot.lane.b32.xlu0 %v2829, 126
        %v2833 = vpop.permute.xlu0 %2832
        %v2836 = vadd.f32 %v2815, %v2831
        %v2837 = vadd.f32 %v2816, %v2833
        %s2838 = sld [smem:[#allocation3 + $0x6b]]
        %v2839 = vstv %s2838
        %v2840 = vmul.f32 %v2839, %v359
        %v2841 = vmul.f32 %v2839, %v360
        %v2842 = vmul.f32 %v2839, %v361
        %v2846 = vrot.slane %v2840, 2
        %v2847 = vrot.slane %v2841, 2
        %v2848 = vsel %vm791, %v2846, %v2847
        %v2849 = vrot.slane %v2842, 2
        %v2850 = vsel %vm791, %v2847, %v2849
        %2851 = vrot.lane.b32.xlu0 %v2848, 126
        %v2852 = vpop.permute.xlu0 %2851
        %2853 = vrot.lane.b32.xlu0 %v2850, 126
        %v2854 = vpop.permute.xlu0 %2853
        %v2857 = vadd.f32 %v2836, %v2852
        %v2858 = vadd.f32 %v2837, %v2854
        %s2859 = sld [smem:[#allocation3 + $0x74]]
        %v2860 = vstv %s2859
        %v2861 = vmul.f32 %v2860, %v350
        %v2862 = vmul.f32 %v2860, %v351
        %v2863 = vmul.f32 %v2860, %v352
        %v2867 = vrot.slane %v2861, 2
        %v2868 = vrot.slane %v2862, 2
        %v2869 = vsel %vm791, %v2867, %v2868
        %v2870 = vrot.slane %v2863, 2
        %v2871 = vsel %vm791, %v2868, %v2870
        %2872 = vrot.lane.b32.xlu0 %v2869, 126
        %v2873 = vpop.permute.xlu0 %2872
        %2874 = vrot.lane.b32.xlu0 %v2871, 126
        %v2875 = vpop.permute.xlu0 %2874
        %v2878 = vadd.f32 %v2595, %v2873
        %v2879 = vadd.f32 %v2596, %v2875
        %s2880 = sld [smem:[#allocation3 + $0x7d]]
        %v2881 = vstv %s2880
        %v2882 = vmul.f32 %v2881, %v353
        %v2883 = vmul.f32 %v2881, %v354
        %v2884 = vmul.f32 %v2881, %v355
        %v2888 = vrot.slane %v2882, 2
        %v2889 = vrot.slane %v2883, 2
        %v2890 = vsel %vm791, %v2888, %v2889
        %v2891 = vrot.slane %v2884, 2
        %v2892 = vsel %vm791, %v2889, %v2891
        %2893 = vrot.lane.b32.xlu0 %v2890, 126
        %v2894 = vpop.permute.xlu0 %2893
        %2895 = vrot.lane.b32.xlu0 %v2892, 126
        %v2896 = vpop.permute.xlu0 %2895
        %v2899 = vadd.f32 %v2878, %v2894
        %v2900 = vadd.f32 %v2879, %v2896
        %s2901 = sld [smem:[#allocation3 + $0x86]]
        %v2902 = vstv %s2901
        %v2903 = vmul.f32 %v2902, %v356
        %v2904 = vmul.f32 %v2902, %v357
        %v2905 = vmul.f32 %v2902, %v358
        %v2909 = vrot.slane %v2903, 2
        %v2910 = vrot.slane %v2904, 2
        %v2911 = vsel %vm791, %v2909, %v2910
        %v2912 = vrot.slane %v2905, 2
        %v2913 = vsel %vm791, %v2910, %v2912
        %2914 = vrot.lane.b32.xlu0 %v2911, 126
        %v2915 = vpop.permute.xlu0 %2914
        %2916 = vrot.lane.b32.xlu0 %v2913, 126
        %v2917 = vpop.permute.xlu0 %2916
        %v2920 = vadd.f32 %v2899, %v2915
        %v2921 = vadd.f32 %v2900, %v2917
        %s2922 = sld [smem:[#allocation3 + $0x8f]]
        %v2923 = vstv %s2922
        %v2924 = vmul.f32 %v2923, %v359
        %v2925 = vmul.f32 %v2923, %v360
        %v2926 = vmul.f32 %v2923, %v361
        %v2930 = vrot.slane %v2924, 2
        %v2931 = vrot.slane %v2925, 2
        %v2932 = vsel %vm791, %v2930, %v2931
        %v2933 = vrot.slane %v2926, 2
        %v2934 = vsel %vm791, %v2931, %v2933
        %2935 = vrot.lane.b32.xlu0 %v2932, 126
        %v2936 = vpop.permute.xlu0 %2935
        %2937 = vrot.lane.b32.xlu0 %v2934, 126
        %v2938 = vpop.permute.xlu0 %2937
        %v2941 = vadd.f32 %v2920, %v2936
        %v2942 = vadd.f32 %v2921, %v2938
        %v2943 = vmul.f32 %v2603, %v2603
        %v2944 = vmul.f32 %v2604, %v2604
        %v2945 = vmul.f32 %v2605, %v2605
        %v2946 = vmul.f32 %v2606, %v2606
        %v2947 = vadd.f32 %v2943, %v2945
        %v2948 = vadd.f32 %v2944, %v2946
        %v2949 = vmax.f32 %v2947, 1e-06
        %v2950 = vmax.f32 %v2948, 1e-06
        %v2951 = vmin.f32 %v2949, 50.0
        %v2952 = vmin.f32 %v2950, 50.0
        %v2953 = vrsqrt.pop %v2951
        %v2954 = vmul.f32 %v2953, %v2951
        %v2955 = vmul.f32 %v2954, %v2953
        %v2956 = vmul.f32 0.5, %v2955
        %v2957 = vsub.f32 1.5, %v2956
        %v2958 = vmul.f32 %v2953, %v2957
        %v2959 = vmul.f32 %v2951, %v2958
        %vm2960 = vcmp.eq.f32.partialorder %v2951, inf
        %v2961 = vsel %vm2960, %v2951, %v2959
        %vm2962 = vcmp.eq.f32.partialorder %v2951, 0.0
        %v2963 = vand.u32 %v2951, 2147483648
        %v2964 = vsel %vm2962, %v2963, %v2961
        %v2965 = vrsqrt.pop %v2952
        %v2966 = vmul.f32 %v2965, %v2952
        %v2967 = vmul.f32 %v2966, %v2965
        %v2968 = vmul.f32 0.5, %v2967
        %v2969 = vsub.f32 1.5, %v2968
        %v2970 = vmul.f32 %v2965, %v2969
        %v2971 = vmul.f32 %v2952, %v2970
        %vm2972 = vcmp.eq.f32.partialorder %v2952, inf
        %v2973 = vsel %vm2972, %v2952, %v2971
        %vm2974 = vcmp.eq.f32.partialorder %v2952, 0.0
        %v2975 = vand.u32 %v2952, 2147483648
        %v2976 = vsel %vm2974, %v2975, %v2973
        %v2977 = vxor.u32 %v2964, 2147483648
        %v2978 = vxor.u32 %v2976, 2147483648
        %v2979 = vmul.f32 %v2977, 1.442695
        %v2980 = vpow.pop %v2979
        %v2981 = vmul.f32 %v2978, 1.442695
        %v2982 = vpow.pop %v2981
        %v2983 = vadd.f32 %v2980, 1.0
        %v2984 = vadd.f32 %v2982, 1.0
        %v2985 = vrcp.pop %v2983
        %v2986 = vmul.f32 %v2983, %v2985
        %v2987 = vsub.f32 1.0, %v2986
        %v2988 = vmul.f32 %v2985, %v2987
        %v2989 = vadd.f32 %v2985, %v2988
        %vm2990 = vweird.f32 %v2983
        %vm2991 = vweird.f32 %v2985
        %vm2992 = vmor %vm2990, %vm2991
        %v2993 = vsel %vm2992, %v2985, %v2989
        %v2994 = vand.u32 2147483647, %v2983
        %vm2995 = vcmp.eq.f32.partialorder %v2994, 8.507059e+37
        %v2996 = vand.u32 %v2983, 2147483648
        %v2997 = vor.u32 1.1754944e-38, %v2996
        %v2998 = vsel %vm2995, %v2997, %v2993
        %v2999 = vmul.f32 1.0, %v2998
        %v3000 = vrcp.pop %v2984
        %v3001 = vmul.f32 %v2984, %v3000
        %v3002 = vsub.f32 1.0, %v3001
        %v3003 = vmul.f32 %v3000, %v3002
        %v3004 = vadd.f32 %v3000, %v3003
        %vm3005 = vweird.f32 %v2984
        %vm3006 = vweird.f32 %v3000
        %vm3007 = vmor %vm3005, %vm3006
        %v3008 = vsel %vm3007, %v3000, %v3004
        %v3009 = vand.u32 2147483647, %v2984
        %vm3010 = vcmp.eq.f32.partialorder %v3009, 8.507059e+37
        %v3011 = vand.u32 %v2984, 2147483648
        %v3012 = vor.u32 1.1754944e-38, %v3011
        %v3013 = vsel %vm3010, %v3012, %v3008
        %v3014 = vmul.f32 1.0, %v3013
        %v3015 = vmax.f32 %v2999, 0.2
        %v3016 = vmax.f32 %v3014, 0.2
        %v3017 = vmin.f32 %v3015, 0.8
        %v3018 = vmin.f32 %v3016, 0.8
        %s3019 = sld [smem:[#allocation5]]
        %v3020 = vstv %s3019
        %v3021 = vadd.f32 %v2689, %v3020
        %v3022 = vadd.f32 %v2690, %v3020
        %v3023 = vmax.f32 %v3021, 0.0
        %v3024 = vmax.f32 %v3022, 0.0
        %v3025 = vmul.f32 %v3023, %v3017
        %v3026 = vmul.f32 %v3024, %v3018
        %v3027 = vadd.f32 %v236, %v3025
        %v3028 = vadd.f32 %v237, %v3026
        %3029 = vst.msk [vmem:[%s231] sm:$0xff] %vm268, %v3027
        %3030 = vst.msk [vmem:[%s231 + $0x8] sm:$0xff] %vm268, %v3028
        %s3031 = sld [smem:[#allocation5 + $0x1]]
        %v3032 = vstv %s3031
        %v3033 = vadd.f32 %v2773, %v3032
        %v3034 = vadd.f32 %v2774, %v3032
        %v3035 = vmax.f32 %v3033, 0.0
        %v3036 = vmax.f32 %v3034, 0.0
        %v3037 = vmul.f32 %v3035, %v3017
        %v3038 = vmul.f32 %v3036, %v3018
        %v3039 = vadd.f32 %v238, %v3037
        %v3040 = vadd.f32 %v239, %v3038
        %s3041 = scalar_lea.vmem %s231, 16
        %3042 = vst.msk [vmem:[%s3041] sm:$0xff] %vm268, %v3039
        %3043 = vst.msk [vmem:[%s3041 + $0x8] sm:$0xff] %vm268, %v3040
        %s3044 = sld [smem:[#allocation5 + $0x2]]
        %v3045 = vstv %s3044
        %v3046 = vadd.f32 %v2857, %v3045
        %v3047 = vadd.f32 %v2858, %v3045
        %v3048 = vmax.f32 %v3046, 0.0
        %v3049 = vmax.f32 %v3047, 0.0
        %v3050 = vmul.f32 %v3048, %v3017
        %v3051 = vmul.f32 %v3049, %v3018
        %v3052 = vadd.f32 %v240, %v3050
        %v3053 = vadd.f32 %v241, %v3051
        %s3054 = scalar_lea.vmem %s231, 32
        %3055 = vst.msk [vmem:[%s3054] sm:$0xff] %vm268, %v3052
        %3056 = vst.msk [vmem:[%s3054 + $0x8] sm:$0xff] %vm268, %v3053
        %s3057 = sld [smem:[#allocation5 + $0x3]]
        %v3058 = vstv %s3057
        %v3059 = vadd.f32 %v2941, %v3058
        %v3060 = vadd.f32 %v2942, %v3058
        %v3061 = vmax.f32 %v3059, 0.0
        %v3062 = vmax.f32 %v3060, 0.0
        %v3063 = vmul.f32 %v3061, %v3017
        %v3064 = vmul.f32 %v3062, %v3018
        %v3065 = vadd.f32 %v242, %v3063
        %v3066 = vadd.f32 %v243, %v3064
        %s3067 = scalar_lea.vmem %s231, 48
        %3068 = vst.msk [vmem:[%s3067] sm:$0xff] %vm268, %v3065
        %3069 = vst.msk [vmem:[%s3067 + $0x8] sm:$0xff] %vm268, %v3066
        %p3070 = scmp.lt.s32.totalorder %s18, 1
        %s3071 = scalar_select %p3070, %s18, 1
        %s3072 = smul.addr %s3071, 8
        %s3073 = smul.addr %s3072, 8
        %s3074 = scalar_lea.vmem %s3, %s3073
        %p3075 = scmp.lt.s32.totalorder %s18, 1
        %s3076 = scalar_select %p3075, %s18, 1
        %s3077 = smul.addr %s3076, 8
        %s3078 = scalar_lea.vmem %s4, %s3077
        // Predicated region
        $region41: #{edge_enhance_forward.1} parent=31 // pred_check
          %p3079 = pneg %p104
        $region42: #{edge_enhance_forward.1} parent=31 // pred_check_branch
          %3081 = sbr.rel (%p3079) target = $region44
        $region43: #{edge_enhance_forward.1} parent=31 // pred_region
          _
        $region44: #{edge_enhance_forward.1} parent=31 // pred_fallthru
          _
        // Predicated region
        $region45: #{edge_enhance_forward.1} parent=31 // pred_check
          %p3082 = pneg %p130
        $region46: #{edge_enhance_forward.1} parent=31 // pred_check_branch
          %3084 = sbr.rel (%p3082) target = $region48
        $region47: #{edge_enhance_forward.1} parent=31 // pred_region
          _
        $region48: #{edge_enhance_forward.1} parent=31 // pred_fallthru
          _
      $region32: #{edge_enhance_forward.1} parent=5 // pred_fallthru
        _
      %p3085 = scmp.le.s32.totalorder 2, %s13
      // Predicated region
      $region49: #{edge_enhance_forward.1} parent=5 // pred_check
        %p3086 = pneg %p3085
      $region50: #{edge_enhance_forward.1} parent=5 // pred_check_branch
        %3088 = sbr.rel (%p3086) target = $region52
      $region51: #{edge_enhance_forward.1} parent=5 // pred_region
        %s3089 = ssub.s32 %s13, 2
        // Predicated region
        $region53: #{edge_enhance_forward.1} parent=51 // pred_check
          %p3090 = pneg %p110
        $region54: #{edge_enhance_forward.1} parent=51 // pred_check_branch
          %3092 = sbr.rel (%p3090) target = $region56
        $region55: #{edge_enhance_forward.1} parent=51 // pred_region
          %p3093 = scmp.lt.s32.totalorder %s19, 1
          %s3094 = scalar_select %p3093, %s19, 1
          %s3095 = smul.addr %s3094, 8
          %s3096 = smul.addr %s3095, 8
          %s3097 = scalar_lea.vmem %s3, %s3096
        $region56: #{edge_enhance_forward.1} parent=51 // pred_fallthru
          _
        // Predicated region
        $region57: #{edge_enhance_forward.1} parent=51 // pred_check
          %p3098 = pneg %p136
        $region58: #{edge_enhance_forward.1} parent=51 // pred_check_branch
          %3100 = sbr.rel (%p3098) target = $region60
        $region59: #{edge_enhance_forward.1} parent=51 // pred_region
          %p3101 = scmp.lt.s32.totalorder %s19, 1
          %s3102 = scalar_select %p3101, %s19, 1
          %s3103 = smul.addr %s3102, 8
          %s3104 = scalar_lea.vmem %s4, %s3103
        $region60: #{edge_enhance_forward.1} parent=51 // pred_fallthru
          _
      $region52: #{edge_enhance_forward.1} parent=5 // pred_fallthru
        _
    $region6: #{edge_enhance_forward.1} parent=1 // loop_footer
      %s17 = sadd.s32 1, %s13
    $region7: #{edge_enhance_forward.1} parent=1 // loop_footer_branch
      %12 = sbr.rel target = $region3
    $region8: #{edge_enhance_forward.1} parent=1 // loop_exit
      _
    %3105 = vsyncpa [#allocation4], 1
    %s3106 = scalar_lea.sflag [#allocation4], 1
    %3107 = vsyncpa %s3106, 1
    %3108 = vsyncpa [#allocation6], 1

</llo_original>
